<compile_context>
chip_gen: v5e
topology: v5e:2x2
jax: 0.10.0
libtpu: 0.0.40
codegen_flags: <defaults>
</compile_context>

<pallas_src>
import functools

import jax
import jax.numpy as jnp
from jax.experimental import pallas as pl
from jax.experimental.pallas import tpu as pltpu


def conv_stats_kernel(xp_ref, w_ref, b_ref, y_ref, stats_ref, acc_ref,
                      *, tile_h, W, Cin, Cout):
    """3x3 SAME conv for one row-tile of one image: 9 shifted-window bf16 MXU matmuls
    accumulated in an f32 VMEM scratch, plus per-image per-channel sum / sum-of-squares."""
    t = pl.program_id(1)

    @pl.when(t == 0)
    def _():
        stats_ref[...] = jnp.zeros_like(stats_ref)       # per-image partials, zero at first tile

    r0 = t * tile_h
    acc_ref[...] = jnp.zeros_like(acc_ref)
    for dy in range(3):
        # Load once per dy; upcast to f32 so the unaligned dx slices / reshape run on the
        # plain f32 path, then cast back to bf16 right before the MXU (lossless round-trip).
        rows = xp_ref[pl.ds(r0 + dy, tile_h)].astype(jnp.float32)   # (tile_h, W+2, Cin)
        for dx in range(3):
            win = rows[:, dx:dx + W, :].reshape(tile_h * W, Cin).astype(jnp.bfloat16)
            acc_ref[...] += jnp.dot(win, w_ref[dy * 3 + dx],
                                    preferred_element_type=jnp.float32)

    acc = acc_ref[...] + b_ref[0]                        # (tile_h*W, Cout) f32, conv bias
    y_ref[...] = acc.reshape(tile_h, W, Cout).astype(y_ref.dtype)   # bf16 handoff to pass 2
    stats_ref[0, :] += jnp.sum(acc, axis=0)              # sum
    stats_ref[1, :] += jnp.sum(acc * acc, axis=0)        # sum of squares


def bn_relu_pool_kernel(y_ref, scale_ref, shift_ref, o_ref, *, pool):
    """Elementwise BN (pre-folded scale/shift) + ReLU + optional 2x2 max-pool on a
    (tile_n, H, W, C) block."""
    z = y_ref[...].astype(jnp.float32) * scale_ref[0] + shift_ref[0]
    z = jnp.maximum(z, 0.0)
    if pool:
        tn, H, W, C = z.shape
        for i in range(tn):                              # static unroll; keeps pooling rank-5
            o_ref[i] = z[i].reshape(H // 2, 2, W // 2, 2, C).max(axis=3).max(axis=1)
    else:
        o_ref[...] = z


def _largest_divisor_leq(n, cap):
    for d in range(max(1, min(n, cap)), 0, -1):
        if n % d == 0:
            return d
    return 1


def _pick_tile_h(H, W, Cin, Cout, max_tile_h, budget_bytes=4 << 20):
    # Rough per-output-row VMEM: f32 acc + double-buffered bf16 y tile + live bf16 input rows
    # (upcast to f32 transiently).
    per_row = W * Cout * 4 + W * Cout * 2 * 2 + (W + 2) * Cin * (2 + 4) * 3
    cap = max(1, budget_bytes // max(per_row, 1))
    if max_tile_h is not None:
        cap = min(cap, max_tile_h)
    return _largest_divisor_leq(H, cap)


def conv_block(x_nchw, w_hwio, bias, gamma, beta, *, pool=False, eps=1e-5, max_tile_h=None):
    N, Cin, H, W = x_nchw.shape
    Cout = w_hwio.shape[-1]
    if pool:
        assert H % 2 == 0 and W % 2 == 0, "MaxPool2d(2,2) requires even spatial dims"

    x = jnp.transpose(x_nchw, (0, 2, 3, 1)).astype(jnp.bfloat16)       # NCHW -> NHWC, bf16 HBM
    xp = jnp.pad(x, ((0, 0), (1, 1), (1, 1), (0, 0)))                  # SAME halo (wrapper-side)
    w9 = w_hwio.reshape(9, Cin, Cout).astype(jnp.bfloat16)             # tap = 3*dy + dx, bf16 MXU
    b2 = bias.reshape(1, Cout).astype(jnp.float32)

    tile_h = _pick_tile_h(H, W, Cin, Cout, max_tile_h)
    T = H // tile_h

    conv_fn = pl.pallas_call(
        functools.partial(conv_stats_kernel, tile_h=tile_h, W=W, Cin=Cin, Cout=Cout),
        out_shape=(jax.ShapeDtypeStruct((N, H, W, Cout), jnp.bfloat16),   # bf16 intermediate
                   jax.ShapeDtypeStruct((N, 2, Cout), jnp.float32)),      # per-image stats
        grid_spec=pltpu.PrefetchScalarGridSpec(
            num_scalar_prefetch=0,
            grid=(N, T),
            in_specs=[pl.BlockSpec((None, H + 2, W + 2, Cin), lambda n, t: (n, 0, 0, 0)),
                      pl.BlockSpec((9, Cin, Cout), lambda n, t: (0, 0, 0)),
                      pl.BlockSpec((1, Cout), lambda n, t: (0, 0))],
            out_specs=(pl.BlockSpec((None, tile_h, W, Cout), lambda n, t: (n, t, 0, 0)),
                       pl.BlockSpec((None, 2, Cout), lambda n, t: (n, 0, 0))),  # resident over t
            scratch_shapes=[pltpu.VMEM((tile_h * W, Cout), jnp.float32)],
        ),
        compiler_params=pltpu.CompilerParams(
            dimension_semantics=("parallel", "arbitrary"),
            vmem_limit_bytes=32 * 1024 * 1024),
    )
    y, stats = conv_fn(xp, w9, b2)

    # Training-mode BatchNorm2d statistics over (N, H, W), biased variance (PyTorch norm).
    # Tiny scalar glue (fold mean/var/gamma/beta into scale/shift) kept in JAX.
    count = float(N * H * W)
    total = stats.sum(axis=0)
    mean = total[0] / count
    var = jnp.maximum(total[1] / count - mean * mean, 0.0)
    scale = gamma.astype(jnp.float32) * jax.lax.rsqrt(var + eps)
    shift = beta.astype(jnp.float32) - mean * scale

    Ho, Wo = (H // 2, W // 2) if pool else (H, W)
    tile_n = _largest_divisor_leq(N, max(1, (8 << 20) // max(H * W * Cout * 6, 1)))
    bn_fn = pl.pallas_call(
        functools.partial(bn_relu_pool_kernel, pool=pool),
        out_shape=jax.ShapeDtypeStruct((N, Ho, Wo, Cout), jnp.float32),
        grid_spec=pltpu.PrefetchScalarGridSpec(
            num_scalar_prefetch=0,
            grid=(N // tile_n,),
            in_specs=[pl.BlockSpec((tile_n, H, W, Cout), lambda i: (i, 0, 0, 0)),
                      pl.BlockSpec((1, Cout), lambda i: (0, 0)),
                      pl.BlockSpec((1, Cout), lambda i: (0, 0))],
            out_specs=pl.BlockSpec((tile_n, Ho, Wo, Cout), lambda i: (i, 0, 0, 0)),
        ),
        compiler_params=pltpu.CompilerParams(
            dimension_semantics=("parallel",),
            vmem_limit_bytes=32 * 1024 * 1024),
    )
    out = bn_fn(y, scale.reshape(1, Cout), shift.reshape(1, Cout))
    return jnp.transpose(out, (0, 3, 1, 2))                              # NHWC -> NCHW


def _reference(x_nchw, w_hwio, bias, gamma, beta, *, pool, eps=1e-5):
    """Pure-JAX reference matching the PyTorch training-mode forward."""
    xh = jnp.transpose(x_nchw, (0, 2, 3, 1))
    y = jax.lax.conv_general_dilated(
        xh, w_hwio, (1, 1), "SAME",
        dimension_numbers=("NHWC", "HWIO", "NHWC"),
        precision=jax.lax.Precision.HIGHEST) + bias
    mean = y.mean(axis=(0, 1, 2))
    var = y.var(axis=(0, 1, 2))                                          # biased variance
    z = (y - mean) * jax.lax.rsqrt(var + eps) * gamma + beta
    z = jnp.maximum(z, 0.0)
    if pool:
        N, H, W, C = z.shape
        z = z.reshape(N, H // 2, 2, W // 2, 2, C).max(axis=(2, 4))
    return jnp.transpose(z, (0, 3, 1, 2))


if __name__ == "__main__":
    key = jax.random.PRNGKey(0)
    k_x, k_w, k_b, k_g, k_be = jax.random.split(key, 5)

    N, Cin, H, W, Cout = 2, 4, 16, 16, 8
    x = jax.random.normal(k_x, (N, Cin, H, W), jnp.float32)

    # Deterministic synthetic parameters (Conv2d weight HWIO + bias; BN affine params).
    w = jax.random.normal(k_w, (3, 3, Cin, Cout), jnp.float32) * 0.1
    b = jax.random.normal(k_b, (Cout,), jnp.float32) * 0.1
    gamma = 1.0 + 0.1 * jax.random.normal(k_g, (Cout,), jnp.float32)
    beta = 0.1 * jax.random.normal(k_be, (Cout,), jnp.float32)

    ok = True
    for pool in (False, True):
        # max_tile_h=None -> single row tile per image; max_tile_h=8 -> exercises the multi-tile
        # path (stats accumulated across row tiles).
        for max_tile_h in (None, 8):
            out = jax.block_until_ready(
                conv_block(x, w, b, gamma, beta, pool=pool, max_tile_h=max_tile_h))
            ref = _reference(x, w, b, gamma, beta, pool=pool)
            # Tolerance reflects bf16 input/MXU operands + bf16 conv->BN intermediate vs f32 ref.
            ok = ok and bool(jnp.allclose(out, ref, atol=2e-2, rtol=2e-2))

    print("KERNEL_OK" if ok else "KERNEL_MISMATCH")
</pallas_src>

<mosaic_0001>
module attributes {stable_mosaic.version = 11 : i64} {
  func.func @conv_stats_kernel(%arg0: i32, %arg1: i32, %arg2: memref<1x18x18x4xbf16, #tpu.memory_space<vmem>>, %arg3: memref<9x4x8xbf16, #tpu.memory_space<vmem>>, %arg4: memref<1x8xf32, #tpu.memory_space<vmem>>, %arg5: memref<1x16x16x8xbf16, #tpu.memory_space<vmem>>, %arg6: memref<1x2x8xf32, #tpu.memory_space<vmem>>, %arg7: memref<256x8xf32, #tpu.memory_space<vmem>>) attributes {dimension_semantics = [#tpu.dimension_semantics<parallel>, #tpu.dimension_semantics<arbitrary>], iteration_bounds = array<i64: 2, 1>, scalar_prefetch = 0 : i64, scratch_operands = 1 : i64, tpu.core_type = #tpu.core_type<tc>, window_params = [{transform_indices = @transform_0, window_bounds = array<i64: 1, 18, 18, 4>}, {pipeline_mode = #tpu.pipeline_mode<synchronous>, transform_indices = @transform_1, window_bounds = array<i64: 9, 4, 8>}, {pipeline_mode = #tpu.pipeline_mode<synchronous>, transform_indices = @transform_2, window_bounds = array<i64: 1, 8>}, {transform_indices = @transform_3, window_bounds = array<i64: 1, 16, 16, 8>}, {transform_indices = @transform_4, window_bounds = array<i64: 1, 2, 8>}]} {
    %c0_i32 = arith.constant 0 : i32
    %0 = arith.cmpi eq, %arg1, %c0_i32 : i32
    %1 = arith.extui %0 : i1 to i32
    %c0_i32_0 = arith.constant 0 : i32
    %2 = arith.cmpi ne, %1, %c0_i32_0 : i32
    scf.if %2 {
      %cst_98 = arith.constant 0.000000e+00 : f32
      %128 = vector.broadcast %cst_98 : f32 to vector<2x8xf32>
      %c0_99 = arith.constant 0 : index
      %c0_100 = arith.constant 0 : index
      %c0_101 = arith.constant 0 : index
      %129 = vector.load %arg6[%c0_99, %c0_100, %c0_101] : memref<1x2x8xf32, #tpu.memory_space<vmem>>, vector<1x2x8xf32>
      %130 = vector.shape_cast %129 : vector<1x2x8xf32> to vector<2x8xf32>
      %131 = vector.shape_cast %128 : vector<2x8xf32> to vector<1x2x8xf32>
      tpu.vector_store %arg6[%c0_99, %c0_100, %c0_101], %131 {strides = array<i32>} : memref<1x2x8xf32, #tpu.memory_space<vmem>>, vector<1x2x8xf32>,
    } else {
    }
    %c16_i32 = arith.constant 16 : i32
    %3 = arith.muli %arg1, %c16_i32 : i32
    %cst = arith.constant 0.000000e+00 : f32
    %4 = vector.broadcast %cst : f32 to vector<256x8xf32>
    %c0 = arith.constant 0 : index
    %c0_1 = arith.constant 0 : index
    %5 = vector.load %arg7[%c0, %c0_1] : memref<256x8xf32, #tpu.memory_space<vmem>>, vector<256x8xf32>
    tpu.vector_store %arg7[%c0, %c0_1], %4 {strides = array<i32>} : memref<256x8xf32, #tpu.memory_space<vmem>>, vector<256x8xf32>,
    %c0_i32_2 = arith.constant 0 : i32
    %6 = arith.addi %3, %c0_i32_2 : i32
    %c0_3 = arith.constant 0 : index
    %7 = arith.index_cast %6 : i32 to index
    %c0_4 = arith.constant 0 : index
    %c0_5 = arith.constant 0 : index
    %8 = vector.load %arg2[%c0_3, %7, %c0_4, %c0_5] : memref<1x18x18x4xbf16, #tpu.memory_space<vmem>>, vector<1x16x18x4xbf16>
    %9 = vector.shape_cast %8 : vector<1x16x18x4xbf16> to vector<16x18x4xbf16>
    %10 = arith.extf %9 : vector<16x18x4xbf16> to vector<16x18x4xf32>
    %11 = vector.extract_strided_slice %10 {offsets = [0, 0, 0], sizes = [16, 16, 4], strides = [1, 1, 1]} : vector<16x18x4xf32> to vector<16x16x4xf32>
    %12 = vector.shape_cast %11 : vector<16x16x4xf32> to vector<256x4xf32>
    %13 = arith.truncf %12 : vector<256x4xf32> to vector<256x4xbf16>
    %c0_6 = arith.constant 0 : index
    %c0_7 = arith.constant 0 : index
    %14 = vector.load %arg7[%c0_6, %c0_7] : memref<256x8xf32, #tpu.memory_space<vmem>>, vector<256x8xf32>
    %c0_8 = arith.constant 0 : index
    %c0_9 = arith.constant 0 : index
    %c0_10 = arith.constant 0 : index
    %15 = vector.load %arg3[%c0_8, %c0_9, %c0_10] : memref<9x4x8xbf16, #tpu.memory_space<vmem>>, vector<1x4x8xbf16>
    %16 = vector.shape_cast %15 : vector<1x4x8xbf16> to vector<4x8xbf16>
    %cst_11 = arith.constant dense<0.000000e+00> : vector<256x8xf32>
    %17 = tpu.matmul %13, %16, %cst_11 {dimension_numbers = #tpu.dot_dimension_numbers<[1], [0], [0], [1], [0, 0, 1, 1], [], []>} : vector<256x4xbf16>, vector<4x8xbf16>, vector<256x8xf32> -> vector<256x8xf32>
    %18 = arith.addf %14, %17 : vector<256x8xf32>
    %c0_12 = arith.constant 0 : index
    %c0_13 = arith.constant 0 : index
    %19 = vector.load %arg7[%c0_12, %c0_13] : memref<256x8xf32, #tpu.memory_space<vmem>>, vector<256x8xf32>
    tpu.vector_store %arg7[%c0_12, %c0_13], %18 {strides = array<i32>} : memref<256x8xf32, #tpu.memory_space<vmem>>, vector<256x8xf32>,
    %20 = vector.extract_strided_slice %10 {offsets = [0, 1, 0], sizes = [16, 16, 4], strides = [1, 1, 1]} : vector<16x18x4xf32> to vector<16x16x4xf32>
    %21 = vector.shape_cast %20 : vector<16x16x4xf32> to vector<256x4xf32>
    %22 = arith.truncf %21 : vector<256x4xf32> to vector<256x4xbf16>
    %c0_14 = arith.constant 0 : index
    %c0_15 = arith.constant 0 : index
    %23 = vector.load %arg7[%c0_14, %c0_15] : memref<256x8xf32, #tpu.memory_space<vmem>>, vector<256x8xf32>
    %c1 = arith.constant 1 : index
    %c0_16 = arith.constant 0 : index
    %c0_17 = arith.constant 0 : index
    %24 = vector.load %arg3[%c1, %c0_16, %c0_17] : memref<9x4x8xbf16, #tpu.memory_space<vmem>>, vector<1x4x8xbf16>
    %25 = vector.shape_cast %24 : vector<1x4x8xbf16> to vector<4x8xbf16>
    %cst_18 = arith.constant dense<0.000000e+00> : vector<256x8xf32>
    %26 = tpu.matmul %22, %25, %cst_18 {dimension_numbers = #tpu.dot_dimension_numbers<[1], [0], [0], [1], [0, 0, 1, 1], [], []>} : vector<256x4xbf16>, vector<4x8xbf16>, vector<256x8xf32> -> vector<256x8xf32>
    %27 = arith.addf %23, %26 : vector<256x8xf32>
    %c0_19 = arith.constant 0 : index
    %c0_20 = arith.constant 0 : index
    %28 = vector.load %arg7[%c0_19, %c0_20] : memref<256x8xf32, #tpu.memory_space<vmem>>, vector<256x8xf32>
    tpu.vector_store %arg7[%c0_19, %c0_20], %27 {strides = array<i32>} : memref<256x8xf32, #tpu.memory_space<vmem>>, vector<256x8xf32>,
    %29 = vector.extract_strided_slice %10 {offsets = [0, 2, 0], sizes = [16, 16, 4], strides = [1, 1, 1]} : vector<16x18x4xf32> to vector<16x16x4xf32>
    %30 = vector.shape_cast %29 : vector<16x16x4xf32> to vector<256x4xf32>
    %31 = arith.truncf %30 : vector<256x4xf32> to vector<256x4xbf16>
    %c0_21 = arith.constant 0 : index
    %c0_22 = arith.constant 0 : index
    %32 = vector.load %arg7[%c0_21, %c0_22] : memref<256x8xf32, #tpu.memory_space<vmem>>, vector<256x8xf32>
    %c2 = arith.constant 2 : index
    %c0_23 = arith.constant 0 : index
    %c0_24 = arith.constant 0 : index
    %33 = vector.load %arg3[%c2, %c0_23, %c0_24] : memref<9x4x8xbf16, #tpu.memory_space<vmem>>, vector<1x4x8xbf16>
    %34 = vector.shape_cast %33 : vector<1x4x8xbf16> to vector<4x8xbf16>
    %cst_25 = arith.constant dense<0.000000e+00> : vector<256x8xf32>
    %35 = tpu.matmul %31, %34, %cst_25 {dimension_numbers = #tpu.dot_dimension_numbers<[1], [0], [0], [1], [0, 0, 1, 1], [], []>} : vector<256x4xbf16>, vector<4x8xbf16>, vector<256x8xf32> -> vector<256x8xf32>
    %36 = arith.addf %32, %35 : vector<256x8xf32>
    %c0_26 = arith.constant 0 : index
    %c0_27 = arith.constant 0 : index
    %37 = vector.load %arg7[%c0_26, %c0_27] : memref<256x8xf32, #tpu.memory_space<vmem>>, vector<256x8xf32>
    tpu.vector_store %arg7[%c0_26, %c0_27], %36 {strides = array<i32>} : memref<256x8xf32, #tpu.memory_space<vmem>>, vector<256x8xf32>,
    %c1_i32 = arith.constant 1 : i32
    %38 = arith.addi %3, %c1_i32 : i32
    %c0_28 = arith.constant 0 : index
    %39 = arith.index_cast %38 : i32 to index
    %c0_29 = arith.constant 0 : index
    %c0_30 = arith.constant 0 : index
    %40 = vector.load %arg2[%c0_28, %39, %c0_29, %c0_30] : memref<1x18x18x4xbf16, #tpu.memory_space<vmem>>, vector<1x16x18x4xbf16>
    %41 = vector.shape_cast %40 : vector<1x16x18x4xbf16> to vector<16x18x4xbf16>
    %42 = arith.extf %41 : vector<16x18x4xbf16> to vector<16x18x4xf32>
    %43 = vector.extract_strided_slice %42 {offsets = [0, 0, 0], sizes = [16, 16, 4], strides = [1, 1, 1]} : vector<16x18x4xf32> to vector<16x16x4xf32>
    %44 = vector.shape_cast %43 : vector<16x16x4xf32> to vector<256x4xf32>
    %45 = arith.truncf %44 : vector<256x4xf32> to vector<256x4xbf16>
    %c0_31 = arith.constant 0 : index
    %c0_32 = arith.constant 0 : index
    %46 = vector.load %arg7[%c0_31, %c0_32] : memref<256x8xf32, #tpu.memory_space<vmem>>, vector<256x8xf32>
    %c3 = arith.constant 3 : index
    %c0_33 = arith.constant 0 : index
    %c0_34 = arith.constant 0 : index
    %47 = vector.load %arg3[%c3, %c0_33, %c0_34] : memref<9x4x8xbf16, #tpu.memory_space<vmem>>, vector<1x4x8xbf16>
    %48 = vector.shape_cast %47 : vector<1x4x8xbf16> to vector<4x8xbf16>
    %cst_35 = arith.constant dense<0.000000e+00> : vector<256x8xf32>
    %49 = tpu.matmul %45, %48, %cst_35 {dimension_numbers = #tpu.dot_dimension_numbers<[1], [0], [0], [1], [0, 0, 1, 1], [], []>} : vector<256x4xbf16>, vector<4x8xbf16>, vector<256x8xf32> -> vector<256x8xf32>
    %50 = arith.addf %46, %49 : vector<256x8xf32>
    %c0_36 = arith.constant 0 : index
    %c0_37 = arith.constant 0 : index
    %51 = vector.load %arg7[%c0_36, %c0_37] : memref<256x8xf32, #tpu.memory_space<vmem>>, vector<256x8xf32>
    tpu.vector_store %arg7[%c0_36, %c0_37], %50 {strides = array<i32>} : memref<256x8xf32, #tpu.memory_space<vmem>>, vector<256x8xf32>,
    %52 = vector.extract_strided_slice %42 {offsets = [0, 1, 0], sizes = [16, 16, 4], strides = [1, 1, 1]} : vector<16x18x4xf32> to vector<16x16x4xf32>
    %53 = vector.shape_cast %52 : vector<16x16x4xf32> to vector<256x4xf32>
    %54 = arith.truncf %53 : vector<256x4xf32> to vector<256x4xbf16>
    %c0_38 = arith.constant 0 : index
    %c0_39 = arith.constant 0 : index
    %55 = vector.load %arg7[%c0_38, %c0_39] : memref<256x8xf32, #tpu.memory_space<vmem>>, vector<256x8xf32>
    %c4 = arith.constant 4 : index
    %c0_40 = arith.constant 0 : index
    %c0_41 = arith.constant 0 : index
    %56 = vector.load %arg3[%c4, %c0_40, %c0_41] : memref<9x4x8xbf16, #tpu.memory_space<vmem>>, vector<1x4x8xbf16>
    %57 = vector.shape_cast %56 : vector<1x4x8xbf16> to vector<4x8xbf16>
    %cst_42 = arith.constant dense<0.000000e+00> : vector<256x8xf32>
    %58 = tpu.matmul %54, %57, %cst_42 {dimension_numbers = #tpu.dot_dimension_numbers<[1], [0], [0], [1], [0, 0, 1, 1], [], []>} : vector<256x4xbf16>, vector<4x8xbf16>, vector<256x8xf32> -> vector<256x8xf32>
    %59 = arith.addf %55, %58 : vector<256x8xf32>
    %c0_43 = arith.constant 0 : index
    %c0_44 = arith.constant 0 : index
    %60 = vector.load %arg7[%c0_43, %c0_44] : memref<256x8xf32, #tpu.memory_space<vmem>>, vector<256x8xf32>
    tpu.vector_store %arg7[%c0_43, %c0_44], %59 {strides = array<i32>} : memref<256x8xf32, #tpu.memory_space<vmem>>, vector<256x8xf32>,
    %61 = vector.extract_strided_slice %42 {offsets = [0, 2, 0], sizes = [16, 16, 4], strides = [1, 1, 1]} : vector<16x18x4xf32> to vector<16x16x4xf32>
    %62 = vector.shape_cast %61 : vector<16x16x4xf32> to vector<256x4xf32>
    %63 = arith.truncf %62 : vector<256x4xf32> to vector<256x4xbf16>
    %c0_45 = arith.constant 0 : index
    %c0_46 = arith.constant 0 : index
    %64 = vector.load %arg7[%c0_45, %c0_46] : memref<256x8xf32, #tpu.memory_space<vmem>>, vector<256x8xf32>
    %c5 = arith.constant 5 : index
    %c0_47 = arith.constant 0 : index
    %c0_48 = arith.constant 0 : index
    %65 = vector.load %arg3[%c5, %c0_47, %c0_48] : memref<9x4x8xbf16, #tpu.memory_space<vmem>>, vector<1x4x8xbf16>
    %66 = vector.shape_cast %65 : vector<1x4x8xbf16> to vector<4x8xbf16>
    %cst_49 = arith.constant dense<0.000000e+00> : vector<256x8xf32>
    %67 = tpu.matmul %63, %66, %cst_49 {dimension_numbers = #tpu.dot_dimension_numbers<[1], [0], [0], [1], [0, 0, 1, 1], [], []>} : vector<256x4xbf16>, vector<4x8xbf16>, vector<256x8xf32> -> vector<256x8xf32>
    %68 = arith.addf %64, %67 : vector<256x8xf32>
    %c0_50 = arith.constant 0 : index
    %c0_51 = arith.constant 0 : index
    %69 = vector.load %arg7[%c0_50, %c0_51] : memref<256x8xf32, #tpu.memory_space<vmem>>, vector<256x8xf32>
    tpu.vector_store %arg7[%c0_50, %c0_51], %68 {strides = array<i32>} : memref<256x8xf32, #tpu.memory_space<vmem>>, vector<256x8xf32>,
    %c2_i32 = arith.constant 2 : i32
    %70 = arith.addi %3, %c2_i32 : i32
    %c0_52 = arith.constant 0 : index
    %71 = arith.index_cast %70 : i32 to index
    %c0_53 = arith.constant 0 : index
    %c0_54 = arith.constant 0 : index
    %72 = vector.load %arg2[%c0_52, %71, %c0_53, %c0_54] : memref<1x18x18x4xbf16, #tpu.memory_space<vmem>>, vector<1x16x18x4xbf16>
    %73 = vector.shape_cast %72 : vector<1x16x18x4xbf16> to vector<16x18x4xbf16>
    %74 = arith.extf %73 : vector<16x18x4xbf16> to vector<16x18x4xf32>
    %75 = vector.extract_strided_slice %74 {offsets = [0, 0, 0], sizes = [16, 16, 4], strides = [1, 1, 1]} : vector<16x18x4xf32> to vector<16x16x4xf32>
    %76 = vector.shape_cast %75 : vector<16x16x4xf32> to vector<256x4xf32>
    %77 = arith.truncf %76 : vector<256x4xf32> to vector<256x4xbf16>
    %c0_55 = arith.constant 0 : index
    %c0_56 = arith.constant 0 : index
    %78 = vector.load %arg7[%c0_55, %c0_56] : memref<256x8xf32, #tpu.memory_space<vmem>>, vector<256x8xf32>
    %c6 = arith.constant 6 : index
    %c0_57 = arith.constant 0 : index
    %c0_58 = arith.constant 0 : index
    %79 = vector.load %arg3[%c6, %c0_57, %c0_58] : memref<9x4x8xbf16, #tpu.memory_space<vmem>>, vector<1x4x8xbf16>
    %80 = vector.shape_cast %79 : vector<1x4x8xbf16> to vector<4x8xbf16>
    %cst_59 = arith.constant dense<0.000000e+00> : vector<256x8xf32>
    %81 = tpu.matmul %77, %80, %cst_59 {dimension_numbers = #tpu.dot_dimension_numbers<[1], [0], [0], [1], [0, 0, 1, 1], [], []>} : vector<256x4xbf16>, vector<4x8xbf16>, vector<256x8xf32> -> vector<256x8xf32>
    %82 = arith.addf %78, %81 : vector<256x8xf32>
    %c0_60 = arith.constant 0 : index
    %c0_61 = arith.constant 0 : index
    %83 = vector.load %arg7[%c0_60, %c0_61] : memref<256x8xf32, #tpu.memory_space<vmem>>, vector<256x8xf32>
    tpu.vector_store %arg7[%c0_60, %c0_61], %82 {strides = array<i32>} : memref<256x8xf32, #tpu.memory_space<vmem>>, vector<256x8xf32>,
    %84 = vector.extract_strided_slice %74 {offsets = [0, 1, 0], sizes = [16, 16, 4], strides = [1, 1, 1]} : vector<16x18x4xf32> to vector<16x16x4xf32>
    %85 = vector.shape_cast %84 : vector<16x16x4xf32> to vector<256x4xf32>
    %86 = arith.truncf %85 : vector<256x4xf32> to vector<256x4xbf16>
    %c0_62 = arith.constant 0 : index
    %c0_63 = arith.constant 0 : index
    %87 = vector.load %arg7[%c0_62, %c0_63] : memref<256x8xf32, #tpu.memory_space<vmem>>, vector<256x8xf32>
    %c7 = arith.constant 7 : index
    %c0_64 = arith.constant 0 : index
    %c0_65 = arith.constant 0 : index
    %88 = vector.load %arg3[%c7, %c0_64, %c0_65] : memref<9x4x8xbf16, #tpu.memory_space<vmem>>, vector<1x4x8xbf16>
    %89 = vector.shape_cast %88 : vector<1x4x8xbf16> to vector<4x8xbf16>
    %cst_66 = arith.constant dense<0.000000e+00> : vector<256x8xf32>
    %90 = tpu.matmul %86, %89, %cst_66 {dimension_numbers = #tpu.dot_dimension_numbers<[1], [0], [0], [1], [0, 0, 1, 1], [], []>} : vector<256x4xbf16>, vector<4x8xbf16>, vector<256x8xf32> -> vector<256x8xf32>
    %91 = arith.addf %87, %90 : vector<256x8xf32>
    %c0_67 = arith.constant 0 : index
    %c0_68 = arith.constant 0 : index
    %92 = vector.load %arg7[%c0_67, %c0_68] : memref<256x8xf32, #tpu.memory_space<vmem>>, vector<256x8xf32>
    tpu.vector_store %arg7[%c0_67, %c0_68], %91 {strides = array<i32>} : memref<256x8xf32, #tpu.memory_space<vmem>>, vector<256x8xf32>,
    %93 = vector.extract_strided_slice %74 {offsets = [0, 2, 0], sizes = [16, 16, 4], strides = [1, 1, 1]} : vector<16x18x4xf32> to vector<16x16x4xf32>
    %94 = vector.shape_cast %93 : vector<16x16x4xf32> to vector<256x4xf32>
    %95 = arith.truncf %94 : vector<256x4xf32> to vector<256x4xbf16>
    %c0_69 = arith.constant 0 : index
    %c0_70 = arith.constant 0 : index
    %96 = vector.load %arg7[%c0_69, %c0_70] : memref<256x8xf32, #tpu.memory_space<vmem>>, vector<256x8xf32>
    %c8 = arith.constant 8 : index
    %c0_71 = arith.constant 0 : index
    %c0_72 = arith.constant 0 : index
    %97 = vector.load %arg3[%c8, %c0_71, %c0_72] : memref<9x4x8xbf16, #tpu.memory_space<vmem>>, vector<1x4x8xbf16>
    %98 = vector.shape_cast %97 : vector<1x4x8xbf16> to vector<4x8xbf16>
    %cst_73 = arith.constant dense<0.000000e+00> : vector<256x8xf32>
    %99 = tpu.matmul %95, %98, %cst_73 {dimension_numbers = #tpu.dot_dimension_numbers<[1], [0], [0], [1], [0, 0, 1, 1], [], []>} : vector<256x4xbf16>, vector<4x8xbf16>, vector<256x8xf32> -> vector<256x8xf32>
    %100 = arith.addf %96, %99 : vector<256x8xf32>
    %c0_74 = arith.constant 0 : index
    %c0_75 = arith.constant 0 : index
    %101 = vector.load %arg7[%c0_74, %c0_75] : memref<256x8xf32, #tpu.memory_space<vmem>>, vector<256x8xf32>
    tpu.vector_store %arg7[%c0_74, %c0_75], %100 {strides = array<i32>} : memref<256x8xf32, #tpu.memory_space<vmem>>, vector<256x8xf32>,
    %c0_76 = arith.constant 0 : index
    %c0_77 = arith.constant 0 : index
    %102 = vector.load %arg7[%c0_76, %c0_77] : memref<256x8xf32, #tpu.memory_space<vmem>>, vector<256x8xf32>
    %c0_78 = arith.constant 0 : index
    %c0_79 = arith.constant 0 : index
    %103 = vector.load %arg4[%c0_78, %c0_79] : memref<1x8xf32, #tpu.memory_space<vmem>>, vector<1x8xf32>
    %104 = vector.shape_cast %103 : vector<1x8xf32> to vector<8xf32>
    %105 = vector.shape_cast %104 : vector<8xf32> to vector<1x8xf32>
    %106 = vector.broadcast %105 : vector<1x8xf32> to vector<256x8xf32>
    %107 = arith.addf %102, %106 : vector<256x8xf32>
    %108 = vector.shape_cast %107 : vector<256x8xf32> to vector<16x16x8xf32>
    %109 = arith.truncf %108 : vector<16x16x8xf32> to vector<16x16x8xbf16>
    %c0_80 = arith.constant 0 : index
    %c0_81 = arith.constant 0 : index
    %c0_82 = arith.constant 0 : index
    %c0_83 = arith.constant 0 : index
    %110 = vector.load %arg5[%c0_80, %c0_81, %c0_82, %c0_83] : memref<1x16x16x8xbf16, #tpu.memory_space<vmem>>, vector<1x16x16x8xbf16>
    %111 = vector.shape_cast %110 : vector<1x16x16x8xbf16> to vector<16x16x8xbf16>
    %112 = vector.shape_cast %109 : vector<16x16x8xbf16> to vector<1x16x16x8xbf16>
    tpu.vector_store %arg5[%c0_80, %c0_81, %c0_82, %c0_83], %112 {strides = array<i32>} : memref<1x16x16x8xbf16, #tpu.memory_space<vmem>>, vector<1x16x16x8xbf16>,
    %c0_84 = arith.constant 0 : index
    %c0_85 = arith.constant 0 : index
    %c0_86 = arith.constant 0 : index
    %113 = vector.load %arg6[%c0_84, %c0_85, %c0_86] : memref<1x2x8xf32, #tpu.memory_space<vmem>>, vector<1x1x8xf32>
    %114 = vector.shape_cast %113 : vector<1x1x8xf32> to vector<8xf32>
    %cst_87 = arith.constant dense<0.000000e+00> : vector<8xf32>
    %115 = vector.multi_reduction <add>, %107, %cst_87 [0] : vector<256x8xf32> to vector<8xf32>
    %116 = arith.addf %114, %115 : vector<8xf32>
    %c0_88 = arith.constant 0 : index
    %c0_89 = arith.constant 0 : index
    %c0_90 = arith.constant 0 : index
    %117 = vector.load %arg6[%c0_88, %c0_89, %c0_90] : memref<1x2x8xf32, #tpu.memory_space<vmem>>, vector<1x1x8xf32>
    %118 = vector.shape_cast %117 : vector<1x1x8xf32> to vector<8xf32>
    %119 = vector.shape_cast %116 : vector<8xf32> to vector<1x1x8xf32>
    tpu.vector_store %arg6[%c0_88, %c0_89, %c0_90], %119 {strides = array<i32>} : memref<1x2x8xf32, #tpu.memory_space<vmem>>, vector<1x1x8xf32>,
    %c0_91 = arith.constant 0 : index
    %c1_92 = arith.constant 1 : index
    %c0_93 = arith.constant 0 : index
    %120 = vector.load %arg6[%c0_91, %c1_92, %c0_93] : memref<1x2x8xf32, #tpu.memory_space<vmem>>, vector<1x1x8xf32>
    %121 = vector.shape_cast %120 : vector<1x1x8xf32> to vector<8xf32>
    %122 = arith.mulf %107, %107 : vector<256x8xf32>
    %cst_94 = arith.constant dense<0.000000e+00> : vector<8xf32>
    %123 = vector.multi_reduction <add>, %122, %cst_94 [0] : vector<256x8xf32> to vector<8xf32>
    %124 = arith.addf %121, %123 : vector<8xf32>
    %c0_95 = arith.constant 0 : index
    %c1_96 = arith.constant 1 : index
    %c0_97 = arith.constant 0 : index
    %125 = vector.load %arg6[%c0_95, %c1_96, %c0_97] : memref<1x2x8xf32, #tpu.memory_space<vmem>>, vector<1x1x8xf32>
    %126 = vector.shape_cast %125 : vector<1x1x8xf32> to vector<8xf32>
    %127 = vector.shape_cast %124 : vector<8xf32> to vector<1x1x8xf32>
    tpu.vector_store %arg6[%c0_95, %c1_96, %c0_97], %127 {strides = array<i32>} : memref<1x2x8xf32, #tpu.memory_space<vmem>>, vector<1x1x8xf32>,
    return
  }
  func.func @transform_0(%arg0: i32, %arg1: i32) -> (i32, i32, i32, i32) {
    %c0_i32 = arith.constant 0 : i32
    %c0_i32_0 = arith.constant 0 : i32
    %c0_i32_1 = arith.constant 0 : i32
    %c0_i32_2 = arith.constant 0 : i32
    return %arg0, %c0_i32, %c0_i32_0, %c0_i32_1 : i32, i32, i32, i32
  }
  func.func @transform_1(%arg0: i32, %arg1: i32) -> (i32, i32, i32) {
    %c0_i32 = arith.constant 0 : i32
    %c0_i32_0 = arith.constant 0 : i32
    %c0_i32_1 = arith.constant 0 : i32
    %c0_i32_2 = arith.constant 0 : i32
    return %c0_i32, %c0_i32_0, %c0_i32_1 : i32, i32, i32
  }
  func.func @transform_2(%arg0: i32, %arg1: i32) -> (i32, i32) {
    %c0_i32 = arith.constant 0 : i32
    %c0_i32_0 = arith.constant 0 : i32
    %c0_i32_1 = arith.constant 0 : i32
    return %c0_i32, %c0_i32_0 : i32, i32
  }
  func.func @transform_3(%arg0: i32, %arg1: i32) -> (i32, i32, i32, i32) {
    %c0_i32 = arith.constant 0 : i32
    %c0_i32_0 = arith.constant 0 : i32
    %c0_i32_1 = arith.constant 0 : i32
    return %arg0, %arg1, %c0_i32, %c0_i32_0 : i32, i32, i32, i32
  }
  func.func @transform_4(%arg0: i32, %arg1: i32) -> (i32, i32, i32) {
    %c0_i32 = arith.constant 0 : i32
    %c0_i32_0 = arith.constant 0 : i32
    %c0_i32_1 = arith.constant 0 : i32
    return %arg0, %c0_i32, %c0_i32_0 : i32, i32, i32
  }
}

</mosaic_0001>

<llo_original>
// kernel: tpu_custom_call.1
$region0: #{tpu_custom_call.1}
  #allocation0 [shape = 'u32[]', space=smem, size = 0x4, offset = 0x4, fixed_abs, tag = 'smem constant byte address 0x4 - core index']
  #allocation1 [shape = 'u32[72,128]{1,0:T(1,128)}', space=vmem, size = 0x9000, scoped, tag = 'internal scratch']
  #allocation2 [shape = 'f32[256,8]{1,0:T(8,128)}', space=vmem, size = 0x20000, scoped, tag = 'scratch operand']
  %s0 = inlined_call_operand.vmem [shape: bf16[2,18,18,4], index: 0, kind: input, shape index: {}]
  %s1 = inlined_call_operand.vmem [shape: bf16[9,4,8], index: 1, kind: input, shape index: {}]
  %s2 = inlined_call_operand.vmem [shape: f32[1,8], index: 2, kind: input, shape index: {}]
  %s3 = inlined_call_operand.vmem [shape: bf16[2,16,16,8], index: 3, kind: output, shape index: {0}]
  %s4 = inlined_call_operand.hbm [shape: f32[2,2,8], index: 4, kind: output, shape index: {1}]
  %5 = xla_tuple %s3, %s4
  %s6 = sld [smem:[#allocation0]]
  $region57: #{tpu_custom_call.1} parent=0
    _
  %s8 = ssub.s32 1, %s6
  %s9 = scalar_select 0, %s8, %s6
  $region1: #{tpu_custom_call.1} parent=0
    #allocation3 [shape = 'u8[2048]{0}', space=vmem, size = 0x800, scoped, tag = 'output window, operand 1']
    #allocation4 [shape = 's32[2]{0}', space=sflag, size = 0x8, scoped, tag = 'scoped memory for tpu_custom_call.1']
    %10 = vsyncpa [#allocation4], 0
    %s11 = scalar_lea.sflag [#allocation4], 1
    %12 = vsyncpa %s11, 0
    loop: start=0, step=1, limit=4
    $region2: #{tpu_custom_call.1} parent=1 // loop_pre_header
      _
    $region3: #{tpu_custom_call.1} parent=1 // loop_header
      %s14 = sphi 0, %s18
      %p15 = scmp.ge.s32.totalorder %s14, 4
      %s21 = sphi 0, %s33
      %s22 = sphi 0, %s29
      %s23 = sphi 0, %s21
      %s24 = sphi 0, %s22
      %s25 = sphi 0, %s23
      %s26 = sphi 0, %s24
      %s36 = sphi 0, %s38
      %s39 = sphi 0, %s36
      %s40 = sphi 0, %s39
      %s56 = sphi 0, %s40
      %s60 = sphi 0, %s60
      %s62 = sphi 0, %s60
      %s63 = sphi 0, %s62
      %s77 = sphi 0, %s63
      %s81 = sphi 0, %s81
      %s83 = sphi 0, %s81
      %s84 = sphi 0, %s83
      %s98 = sphi 0, %s84
      %s106 = sphi 0, %s108
      %s109 = sphi 0, %s106
      %s110 = sphi 0, %s109
      %s126 = sphi 0, %s110
      %s132 = sphi 0, %s134
      %s135 = sphi 0, %s132
      %s136 = sphi 0, %s135
      %s152 = sphi 0, %s136
    $region4: #{tpu_custom_call.1} parent=1 // loop_header_branch
      %17 = sbr.rel (%p15) target = $region8
    $region5: #{tpu_custom_call.1} parent=1 // loop_body
      %s19 = ssub.s32 %s14, 1
      %s20 = ssub.s32 %s14, 2
      %s27 = sadd.s32 1, %s22
      %p28 = scmp.ge.s32.totalorder %s27, 1
      %s29 = scalar_select %p28, 0, %s27
      %s30 = sadd.s32 1, %s21
      %s31 = scalar_select %p28, %s30, %s21
      %p32 = scmp.ge.s32.totalorder %s31, 2
      %s33 = scalar_select %p32, 0, %s31
      %s34 = ssub.s32 %s21, %s33
      %p35 = scmp.eq.s32.totalorder %s34, 0
      %s37 = sadd.s32 %s36, 1
      %s38 = scalar_select %p35, %s36, %s37
      %p41 = pneg %p35
      %p42 = scmp.eq.s32.totalorder %s14, 1
      %p43 = por %p41, %p42
      %p44 = scmp.ne.s32.totalorder %s36, %s39
      %p45 = scmp.eq.s32.totalorder %s14, 0
      %p46 = por %p44, %p45
      %p47 = scmp.ne.s32.totalorder %s36, %s39
      %p48 = scmp.eq.s32.totalorder %s19, 1
      %p49 = por %p47, %p48
      %p50 = scmp.ne.s32.totalorder %s39, %s40
      %p51 = scmp.eq.s32.totalorder %s19, 0
      %p52 = por %p50, %p51
      %p53 = scmp.ne.s32.totalorder %s39, %s40
      %p54 = scmp.eq.s32.totalorder %s20, 1
      %p55 = por %p53, %p54
      %p57 = scmp.ne.s32.totalorder %s40, %s56
      %p58 = scmp.eq.s32.totalorder %s20, 0
      %p59 = por %p57, %p58
      %s61 = sadd.s32 %s60, 1
      %p64 = scmp.eq.s32.totalorder %s14, 1
      %p65 = scmp.ne.s32.totalorder %s60, %s62
      %p66 = scmp.eq.s32.totalorder %s14, 0
      %p67 = por %p65, %p66
      %p68 = scmp.ne.s32.totalorder %s60, %s62
      %p69 = scmp.eq.s32.totalorder %s19, 1
      %p70 = por %p68, %p69
      %p71 = scmp.ne.s32.totalorder %s62, %s63
      %p72 = scmp.eq.s32.totalorder %s19, 0
      %p73 = por %p71, %p72
      %p74 = scmp.ne.s32.totalorder %s62, %s63
      %p75 = scmp.eq.s32.totalorder %s20, 1
      %p76 = por %p74, %p75
      %p78 = scmp.ne.s32.totalorder %s63, %s77
      %p79 = scmp.eq.s32.totalorder %s20, 0
      %p80 = por %p78, %p79
      %s82 = sadd.s32 %s81, 1
      %p85 = scmp.eq.s32.totalorder %s14, 1
      %p86 = scmp.ne.s32.totalorder %s81, %s83
      %p87 = scmp.eq.s32.totalorder %s14, 0
      %p88 = por %p86, %p87
      %p89 = scmp.ne.s32.totalorder %s81, %s83
      %p90 = scmp.eq.s32.totalorder %s19, 1
      %p91 = por %p89, %p90
      %p92 = scmp.ne.s32.totalorder %s83, %s84
      %p93 = scmp.eq.s32.totalorder %s19, 0
      %p94 = por %p92, %p93
      %p95 = scmp.ne.s32.totalorder %s83, %s84
      %p96 = scmp.eq.s32.totalorder %s20, 1
      %p97 = por %p95, %p96
      %p99 = scmp.ne.s32.totalorder %s84, %s98
      %p100 = scmp.eq.s32.totalorder %s20, 0
      %p101 = por %p99, %p100
      %s102 = ssub.s32 %s21, %s33
      %s103 = ssub.s32 %s22, %s29
      %s104 = sor.u32 %s102, %s103
      %p105 = scmp.eq.s32.totalorder %s104, 0
      %s107 = sadd.s32 %s106, 1
      %s108 = scalar_select %p105, %s106, %s107
      %p111 = pneg %p105
      %p112 = scmp.eq.s32.totalorder %s14, 1
      %p113 = por %p111, %p112
      %p114 = scmp.ne.s32.totalorder %s106, %s109
      %p115 = scmp.eq.s32.totalorder %s14, 0
      %p116 = por %p114, %p115
      %p117 = scmp.ne.s32.totalorder %s106, %s109
      %p118 = scmp.eq.s32.totalorder %s19, 1
      %p119 = por %p117, %p118
      %p120 = scmp.ne.s32.totalorder %s109, %s110
      %p121 = scmp.eq.s32.totalorder %s19, 0
      %p122 = por %p120, %p121
      %p123 = scmp.ne.s32.totalorder %s109, %s110
      %p124 = scmp.eq.s32.totalorder %s20, 1
      %p125 = por %p123, %p124
      %p127 = scmp.ne.s32.totalorder %s110, %s126
      %p128 = scmp.eq.s32.totalorder %s20, 0
      %p129 = por %p127, %p128
      %s130 = ssub.s32 %s21, %s33
      %p131 = scmp.eq.s32.totalorder %s130, 0
      %s133 = sadd.s32 %s132, 1
      %s134 = scalar_select %p131, %s132, %s133
      %p137 = pneg %p131
      %p138 = scmp.eq.s32.totalorder %s14, 1
      %p139 = por %p137, %p138
      %p140 = scmp.ne.s32.totalorder %s132, %s135
      %p141 = scmp.eq.s32.totalorder %s14, 0
      %p142 = por %p140, %p141
      %p143 = scmp.ne.s32.totalorder %s132, %s135
      %p144 = scmp.eq.s32.totalorder %s19, 1
      %p145 = por %p143, %p144
      %p146 = scmp.ne.s32.totalorder %s135, %s136
      %p147 = scmp.eq.s32.totalorder %s19, 0
      %p148 = por %p146, %p147
      %p149 = scmp.ne.s32.totalorder %s135, %s136
      %p150 = scmp.eq.s32.totalorder %s20, 1
      %p151 = por %p149, %p150
      %p153 = scmp.ne.s32.totalorder %s136, %s152
      %p154 = scmp.eq.s32.totalorder %s20, 0
      %p155 = por %p153, %p154
      %p156 = scmp.le.s32.totalorder 1, %s14
      %p157 = scmp.lt.s32.totalorder %s14, 3
      %p158 = pnand %p156, %p157
      %p159 = pneg %p158
      // Predicated region
      $region9: #{tpu_custom_call.1} parent=5 // pred_check
        _
      $region10: #{tpu_custom_call.1} parent=5 // pred_check_branch
        %161 = sbr.rel (%p158) target = $region12
      $region11: #{tpu_custom_call.1} parent=5 // pred_region
        %s162 = ssub.s32 %s14, 1
        // Predicated region
        $region13: #{tpu_custom_call.1} parent=11 // pred_check
          %p163 = pneg %p73
        $region14: #{tpu_custom_call.1} parent=11 // pred_check_branch
          %165 = sbr.rel (%p163) target = $region16
        $region15: #{tpu_custom_call.1} parent=11 // pred_region
          _
        $region16: #{tpu_custom_call.1} parent=11 // pred_fallthru
          _
        // Predicated region
        $region17: #{tpu_custom_call.1} parent=11 // pred_check
          %p166 = pneg %p94
        $region18: #{tpu_custom_call.1} parent=11 // pred_check_branch
          %168 = sbr.rel (%p166) target = $region20
        $region19: #{tpu_custom_call.1} parent=11 // pred_region
          _
        $region20: #{tpu_custom_call.1} parent=11 // pred_fallthru
          _
      $region12: #{tpu_custom_call.1} parent=5 // pred_fallthru
        _
      %p169 = scmp.lt.s32.totalorder %s14, 2
      // Predicated region
      $region21: #{tpu_custom_call.1} parent=5 // pred_check
        %p170 = pneg %p169
      $region22: #{tpu_custom_call.1} parent=5 // pred_check_branch
        %172 = sbr.rel (%p170) target = $region24
      $region23: #{tpu_custom_call.1} parent=5 // pred_region
        // Predicated region
        $region25: #{tpu_custom_call.1} parent=23 // pred_check
          %p173 = pneg %p46
        $region26: #{tpu_custom_call.1} parent=23 // pred_check_branch
          %175 = sbr.rel (%p173) target = $region28
        $region27: #{tpu_custom_call.1} parent=23 // pred_region
          %p176 = scmp.lt.s32.totalorder %s21, 1
          %s177 = scalar_select %p176, %s21, 1
          %s178 = smul.addr %s177, 54
          %s179 = smul.addr %s178, 4
          %s180 = scalar_lea.vmem %s0, %s179
        $region28: #{tpu_custom_call.1} parent=23 // pred_fallthru
          _
      $region24: #{tpu_custom_call.1} parent=5 // pred_fallthru
        _
      %p181 = scmp.le.s32.totalorder 1, %s14
      %p182 = scmp.lt.s32.totalorder %s14, 3
      %p183 = pnand %p181, %p182
      %p184 = pneg %p183
      // Predicated region
      $region29: #{tpu_custom_call.1} parent=5 // pred_check
        _
      $region30: #{tpu_custom_call.1} parent=5 // pred_check_branch
        %186 = sbr.rel (%p183) target = $region32
      $region31: #{tpu_custom_call.1} parent=5 // pred_region
        %s187 = ssub.s32 %s14, 1
        %p188 = scmp.lt.s32.totalorder %s23, 1
        %s189 = scalar_select %p188, %s23, 1
        %s190 = smul.addr %s189, 54
        %s191 = smul.addr %s190, 4
        %s192 = scalar_lea.vmem %s0, %s191
        %p193 = pneg %p52
        %p194 = pneg %p49
        %p195 = pneg %p73
        %p196 = pneg %p70
        %p197 = pneg %p94
        %p198 = pneg %p91
        %p199 = pneg %p122
        %p200 = pneg %p119
        %s201 = smul.u32 16, %s24
        %p202 = scmp.lt.s32.totalorder %s23, 1
        %s203 = scalar_select %p202, %s23, 1
        %p204 = scmp.lt.s32.totalorder %s201, 15
        %s205 = scalar_select %p204, %s201, 15
        %s206 = smul.addr %s205, 2
        %s207 = smul.addr %s203, 32
        %s208 = sadd.s32 %s206, %s207
        %s209 = smul.addr %s208, 4
        %s210 = scalar_lea.vmem %s3, %s209
        %p211 = pneg %p148
        %p212 = pneg %p145
        %s213 = sand.u32 %s135, 1
        %s214 = scalar_lea.sflag [#allocation4], %s213
        %s215 = sand.u32 %s135, 1
        %s216 = smul.addr %s215, 2
        %s217 = scalar_lea.vmem [#allocation3], %s216
        %p218 = scmp.lt.s32.totalorder %s23, 1
        %s219 = scalar_select %p218, %s23, 1
        %s220 = smul.addr %s219, 54
        %s221 = smul.addr %s220, 4
        %s222 = scalar_lea.vmem %s0, %s221
        %s223 = smul.u32 16, %s24
        %p224 = scmp.lt.s32.totalorder %s23, 1
        %s225 = scalar_select %p224, %s23, 1
        %p226 = scmp.lt.s32.totalorder %s223, 15
        %s227 = scalar_select %p226, %s223, 15
        %s228 = smul.addr %s227, 2
        %s229 = smul.addr %s225, 32
        %s230 = sadd.s32 %s228, %s229
        %s231 = smul.addr %s230, 4
        %s232 = scalar_lea.vmem %s3, %s231
        %s233 = smul.u32 16, %s24
        %p235 = scmp.eq.s32.totalorder %s24, 0
        // Predicated region
        $region33: #{tpu_custom_call.1} parent=31 // pred_check
          %p236 = pneg %p235
        $region34: #{tpu_custom_call.1} parent=31 // pred_check_branch
          %238 = sbr.rel (%p236) target = $region36
        $region35: #{tpu_custom_call.1} parent=31 // pred_region
          %vm239 = vcmask 58368
          %240 = vst.msk [vmem:[%s217] sm:$0x3] %vm239, 0.0
        $region36: #{tpu_custom_call.1} parent=31 // pred_fallthru
          _
        %s241 = smul.u32 %s24, 16
        %vm242 = vcmask 64512
        %243 = vst.msk [vmem:[#allocation2] sm:$0xff] %vm242, 0.0
        %244 = vst.msk [vmem:[#allocation2 + $0x8] sm:$0xff] %vm242, 0.0
        %245 = vst.msk [vmem:[#allocation2 + $0x10] sm:$0xff] %vm242, 0.0
        %246 = vst.msk [vmem:[#allocation2 + $0x18] sm:$0xff] %vm242, 0.0
        %247 = vst.msk [vmem:[#allocation2 + $0x20] sm:$0xff] %vm242, 0.0
        %248 = vst.msk [vmem:[#allocation2 + $0x28] sm:$0xff] %vm242, 0.0
        %249 = vst.msk [vmem:[#allocation2 + $0x30] sm:$0xff] %vm242, 0.0
        %250 = vst.msk [vmem:[#allocation2 + $0x38] sm:$0xff] %vm242, 0.0
        %251 = vst.msk [vmem:[#allocation2 + $0x40] sm:$0xff] %vm242, 0.0
        %252 = vst.msk [vmem:[#allocation2 + $0x48] sm:$0xff] %vm242, 0.0
        %253 = vst.msk [vmem:[#allocation2 + $0x50] sm:$0xff] %vm242, 0.0
        %254 = vst.msk [vmem:[#allocation2 + $0x58] sm:$0xff] %vm242, 0.0
        %255 = vst.msk [vmem:[#allocation2 + $0x60] sm:$0xff] %vm242, 0.0
        %256 = vst.msk [vmem:[#allocation2 + $0x68] sm:$0xff] %vm242, 0.0
        %257 = vst.msk [vmem:[#allocation2 + $0x70] sm:$0xff] %vm242, 0.0
        %258 = vst.msk [vmem:[#allocation2 + $0x78] sm:$0xff] %vm242, 0.0
        %259 = vst.msk [vmem:[#allocation2 + $0x80] sm:$0xff] %vm242, 0.0
        %260 = vst.msk [vmem:[#allocation2 + $0x88] sm:$0xff] %vm242, 0.0
        %261 = vst.msk [vmem:[#allocation2 + $0x90] sm:$0xff] %vm242, 0.0
        %262 = vst.msk [vmem:[#allocation2 + $0x98] sm:$0xff] %vm242, 0.0
        %263 = vst.msk [vmem:[#allocation2 + $0xa0] sm:$0xff] %vm242, 0.0
        %264 = vst.msk [vmem:[#allocation2 + $0xa8] sm:$0xff] %vm242, 0.0
        %265 = vst.msk [vmem:[#allocation2 + $0xb0] sm:$0xff] %vm242, 0.0
        %266 = vst.msk [vmem:[#allocation2 + $0xb8] sm:$0xff] %vm242, 0.0
        %267 = vst.msk [vmem:[#allocation2 + $0xc0] sm:$0xff] %vm242, 0.0
        %268 = vst.msk [vmem:[#allocation2 + $0xc8] sm:$0xff] %vm242, 0.0
        %269 = vst.msk [vmem:[#allocation2 + $0xd0] sm:$0xff] %vm242, 0.0
        %270 = vst.msk [vmem:[#allocation2 + $0xd8] sm:$0xff] %vm242, 0.0
        %271 = vst.msk [vmem:[#allocation2 + $0xe0] sm:$0xff] %vm242, 0.0
        %272 = vst.msk [vmem:[#allocation2 + $0xe8] sm:$0xff] %vm242, 0.0
        %273 = vst.msk [vmem:[#allocation2 + $0xf0] sm:$0xff] %vm242, 0.0
        %274 = vst.msk [vmem:[#allocation2 + $0xf8] sm:$0xff] %vm242, 0.0
        %s275 = smul.u32 %s241, 3
        %s276 = smul.addr %s275, 4
        %s277 = scalar_lea.vmem %s222, %s276
        %v278 = vld [vmem:[%s277] sm:$0xf]
        %v279 = vld [vmem:[%s277 + $0x4] sm:$0xf]
        %v280 = vld [vmem:[%s277 + $0x8] sm:$0x1]
        %v281 = vld [vmem:[%s277 + $0xc] sm:$0xf]
        %v282 = vld [vmem:[%s277 + $0x10] sm:$0xf]
        %v283 = vld [vmem:[%s277 + $0x14] sm:$0x1]
        %v284 = vld [vmem:[%s277 + $0x18] sm:$0xf]
        %v285 = vld [vmem:[%s277 + $0x1c] sm:$0xf]
        %v286 = vld [vmem:[%s277 + $0x20] sm:$0x1]
        %v287 = vld [vmem:[%s277 + $0x24] sm:$0xf]
        %v288 = vld [vmem:[%s277 + $0x28] sm:$0xf]
        %v289 = vld [vmem:[%s277 + $0x2c] sm:$0x1]
        %v290 = vld [vmem:[%s277 + $0x30] sm:$0xf]
        %v291 = vld [vmem:[%s277 + $0x34] sm:$0xf]
        %v292 = vld [vmem:[%s277 + $0x38] sm:$0x1]
        %v293 = vld [vmem:[%s277 + $0x3c] sm:$0xf]
        %v294 = vld [vmem:[%s277 + $0x40] sm:$0xf]
        %v295 = vld [vmem:[%s277 + $0x44] sm:$0x1]
        %v296 = vld [vmem:[%s277 + $0x48] sm:$0xf]
        %v297 = vld [vmem:[%s277 + $0x4c] sm:$0xf]
        %v298 = vld [vmem:[%s277 + $0x50] sm:$0x1]
        %v299 = vld [vmem:[%s277 + $0x54] sm:$0xf]
        %v300 = vld [vmem:[%s277 + $0x58] sm:$0xf]
        %v301 = vld [vmem:[%s277 + $0x5c] sm:$0x1]
        %v302 = vld [vmem:[%s277 + $0x60] sm:$0xf]
        %v303 = vld [vmem:[%s277 + $0x64] sm:$0xf]
        %v304 = vld [vmem:[%s277 + $0x68] sm:$0x1]
        %v305 = vld [vmem:[%s277 + $0x6c] sm:$0xf]
        %v306 = vld [vmem:[%s277 + $0x70] sm:$0xf]
        %v307 = vld [vmem:[%s277 + $0x74] sm:$0x1]
        %v308 = vld [vmem:[%s277 + $0x78] sm:$0xf]
        %v309 = vld [vmem:[%s277 + $0x7c] sm:$0xf]
        %v310 = vld [vmem:[%s277 + $0x80] sm:$0x1]
        %v311 = vld [vmem:[%s277 + $0x84] sm:$0xf]
        %v312 = vld [vmem:[%s277 + $0x88] sm:$0xf]
        %v313 = vld [vmem:[%s277 + $0x8c] sm:$0x1]
        %v314 = vld [vmem:[%s277 + $0x90] sm:$0xf]
        %v315 = vld [vmem:[%s277 + $0x94] sm:$0xf]
        %v316 = vld [vmem:[%s277 + $0x98] sm:$0x1]
        %v317 = vld [vmem:[%s277 + $0x9c] sm:$0xf]
        %v318 = vld [vmem:[%s277 + $0xa0] sm:$0xf]
        %v319 = vld [vmem:[%s277 + $0xa4] sm:$0x1]
        %v320 = vld [vmem:[%s277 + $0xa8] sm:$0xf]
        %v321 = vld [vmem:[%s277 + $0xac] sm:$0xf]
        %v322 = vld [vmem:[%s277 + $0xb0] sm:$0x1]
        %v323 = vld [vmem:[%s277 + $0xb4] sm:$0xf]
        %v324 = vld [vmem:[%s277 + $0xb8] sm:$0xf]
        %v325 = vld [vmem:[%s277 + $0xbc] sm:$0x1]
        %v326 = vunpack.c.l.bf16 %v278
        %v327 = vunpack.c.l.bf16 %v279
        %v328 = vunpack.c.l.bf16 %v280
        %v329 = vunpack.c.l.bf16 %v281
        %v330 = vunpack.c.l.bf16 %v282
        %v331 = vunpack.c.l.bf16 %v283
        %v332 = vunpack.c.l.bf16 %v284
        %v333 = vunpack.c.l.bf16 %v285
        %v334 = vunpack.c.l.bf16 %v286
        %v335 = vunpack.c.l.bf16 %v287
        %v336 = vunpack.c.l.bf16 %v288
        %v337 = vunpack.c.l.bf16 %v289
        %v338 = vunpack.c.l.bf16 %v290
        %v339 = vunpack.c.l.bf16 %v291
        %v340 = vunpack.c.l.bf16 %v292
        %v341 = vunpack.c.l.bf16 %v293
        %v342 = vunpack.c.l.bf16 %v294
        %v343 = vunpack.c.l.bf16 %v295
        %v344 = vunpack.c.l.bf16 %v296
        %v345 = vunpack.c.l.bf16 %v297
        %v346 = vunpack.c.l.bf16 %v298
        %v347 = vunpack.c.l.bf16 %v299
        %v348 = vunpack.c.l.bf16 %v300
        %v349 = vunpack.c.l.bf16 %v301
        %v350 = vunpack.c.l.bf16 %v302
        %v351 = vunpack.c.l.bf16 %v303
        %v352 = vunpack.c.l.bf16 %v304
        %v353 = vunpack.c.l.bf16 %v305
        %v354 = vunpack.c.l.bf16 %v306
        %v355 = vunpack.c.l.bf16 %v307
        %v356 = vunpack.c.l.bf16 %v308
        %v357 = vunpack.c.l.bf16 %v309
        %v358 = vunpack.c.l.bf16 %v310
        %v359 = vunpack.c.l.bf16 %v311
        %v360 = vunpack.c.l.bf16 %v312
        %v361 = vunpack.c.l.bf16 %v313
        %v362 = vunpack.c.l.bf16 %v314
        %v363 = vunpack.c.l.bf16 %v315
        %v364 = vunpack.c.l.bf16 %v316
        %v365 = vunpack.c.l.bf16 %v317
        %v366 = vunpack.c.l.bf16 %v318
        %v367 = vunpack.c.l.bf16 %v319
        %v368 = vunpack.c.l.bf16 %v320
        %v369 = vunpack.c.l.bf16 %v321
        %v370 = vunpack.c.l.bf16 %v322
        %v371 = vunpack.c.l.bf16 %v323
        %v372 = vunpack.c.l.bf16 %v324
        %v373 = vunpack.c.l.bf16 %v325
        %v374 = vpack.c.bf16 %v327, %v326
        %v375 = vpack.c.bf16 %v330, %v329
        %v376 = vpack.c.bf16 %v333, %v332
        %v377 = vpack.c.bf16 %v336, %v335
        %v378 = vpack.c.bf16 %v339, %v338
        %v379 = vpack.c.bf16 %v342, %v341
        %v380 = vpack.c.bf16 %v345, %v344
        %v381 = vpack.c.bf16 %v348, %v347
        %v382 = vpack.c.bf16 %v351, %v350
        %v383 = vpack.c.bf16 %v354, %v353
        %v384 = vpack.c.bf16 %v357, %v356
        %v385 = vpack.c.bf16 %v360, %v359
        %v386 = vpack.c.bf16 %v363, %v362
        %v387 = vpack.c.bf16 %v366, %v365
        %v388 = vpack.c.bf16 %v369, %v368
        %v389 = vpack.c.bf16 %v372, %v371
        %v390 = vld [vmem:[#allocation2] sm:$0xff]
        %v391 = vld [vmem:[#allocation2 + $0x8] sm:$0xff]
        %v392 = vld [vmem:[#allocation2 + $0x10] sm:$0xff]
        %v393 = vld [vmem:[#allocation2 + $0x18] sm:$0xff]
        %v394 = vld [vmem:[#allocation2 + $0x20] sm:$0xff]
        %v395 = vld [vmem:[#allocation2 + $0x28] sm:$0xff]
        %v396 = vld [vmem:[#allocation2 + $0x30] sm:$0xff]
        %v397 = vld [vmem:[#allocation2 + $0x38] sm:$0xff]
        %v398 = vld [vmem:[#allocation2 + $0x40] sm:$0xff]
        %v399 = vld [vmem:[#allocation2 + $0x48] sm:$0xff]
        %v400 = vld [vmem:[#allocation2 + $0x50] sm:$0xff]
        %v401 = vld [vmem:[#allocation2 + $0x58] sm:$0xff]
        %v402 = vld [vmem:[#allocation2 + $0x60] sm:$0xff]
        %v403 = vld [vmem:[#allocation2 + $0x68] sm:$0xff]
        %v404 = vld [vmem:[#allocation2 + $0x70] sm:$0xff]
        %v405 = vld [vmem:[#allocation2 + $0x78] sm:$0xff]
        %v406 = vld [vmem:[#allocation2 + $0x80] sm:$0xff]
        %v407 = vld [vmem:[#allocation2 + $0x88] sm:$0xff]
        %v408 = vld [vmem:[#allocation2 + $0x90] sm:$0xff]
        %v409 = vld [vmem:[#allocation2 + $0x98] sm:$0xff]
        %v410 = vld [vmem:[#allocation2 + $0xa0] sm:$0xff]
        %v411 = vld [vmem:[#allocation2 + $0xa8] sm:$0xff]
        %v412 = vld [vmem:[#allocation2 + $0xb0] sm:$0xff]
        %v413 = vld [vmem:[#allocation2 + $0xb8] sm:$0xff]
        %v414 = vld [vmem:[#allocation2 + $0xc0] sm:$0xff]
        %v415 = vld [vmem:[#allocation2 + $0xc8] sm:$0xff]
        %v416 = vld [vmem:[#allocation2 + $0xd0] sm:$0xff]
        %v417 = vld [vmem:[#allocation2 + $0xd8] sm:$0xff]
        %v418 = vld [vmem:[#allocation2 + $0xe0] sm:$0xff]
        %v419 = vld [vmem:[#allocation2 + $0xe8] sm:$0xff]
        %v420 = vld [vmem:[#allocation2 + $0xf0] sm:$0xff]
        %v421 = vld [vmem:[#allocation2 + $0xf8] sm:$0xff]
        %v422 = vld [vmem:[%s1] sm:$0x3]
        %vm423 = vcmask 31744
        %v425 = vsel %vm423, %v374, 0
        %v428 = vsel %vm423, %v375, 0
        %v431 = vsel %vm423, %v376, 0
        %v434 = vsel %vm423, %v377, 0
        %v437 = vsel %vm423, %v378, 0
        %v440 = vsel %vm423, %v379, 0
        %v443 = vsel %vm423, %v380, 0
        %v446 = vsel %vm423, %v381, 0
        %v449 = vsel %vm423, %v382, 0
        %v452 = vsel %vm423, %v383, 0
        %v455 = vsel %vm423, %v384, 0
        %v458 = vsel %vm423, %v385, 0
        %v461 = vsel %vm423, %v386, 0
        %v464 = vsel %vm423, %v387, 0
        %v467 = vsel %vm423, %v388, 0
        %v470 = vsel %vm423, %v389, 0
        %vm472 = vcmask 1041408
        %v474 = vsel %vm472, %v422, 0
        %476 = vmatpush.bf16.msra.mxu0 0
        %477 = vmatpush.bf16.msra.mxu0 0
        %478 = vmatpush.bf16.msra.mxu0 0
        %479 = vmatpush.bf16.msra.mxu0 0
        %480 = vmatpush.bf16.msra.mxu0 0
        %481 = vmatpush.bf16.msra.mxu0 0
        %482 = vmatpush.bf16.msra.mxu0 0
        %483 = vmatpush.bf16.msra.mxu0 %v474
        %484 = vmatmul.bf16.gmra.mxu0 %v425
        %v485 = vpop.f32.mrf.mxu0
        %v486 = vadd.f32 0.0, %v485
        %v487 = vpop.f32.mrf.mxu0
        %v488 = vadd.f32 0.0, %v487
        %489 = vmatmul.bf16.gmra.mxu0 %v428
        %v490 = vpop.f32.mrf.mxu0
        %v491 = vadd.f32 0.0, %v490
        %v492 = vpop.f32.mrf.mxu0
        %v493 = vadd.f32 0.0, %v492
        %494 = vmatmul.bf16.gmra.mxu0 %v431
        %v495 = vpop.f32.mrf.mxu0
        %v496 = vadd.f32 0.0, %v495
        %v497 = vpop.f32.mrf.mxu0
        %v498 = vadd.f32 0.0, %v497
        %499 = vmatmul.bf16.gmra.mxu0 %v434
        %v500 = vpop.f32.mrf.mxu0
        %v501 = vadd.f32 0.0, %v500
        %v502 = vpop.f32.mrf.mxu0
        %v503 = vadd.f32 0.0, %v502
        %504 = vmatmul.bf16.gmra.mxu0 %v437
        %v505 = vpop.f32.mrf.mxu0
        %v506 = vadd.f32 0.0, %v505
        %v507 = vpop.f32.mrf.mxu0
        %v508 = vadd.f32 0.0, %v507
        %509 = vmatmul.bf16.gmra.mxu0 %v440
        %v510 = vpop.f32.mrf.mxu0
        %v511 = vadd.f32 0.0, %v510
        %v512 = vpop.f32.mrf.mxu0
        %v513 = vadd.f32 0.0, %v512
        %514 = vmatmul.bf16.gmra.mxu0 %v443
        %v515 = vpop.f32.mrf.mxu0
        %v516 = vadd.f32 0.0, %v515
        %v517 = vpop.f32.mrf.mxu0
        %v518 = vadd.f32 0.0, %v517
        %519 = vmatmul.bf16.gmra.mxu0 %v446
        %v520 = vpop.f32.mrf.mxu0
        %v521 = vadd.f32 0.0, %v520
        %v522 = vpop.f32.mrf.mxu0
        %v523 = vadd.f32 0.0, %v522
        %524 = vmatmul.bf16.gmra.mxu0 %v449
        %v525 = vpop.f32.mrf.mxu0
        %v526 = vadd.f32 0.0, %v525
        %v527 = vpop.f32.mrf.mxu0
        %v528 = vadd.f32 0.0, %v527
        %529 = vmatmul.bf16.gmra.mxu0 %v452
        %v530 = vpop.f32.mrf.mxu0
        %v531 = vadd.f32 0.0, %v530
        %v532 = vpop.f32.mrf.mxu0
        %v533 = vadd.f32 0.0, %v532
        %534 = vmatmul.bf16.gmra.mxu0 %v455
        %v535 = vpop.f32.mrf.mxu0
        %v536 = vadd.f32 0.0, %v535
        %v537 = vpop.f32.mrf.mxu0
        %v538 = vadd.f32 0.0, %v537
        %539 = vmatmul.bf16.gmra.mxu0 %v458
        %v540 = vpop.f32.mrf.mxu0
        %v541 = vadd.f32 0.0, %v540
        %v542 = vpop.f32.mrf.mxu0
        %v543 = vadd.f32 0.0, %v542
        %544 = vmatmul.bf16.gmra.mxu0 %v461
        %v545 = vpop.f32.mrf.mxu0
        %v546 = vadd.f32 0.0, %v545
        %v547 = vpop.f32.mrf.mxu0
        %v548 = vadd.f32 0.0, %v547
        %549 = vmatmul.bf16.gmra.mxu0 %v464
        %v550 = vpop.f32.mrf.mxu0
        %v551 = vadd.f32 0.0, %v550
        %v552 = vpop.f32.mrf.mxu0
        %v553 = vadd.f32 0.0, %v552
        %554 = vmatmul.bf16.gmra.mxu0 %v467
        %v555 = vpop.f32.mrf.mxu0
        %v556 = vadd.f32 0.0, %v555
        %v557 = vpop.f32.mrf.mxu0
        %v558 = vadd.f32 0.0, %v557
        %559 = vmatmul.bf16.gmra.mxu0 %v470
        %v560 = vpop.f32.mrf.mxu0
        %v561 = vadd.f32 0.0, %v560
        %v562 = vpop.f32.mrf.mxu0
        %v563 = vadd.f32 0.0, %v562
        %564 = vdwg.mxu0
        %v565 = vadd.f32 %v390, %v486
        %v566 = vadd.f32 %v391, %v488
        %v567 = vadd.f32 %v392, %v491
        %v568 = vadd.f32 %v393, %v493
        %v569 = vadd.f32 %v394, %v496
        %v570 = vadd.f32 %v395, %v498
        %v571 = vadd.f32 %v396, %v501
        %v572 = vadd.f32 %v397, %v503
        %v573 = vadd.f32 %v398, %v506
        %v574 = vadd.f32 %v399, %v508
        %v575 = vadd.f32 %v400, %v511
        %v576 = vadd.f32 %v401, %v513
        %v577 = vadd.f32 %v402, %v516
        %v578 = vadd.f32 %v403, %v518
        %v579 = vadd.f32 %v404, %v521
        %v580 = vadd.f32 %v405, %v523
        %v581 = vadd.f32 %v406, %v526
        %v582 = vadd.f32 %v407, %v528
        %v583 = vadd.f32 %v408, %v531
        %v584 = vadd.f32 %v409, %v533
        %v585 = vadd.f32 %v410, %v536
        %v586 = vadd.f32 %v411, %v538
        %v587 = vadd.f32 %v412, %v541
        %v588 = vadd.f32 %v413, %v543
        %v589 = vadd.f32 %v414, %v546
        %v590 = vadd.f32 %v415, %v548
        %v591 = vadd.f32 %v416, %v551
        %v592 = vadd.f32 %v417, %v553
        %v593 = vadd.f32 %v418, %v556
        %v594 = vadd.f32 %v419, %v558
        %v595 = vadd.f32 %v420, %v561
        %v596 = vadd.f32 %v421, %v563
        %597 = vst.msk [vmem:[#allocation2] sm:$0xff] %vm242, %v565
        %598 = vst.msk [vmem:[#allocation2 + $0x8] sm:$0xff] %vm242, %v566
        %599 = vst.msk [vmem:[#allocation2 + $0x10] sm:$0xff] %vm242, %v567
        %600 = vst.msk [vmem:[#allocation2 + $0x18] sm:$0xff] %vm242, %v568
        %601 = vst.msk [vmem:[#allocation2 + $0x20] sm:$0xff] %vm242, %v569
        %602 = vst.msk [vmem:[#allocation2 + $0x28] sm:$0xff] %vm242, %v570
        %603 = vst.msk [vmem:[#allocation2 + $0x30] sm:$0xff] %vm242, %v571
        %604 = vst.msk [vmem:[#allocation2 + $0x38] sm:$0xff] %vm242, %v572
        %605 = vst.msk [vmem:[#allocation2 + $0x40] sm:$0xff] %vm242, %v573
        %606 = vst.msk [vmem:[#allocation2 + $0x48] sm:$0xff] %vm242, %v574
        %607 = vst.msk [vmem:[#allocation2 + $0x50] sm:$0xff] %vm242, %v575
        %608 = vst.msk [vmem:[#allocation2 + $0x58] sm:$0xff] %vm242, %v576
        %609 = vst.msk [vmem:[#allocation2 + $0x60] sm:$0xff] %vm242, %v577
        %610 = vst.msk [vmem:[#allocation2 + $0x68] sm:$0xff] %vm242, %v578
        %611 = vst.msk [vmem:[#allocation2 + $0x70] sm:$0xff] %vm242, %v579
        %612 = vst.msk [vmem:[#allocation2 + $0x78] sm:$0xff] %vm242, %v580
        %613 = vst.msk [vmem:[#allocation2 + $0x80] sm:$0xff] %vm242, %v581
        %614 = vst.msk [vmem:[#allocation2 + $0x88] sm:$0xff] %vm242, %v582
        %615 = vst.msk [vmem:[#allocation2 + $0x90] sm:$0xff] %vm242, %v583
        %616 = vst.msk [vmem:[#allocation2 + $0x98] sm:$0xff] %vm242, %v584
        %617 = vst.msk [vmem:[#allocation2 + $0xa0] sm:$0xff] %vm242, %v585
        %618 = vst.msk [vmem:[#allocation2 + $0xa8] sm:$0xff] %vm242, %v586
        %619 = vst.msk [vmem:[#allocation2 + $0xb0] sm:$0xff] %vm242, %v587
        %620 = vst.msk [vmem:[#allocation2 + $0xb8] sm:$0xff] %vm242, %v588
        %621 = vst.msk [vmem:[#allocation2 + $0xc0] sm:$0xff] %vm242, %v589
        %622 = vst.msk [vmem:[#allocation2 + $0xc8] sm:$0xff] %vm242, %v590
        %623 = vst.msk [vmem:[#allocation2 + $0xd0] sm:$0xff] %vm242, %v591
        %624 = vst.msk [vmem:[#allocation2 + $0xd8] sm:$0xff] %vm242, %v592
        %625 = vst.msk [vmem:[#allocation2 + $0xe0] sm:$0xff] %vm242, %v593
        %626 = vst.msk [vmem:[#allocation2 + $0xe8] sm:$0xff] %vm242, %v594
        %627 = vst.msk [vmem:[#allocation2 + $0xf0] sm:$0xff] %vm242, %v595
        %628 = vst.msk [vmem:[#allocation2 + $0xf8] sm:$0xff] %vm242, %v596
        %vm677 = vcmask 1046528
        %v678 = vrot.slane %v326, 1
        %v679 = vrot.slane %v327, 1
        %v680 = vsel %vm677, %v678, %v679
        %v681 = vrot.slane %v328, 1
        %v682 = vsel %vm677, %v679, %v681
        %v683 = vrot.slane %v329, 1
        %v684 = vrot.slane %v330, 1
        %v685 = vsel %vm677, %v683, %v684
        %v686 = vrot.slane %v331, 1
        %v687 = vsel %vm677, %v684, %v686
        %v688 = vrot.slane %v332, 1
        %v689 = vrot.slane %v333, 1
        %v690 = vsel %vm677, %v688, %v689
        %v691 = vrot.slane %v334, 1
        %v692 = vsel %vm677, %v689, %v691
        %v693 = vrot.slane %v335, 1
        %v694 = vrot.slane %v336, 1
        %v695 = vsel %vm677, %v693, %v694
        %v696 = vrot.slane %v337, 1
        %v697 = vsel %vm677, %v694, %v696
        %v698 = vrot.slane %v338, 1
        %v699 = vrot.slane %v339, 1
        %v700 = vsel %vm677, %v698, %v699
        %v701 = vrot.slane %v340, 1
        %v702 = vsel %vm677, %v699, %v701
        %v703 = vrot.slane %v341, 1
        %v704 = vrot.slane %v342, 1
        %v705 = vsel %vm677, %v703, %v704
        %v706 = vrot.slane %v343, 1
        %v707 = vsel %vm677, %v704, %v706
        %v708 = vrot.slane %v344, 1
        %v709 = vrot.slane %v345, 1
        %v710 = vsel %vm677, %v708, %v709
        %v711 = vrot.slane %v346, 1
        %v712 = vsel %vm677, %v709, %v711
        %v713 = vrot.slane %v347, 1
        %v714 = vrot.slane %v348, 1
        %v715 = vsel %vm677, %v713, %v714
        %v716 = vrot.slane %v349, 1
        %v717 = vsel %vm677, %v714, %v716
        %v718 = vrot.slane %v350, 1
        %v719 = vrot.slane %v351, 1
        %v720 = vsel %vm677, %v718, %v719
        %v721 = vrot.slane %v352, 1
        %v722 = vsel %vm677, %v719, %v721
        %v723 = vrot.slane %v353, 1
        %v724 = vrot.slane %v354, 1
        %v725 = vsel %vm677, %v723, %v724
        %v726 = vrot.slane %v355, 1
        %v727 = vsel %vm677, %v724, %v726
        %v728 = vrot.slane %v356, 1
        %v729 = vrot.slane %v357, 1
        %v730 = vsel %vm677, %v728, %v729
        %v731 = vrot.slane %v358, 1
        %v732 = vsel %vm677, %v729, %v731
        %v733 = vrot.slane %v359, 1
        %v734 = vrot.slane %v360, 1
        %v735 = vsel %vm677, %v733, %v734
        %v736 = vrot.slane %v361, 1
        %v737 = vsel %vm677, %v734, %v736
        %v738 = vrot.slane %v362, 1
        %v739 = vrot.slane %v363, 1
        %v740 = vsel %vm677, %v738, %v739
        %v741 = vrot.slane %v364, 1
        %v742 = vsel %vm677, %v739, %v741
        %v743 = vrot.slane %v365, 1
        %v744 = vrot.slane %v366, 1
        %v745 = vsel %vm677, %v743, %v744
        %v746 = vrot.slane %v367, 1
        %v747 = vsel %vm677, %v744, %v746
        %v748 = vrot.slane %v368, 1
        %v749 = vrot.slane %v369, 1
        %v750 = vsel %vm677, %v748, %v749
        %v751 = vrot.slane %v370, 1
        %v752 = vsel %vm677, %v749, %v751
        %v753 = vrot.slane %v371, 1
        %v754 = vrot.slane %v372, 1
        %v755 = vsel %vm677, %v753, %v754
        %v756 = vrot.slane %v373, 1
        %v757 = vsel %vm677, %v754, %v756
        %v790 = vpack.c.bf16 %v682, %v680
        %v791 = vpack.c.bf16 %v687, %v685
        %v792 = vpack.c.bf16 %v692, %v690
        %v793 = vpack.c.bf16 %v697, %v695
        %v794 = vpack.c.bf16 %v702, %v700
        %v795 = vpack.c.bf16 %v707, %v705
        %v796 = vpack.c.bf16 %v712, %v710
        %v797 = vpack.c.bf16 %v717, %v715
        %v798 = vpack.c.bf16 %v722, %v720
        %v799 = vpack.c.bf16 %v727, %v725
        %v800 = vpack.c.bf16 %v732, %v730
        %v801 = vpack.c.bf16 %v737, %v735
        %v802 = vpack.c.bf16 %v742, %v740
        %v803 = vpack.c.bf16 %v747, %v745
        %v804 = vpack.c.bf16 %v752, %v750
        %v805 = vpack.c.bf16 %v757, %v755
        %v806 = vld [vmem:[#allocation2] sm:$0xff]
        %v807 = vld [vmem:[#allocation2 + $0x8] sm:$0xff]
        %v808 = vld [vmem:[#allocation2 + $0x10] sm:$0xff]
        %v809 = vld [vmem:[#allocation2 + $0x18] sm:$0xff]
        %v810 = vld [vmem:[#allocation2 + $0x20] sm:$0xff]
        %v811 = vld [vmem:[#allocation2 + $0x28] sm:$0xff]
        %v812 = vld [vmem:[#allocation2 + $0x30] sm:$0xff]
        %v813 = vld [vmem:[#allocation2 + $0x38] sm:$0xff]
        %v814 = vld [vmem:[#allocation2 + $0x40] sm:$0xff]
        %v815 = vld [vmem:[#allocation2 + $0x48] sm:$0xff]
        %v816 = vld [vmem:[#allocation2 + $0x50] sm:$0xff]
        %v817 = vld [vmem:[#allocation2 + $0x58] sm:$0xff]
        %v818 = vld [vmem:[#allocation2 + $0x60] sm:$0xff]
        %v819 = vld [vmem:[#allocation2 + $0x68] sm:$0xff]
        %v820 = vld [vmem:[#allocation2 + $0x70] sm:$0xff]
        %v821 = vld [vmem:[#allocation2 + $0x78] sm:$0xff]
        %v822 = vld [vmem:[#allocation2 + $0x80] sm:$0xff]
        %v823 = vld [vmem:[#allocation2 + $0x88] sm:$0xff]
        %v824 = vld [vmem:[#allocation2 + $0x90] sm:$0xff]
        %v825 = vld [vmem:[#allocation2 + $0x98] sm:$0xff]
        %v826 = vld [vmem:[#allocation2 + $0xa0] sm:$0xff]
        %v827 = vld [vmem:[#allocation2 + $0xa8] sm:$0xff]
        %v828 = vld [vmem:[#allocation2 + $0xb0] sm:$0xff]
        %v829 = vld [vmem:[#allocation2 + $0xb8] sm:$0xff]
        %v830 = vld [vmem:[#allocation2 + $0xc0] sm:$0xff]
        %v831 = vld [vmem:[#allocation2 + $0xc8] sm:$0xff]
        %v832 = vld [vmem:[#allocation2 + $0xd0] sm:$0xff]
        %v833 = vld [vmem:[#allocation2 + $0xd8] sm:$0xff]
        %v834 = vld [vmem:[#allocation2 + $0xe0] sm:$0xff]
        %v835 = vld [vmem:[#allocation2 + $0xe8] sm:$0xff]
        %v836 = vld [vmem:[#allocation2 + $0xf0] sm:$0xff]
        %v837 = vld [vmem:[#allocation2 + $0xf8] sm:$0xff]
        %s838 = scalar_lea.vmem %s1, 2
        %v839 = vld [vmem:[%s838] sm:$0x3]
        %v841 = vsel %vm423, %v790, 0
        %v844 = vsel %vm423, %v791, 0
        %v847 = vsel %vm423, %v792, 0
        %v850 = vsel %vm423, %v793, 0
        %v853 = vsel %vm423, %v794, 0
        %v856 = vsel %vm423, %v795, 0
        %v859 = vsel %vm423, %v796, 0
        %v862 = vsel %vm423, %v797, 0
        %v865 = vsel %vm423, %v798, 0
        %v868 = vsel %vm423, %v799, 0
        %v871 = vsel %vm423, %v800, 0
        %v874 = vsel %vm423, %v801, 0
        %v877 = vsel %vm423, %v802, 0
        %v880 = vsel %vm423, %v803, 0
        %v883 = vsel %vm423, %v804, 0
        %v886 = vsel %vm423, %v805, 0
        %v889 = vsel %vm472, %v839, 0
        %891 = vmatpush.bf16.msra.mxu0 0
        %892 = vmatpush.bf16.msra.mxu0 0
        %893 = vmatpush.bf16.msra.mxu0 0
        %894 = vmatpush.bf16.msra.mxu0 0
        %895 = vmatpush.bf16.msra.mxu0 0
        %896 = vmatpush.bf16.msra.mxu0 0
        %897 = vmatpush.bf16.msra.mxu0 0
        %898 = vmatpush.bf16.msra.mxu0 %v889
        %899 = vmatmul.bf16.gmra.mxu0 %v841
        %v900 = vpop.f32.mrf.mxu0
        %v901 = vadd.f32 0.0, %v900
        %v902 = vpop.f32.mrf.mxu0
        %v903 = vadd.f32 0.0, %v902
        %904 = vmatmul.bf16.gmra.mxu0 %v844
        %v905 = vpop.f32.mrf.mxu0
        %v906 = vadd.f32 0.0, %v905
        %v907 = vpop.f32.mrf.mxu0
        %v908 = vadd.f32 0.0, %v907
        %909 = vmatmul.bf16.gmra.mxu0 %v847
        %v910 = vpop.f32.mrf.mxu0
        %v911 = vadd.f32 0.0, %v910
        %v912 = vpop.f32.mrf.mxu0
        %v913 = vadd.f32 0.0, %v912
        %914 = vmatmul.bf16.gmra.mxu0 %v850
        %v915 = vpop.f32.mrf.mxu0
        %v916 = vadd.f32 0.0, %v915
        %v917 = vpop.f32.mrf.mxu0
        %v918 = vadd.f32 0.0, %v917
        %919 = vmatmul.bf16.gmra.mxu0 %v853
        %v920 = vpop.f32.mrf.mxu0
        %v921 = vadd.f32 0.0, %v920
        %v922 = vpop.f32.mrf.mxu0
        %v923 = vadd.f32 0.0, %v922
        %924 = vmatmul.bf16.gmra.mxu0 %v856
        %v925 = vpop.f32.mrf.mxu0
        %v926 = vadd.f32 0.0, %v925
        %v927 = vpop.f32.mrf.mxu0
        %v928 = vadd.f32 0.0, %v927
        %929 = vmatmul.bf16.gmra.mxu0 %v859
        %v930 = vpop.f32.mrf.mxu0
        %v931 = vadd.f32 0.0, %v930
        %v932 = vpop.f32.mrf.mxu0
        %v933 = vadd.f32 0.0, %v932
        %934 = vmatmul.bf16.gmra.mxu0 %v862
        %v935 = vpop.f32.mrf.mxu0
        %v936 = vadd.f32 0.0, %v935
        %v937 = vpop.f32.mrf.mxu0
        %v938 = vadd.f32 0.0, %v937
        %939 = vmatmul.bf16.gmra.mxu0 %v865
        %v940 = vpop.f32.mrf.mxu0
        %v941 = vadd.f32 0.0, %v940
        %v942 = vpop.f32.mrf.mxu0
        %v943 = vadd.f32 0.0, %v942
        %944 = vmatmul.bf16.gmra.mxu0 %v868
        %v945 = vpop.f32.mrf.mxu0
        %v946 = vadd.f32 0.0, %v945
        %v947 = vpop.f32.mrf.mxu0
        %v948 = vadd.f32 0.0, %v947
        %949 = vmatmul.bf16.gmra.mxu0 %v871
        %v950 = vpop.f32.mrf.mxu0
        %v951 = vadd.f32 0.0, %v950
        %v952 = vpop.f32.mrf.mxu0
        %v953 = vadd.f32 0.0, %v952
        %954 = vmatmul.bf16.gmra.mxu0 %v874
        %v955 = vpop.f32.mrf.mxu0
        %v956 = vadd.f32 0.0, %v955
        %v957 = vpop.f32.mrf.mxu0
        %v958 = vadd.f32 0.0, %v957
        %959 = vmatmul.bf16.gmra.mxu0 %v877
        %v960 = vpop.f32.mrf.mxu0
        %v961 = vadd.f32 0.0, %v960
        %v962 = vpop.f32.mrf.mxu0
        %v963 = vadd.f32 0.0, %v962
        %964 = vmatmul.bf16.gmra.mxu0 %v880
        %v965 = vpop.f32.mrf.mxu0
        %v966 = vadd.f32 0.0, %v965
        %v967 = vpop.f32.mrf.mxu0
        %v968 = vadd.f32 0.0, %v967
        %969 = vmatmul.bf16.gmra.mxu0 %v883
        %v970 = vpop.f32.mrf.mxu0
        %v971 = vadd.f32 0.0, %v970
        %v972 = vpop.f32.mrf.mxu0
        %v973 = vadd.f32 0.0, %v972
        %974 = vmatmul.bf16.gmra.mxu0 %v886
        %v975 = vpop.f32.mrf.mxu0
        %v976 = vadd.f32 0.0, %v975
        %v977 = vpop.f32.mrf.mxu0
        %v978 = vadd.f32 0.0, %v977
        %979 = vdwg.mxu0
        %v980 = vadd.f32 %v806, %v901
        %v981 = vadd.f32 %v807, %v903
        %v982 = vadd.f32 %v808, %v906
        %v983 = vadd.f32 %v809, %v908
        %v984 = vadd.f32 %v810, %v911
        %v985 = vadd.f32 %v811, %v913
        %v986 = vadd.f32 %v812, %v916
        %v987 = vadd.f32 %v813, %v918
        %v988 = vadd.f32 %v814, %v921
        %v989 = vadd.f32 %v815, %v923
        %v990 = vadd.f32 %v816, %v926
        %v991 = vadd.f32 %v817, %v928
        %v992 = vadd.f32 %v818, %v931
        %v993 = vadd.f32 %v819, %v933
        %v994 = vadd.f32 %v820, %v936
        %v995 = vadd.f32 %v821, %v938
        %v996 = vadd.f32 %v822, %v941
        %v997 = vadd.f32 %v823, %v943
        %v998 = vadd.f32 %v824, %v946
        %v999 = vadd.f32 %v825, %v948
        %v1000 = vadd.f32 %v826, %v951
        %v1001 = vadd.f32 %v827, %v953
        %v1002 = vadd.f32 %v828, %v956
        %v1003 = vadd.f32 %v829, %v958
        %v1004 = vadd.f32 %v830, %v961
        %v1005 = vadd.f32 %v831, %v963
        %v1006 = vadd.f32 %v832, %v966
        %v1007 = vadd.f32 %v833, %v968
        %v1008 = vadd.f32 %v834, %v971
        %v1009 = vadd.f32 %v835, %v973
        %v1010 = vadd.f32 %v836, %v976
        %v1011 = vadd.f32 %v837, %v978
        %1012 = vst.msk [vmem:[#allocation2] sm:$0xff] %vm242, %v980
        %1013 = vst.msk [vmem:[#allocation2 + $0x8] sm:$0xff] %vm242, %v981
        %1014 = vst.msk [vmem:[#allocation2 + $0x10] sm:$0xff] %vm242, %v982
        %1015 = vst.msk [vmem:[#allocation2 + $0x18] sm:$0xff] %vm242, %v983
        %1016 = vst.msk [vmem:[#allocation2 + $0x20] sm:$0xff] %vm242, %v984
        %1017 = vst.msk [vmem:[#allocation2 + $0x28] sm:$0xff] %vm242, %v985
        %1018 = vst.msk [vmem:[#allocation2 + $0x30] sm:$0xff] %vm242, %v986
        %1019 = vst.msk [vmem:[#allocation2 + $0x38] sm:$0xff] %vm242, %v987
        %1020 = vst.msk [vmem:[#allocation2 + $0x40] sm:$0xff] %vm242, %v988
        %1021 = vst.msk [vmem:[#allocation2 + $0x48] sm:$0xff] %vm242, %v989
        %1022 = vst.msk [vmem:[#allocation2 + $0x50] sm:$0xff] %vm242, %v990
        %1023 = vst.msk [vmem:[#allocation2 + $0x58] sm:$0xff] %vm242, %v991
        %1024 = vst.msk [vmem:[#allocation2 + $0x60] sm:$0xff] %vm242, %v992
        %1025 = vst.msk [vmem:[#allocation2 + $0x68] sm:$0xff] %vm242, %v993
        %1026 = vst.msk [vmem:[#allocation2 + $0x70] sm:$0xff] %vm242, %v994
        %1027 = vst.msk [vmem:[#allocation2 + $0x78] sm:$0xff] %vm242, %v995
        %1028 = vst.msk [vmem:[#allocation2 + $0x80] sm:$0xff] %vm242, %v996
        %1029 = vst.msk [vmem:[#allocation2 + $0x88] sm:$0xff] %vm242, %v997
        %1030 = vst.msk [vmem:[#allocation2 + $0x90] sm:$0xff] %vm242, %v998
        %1031 = vst.msk [vmem:[#allocation2 + $0x98] sm:$0xff] %vm242, %v999
        %1032 = vst.msk [vmem:[#allocation2 + $0xa0] sm:$0xff] %vm242, %v1000
        %1033 = vst.msk [vmem:[#allocation2 + $0xa8] sm:$0xff] %vm242, %v1001
        %1034 = vst.msk [vmem:[#allocation2 + $0xb0] sm:$0xff] %vm242, %v1002
        %1035 = vst.msk [vmem:[#allocation2 + $0xb8] sm:$0xff] %vm242, %v1003
        %1036 = vst.msk [vmem:[#allocation2 + $0xc0] sm:$0xff] %vm242, %v1004
        %1037 = vst.msk [vmem:[#allocation2 + $0xc8] sm:$0xff] %vm242, %v1005
        %1038 = vst.msk [vmem:[#allocation2 + $0xd0] sm:$0xff] %vm242, %v1006
        %1039 = vst.msk [vmem:[#allocation2 + $0xd8] sm:$0xff] %vm242, %v1007
        %1040 = vst.msk [vmem:[#allocation2 + $0xe0] sm:$0xff] %vm242, %v1008
        %1041 = vst.msk [vmem:[#allocation2 + $0xe8] sm:$0xff] %vm242, %v1009
        %1042 = vst.msk [vmem:[#allocation2 + $0xf0] sm:$0xff] %vm242, %v1010
        %1043 = vst.msk [vmem:[#allocation2 + $0xf8] sm:$0xff] %vm242, %v1011
        %vm1044 = vcmask 1045504
        %v1045 = vrot.slane %v326, 2
        %v1046 = vrot.slane %v327, 2
        %v1047 = vsel %vm1044, %v1045, %v1046
        %v1048 = vrot.slane %v328, 2
        %v1049 = vsel %vm1044, %v1046, %v1048
        %v1050 = vrot.slane %v329, 2
        %v1051 = vrot.slane %v330, 2
        %v1052 = vsel %vm1044, %v1050, %v1051
        %v1053 = vrot.slane %v331, 2
        %v1054 = vsel %vm1044, %v1051, %v1053
        %v1055 = vrot.slane %v332, 2
        %v1056 = vrot.slane %v333, 2
        %v1057 = vsel %vm1044, %v1055, %v1056
        %v1058 = vrot.slane %v334, 2
        %v1059 = vsel %vm1044, %v1056, %v1058
        %v1060 = vrot.slane %v335, 2
        %v1061 = vrot.slane %v336, 2
        %v1062 = vsel %vm1044, %v1060, %v1061
        %v1063 = vrot.slane %v337, 2
        %v1064 = vsel %vm1044, %v1061, %v1063
        %v1065 = vrot.slane %v338, 2
        %v1066 = vrot.slane %v339, 2
        %v1067 = vsel %vm1044, %v1065, %v1066
        %v1068 = vrot.slane %v340, 2
        %v1069 = vsel %vm1044, %v1066, %v1068
        %v1070 = vrot.slane %v341, 2
        %v1071 = vrot.slane %v342, 2
        %v1072 = vsel %vm1044, %v1070, %v1071
        %v1073 = vrot.slane %v343, 2
        %v1074 = vsel %vm1044, %v1071, %v1073
        %v1075 = vrot.slane %v344, 2
        %v1076 = vrot.slane %v345, 2
        %v1077 = vsel %vm1044, %v1075, %v1076
        %v1078 = vrot.slane %v346, 2
        %v1079 = vsel %vm1044, %v1076, %v1078
        %v1080 = vrot.slane %v347, 2
        %v1081 = vrot.slane %v348, 2
        %v1082 = vsel %vm1044, %v1080, %v1081
        %v1083 = vrot.slane %v349, 2
        %v1084 = vsel %vm1044, %v1081, %v1083
        %v1085 = vrot.slane %v350, 2
        %v1086 = vrot.slane %v351, 2
        %v1087 = vsel %vm1044, %v1085, %v1086
        %v1088 = vrot.slane %v352, 2
        %v1089 = vsel %vm1044, %v1086, %v1088
        %v1090 = vrot.slane %v353, 2
        %v1091 = vrot.slane %v354, 2
        %v1092 = vsel %vm1044, %v1090, %v1091
        %v1093 = vrot.slane %v355, 2
        %v1094 = vsel %vm1044, %v1091, %v1093
        %v1095 = vrot.slane %v356, 2
        %v1096 = vrot.slane %v357, 2
        %v1097 = vsel %vm1044, %v1095, %v1096
        %v1098 = vrot.slane %v358, 2
        %v1099 = vsel %vm1044, %v1096, %v1098
        %v1100 = vrot.slane %v359, 2
        %v1101 = vrot.slane %v360, 2
        %v1102 = vsel %vm1044, %v1100, %v1101
        %v1103 = vrot.slane %v361, 2
        %v1104 = vsel %vm1044, %v1101, %v1103
        %v1105 = vrot.slane %v362, 2
        %v1106 = vrot.slane %v363, 2
        %v1107 = vsel %vm1044, %v1105, %v1106
        %v1108 = vrot.slane %v364, 2
        %v1109 = vsel %vm1044, %v1106, %v1108
        %v1110 = vrot.slane %v365, 2
        %v1111 = vrot.slane %v366, 2
        %v1112 = vsel %vm1044, %v1110, %v1111
        %v1113 = vrot.slane %v367, 2
        %v1114 = vsel %vm1044, %v1111, %v1113
        %v1115 = vrot.slane %v368, 2
        %v1116 = vrot.slane %v369, 2
        %v1117 = vsel %vm1044, %v1115, %v1116
        %v1118 = vrot.slane %v370, 2
        %v1119 = vsel %vm1044, %v1116, %v1118
        %v1120 = vrot.slane %v371, 2
        %v1121 = vrot.slane %v372, 2
        %v1122 = vsel %vm1044, %v1120, %v1121
        %v1123 = vrot.slane %v373, 2
        %v1124 = vsel %vm1044, %v1121, %v1123
        %v1157 = vpack.c.bf16 %v1049, %v1047
        %v1158 = vpack.c.bf16 %v1054, %v1052
        %v1159 = vpack.c.bf16 %v1059, %v1057
        %v1160 = vpack.c.bf16 %v1064, %v1062
        %v1161 = vpack.c.bf16 %v1069, %v1067
        %v1162 = vpack.c.bf16 %v1074, %v1072
        %v1163 = vpack.c.bf16 %v1079, %v1077
        %v1164 = vpack.c.bf16 %v1084, %v1082
        %v1165 = vpack.c.bf16 %v1089, %v1087
        %v1166 = vpack.c.bf16 %v1094, %v1092
        %v1167 = vpack.c.bf16 %v1099, %v1097
        %v1168 = vpack.c.bf16 %v1104, %v1102
        %v1169 = vpack.c.bf16 %v1109, %v1107
        %v1170 = vpack.c.bf16 %v1114, %v1112
        %v1171 = vpack.c.bf16 %v1119, %v1117
        %v1172 = vpack.c.bf16 %v1124, %v1122
        %v1173 = vld [vmem:[#allocation2] sm:$0xff]
        %v1174 = vld [vmem:[#allocation2 + $0x8] sm:$0xff]
        %v1175 = vld [vmem:[#allocation2 + $0x10] sm:$0xff]
        %v1176 = vld [vmem:[#allocation2 + $0x18] sm:$0xff]
        %v1177 = vld [vmem:[#allocation2 + $0x20] sm:$0xff]
        %v1178 = vld [vmem:[#allocation2 + $0x28] sm:$0xff]
        %v1179 = vld [vmem:[#allocation2 + $0x30] sm:$0xff]
        %v1180 = vld [vmem:[#allocation2 + $0x38] sm:$0xff]
        %v1181 = vld [vmem:[#allocation2 + $0x40] sm:$0xff]
        %v1182 = vld [vmem:[#allocation2 + $0x48] sm:$0xff]
        %v1183 = vld [vmem:[#allocation2 + $0x50] sm:$0xff]
        %v1184 = vld [vmem:[#allocation2 + $0x58] sm:$0xff]
        %v1185 = vld [vmem:[#allocation2 + $0x60] sm:$0xff]
        %v1186 = vld [vmem:[#allocation2 + $0x68] sm:$0xff]
        %v1187 = vld [vmem:[#allocation2 + $0x70] sm:$0xff]
        %v1188 = vld [vmem:[#allocation2 + $0x78] sm:$0xff]
        %v1189 = vld [vmem:[#allocation2 + $0x80] sm:$0xff]
        %v1190 = vld [vmem:[#allocation2 + $0x88] sm:$0xff]
        %v1191 = vld [vmem:[#allocation2 + $0x90] sm:$0xff]
        %v1192 = vld [vmem:[#allocation2 + $0x98] sm:$0xff]
        %v1193 = vld [vmem:[#allocation2 + $0xa0] sm:$0xff]
        %v1194 = vld [vmem:[#allocation2 + $0xa8] sm:$0xff]
        %v1195 = vld [vmem:[#allocation2 + $0xb0] sm:$0xff]
        %v1196 = vld [vmem:[#allocation2 + $0xb8] sm:$0xff]
        %v1197 = vld [vmem:[#allocation2 + $0xc0] sm:$0xff]
        %v1198 = vld [vmem:[#allocation2 + $0xc8] sm:$0xff]
        %v1199 = vld [vmem:[#allocation2 + $0xd0] sm:$0xff]
        %v1200 = vld [vmem:[#allocation2 + $0xd8] sm:$0xff]
        %v1201 = vld [vmem:[#allocation2 + $0xe0] sm:$0xff]
        %v1202 = vld [vmem:[#allocation2 + $0xe8] sm:$0xff]
        %v1203 = vld [vmem:[#allocation2 + $0xf0] sm:$0xff]
        %v1204 = vld [vmem:[#allocation2 + $0xf8] sm:$0xff]
        %s1205 = scalar_lea.vmem %s1, 4
        %v1206 = vld [vmem:[%s1205] sm:$0x3]
        %v1208 = vsel %vm423, %v1157, 0
        %v1211 = vsel %vm423, %v1158, 0
        %v1214 = vsel %vm423, %v1159, 0
        %v1217 = vsel %vm423, %v1160, 0
        %v1220 = vsel %vm423, %v1161, 0
        %v1223 = vsel %vm423, %v1162, 0
        %v1226 = vsel %vm423, %v1163, 0
        %v1229 = vsel %vm423, %v1164, 0
        %v1232 = vsel %vm423, %v1165, 0
        %v1235 = vsel %vm423, %v1166, 0
        %v1238 = vsel %vm423, %v1167, 0
        %v1241 = vsel %vm423, %v1168, 0
        %v1244 = vsel %vm423, %v1169, 0
        %v1247 = vsel %vm423, %v1170, 0
        %v1250 = vsel %vm423, %v1171, 0
        %v1253 = vsel %vm423, %v1172, 0
        %v1256 = vsel %vm472, %v1206, 0
        %1258 = vmatpush.bf16.msra.mxu0 0
        %1259 = vmatpush.bf16.msra.mxu0 0
        %1260 = vmatpush.bf16.msra.mxu0 0
        %1261 = vmatpush.bf16.msra.mxu0 0
        %1262 = vmatpush.bf16.msra.mxu0 0
        %1263 = vmatpush.bf16.msra.mxu0 0
        %1264 = vmatpush.bf16.msra.mxu0 0
        %1265 = vmatpush.bf16.msra.mxu0 %v1256
        %1266 = vmatmul.bf16.gmra.mxu0 %v1208
        %v1267 = vpop.f32.mrf.mxu0
        %v1268 = vadd.f32 0.0, %v1267
        %v1269 = vpop.f32.mrf.mxu0
        %v1270 = vadd.f32 0.0, %v1269
        %1271 = vmatmul.bf16.gmra.mxu0 %v1211
        %v1272 = vpop.f32.mrf.mxu0
        %v1273 = vadd.f32 0.0, %v1272
        %v1274 = vpop.f32.mrf.mxu0
        %v1275 = vadd.f32 0.0, %v1274
        %1276 = vmatmul.bf16.gmra.mxu0 %v1214
        %v1277 = vpop.f32.mrf.mxu0
        %v1278 = vadd.f32 0.0, %v1277
        %v1279 = vpop.f32.mrf.mxu0
        %v1280 = vadd.f32 0.0, %v1279
        %1281 = vmatmul.bf16.gmra.mxu0 %v1217
        %v1282 = vpop.f32.mrf.mxu0
        %v1283 = vadd.f32 0.0, %v1282
        %v1284 = vpop.f32.mrf.mxu0
        %v1285 = vadd.f32 0.0, %v1284
        %1286 = vmatmul.bf16.gmra.mxu0 %v1220
        %v1287 = vpop.f32.mrf.mxu0
        %v1288 = vadd.f32 0.0, %v1287
        %v1289 = vpop.f32.mrf.mxu0
        %v1290 = vadd.f32 0.0, %v1289
        %1291 = vmatmul.bf16.gmra.mxu0 %v1223
        %v1292 = vpop.f32.mrf.mxu0
        %v1293 = vadd.f32 0.0, %v1292
        %v1294 = vpop.f32.mrf.mxu0
        %v1295 = vadd.f32 0.0, %v1294
        %1296 = vmatmul.bf16.gmra.mxu0 %v1226
        %v1297 = vpop.f32.mrf.mxu0
        %v1298 = vadd.f32 0.0, %v1297
        %v1299 = vpop.f32.mrf.mxu0
        %v1300 = vadd.f32 0.0, %v1299
        %1301 = vmatmul.bf16.gmra.mxu0 %v1229
        %v1302 = vpop.f32.mrf.mxu0
        %v1303 = vadd.f32 0.0, %v1302
        %v1304 = vpop.f32.mrf.mxu0
        %v1305 = vadd.f32 0.0, %v1304
        %1306 = vmatmul.bf16.gmra.mxu0 %v1232
        %v1307 = vpop.f32.mrf.mxu0
        %v1308 = vadd.f32 0.0, %v1307
        %v1309 = vpop.f32.mrf.mxu0
        %v1310 = vadd.f32 0.0, %v1309
        %1311 = vmatmul.bf16.gmra.mxu0 %v1235
        %v1312 = vpop.f32.mrf.mxu0
        %v1313 = vadd.f32 0.0, %v1312
        %v1314 = vpop.f32.mrf.mxu0
        %v1315 = vadd.f32 0.0, %v1314
        %1316 = vmatmul.bf16.gmra.mxu0 %v1238
        %v1317 = vpop.f32.mrf.mxu0
        %v1318 = vadd.f32 0.0, %v1317
        %v1319 = vpop.f32.mrf.mxu0
        %v1320 = vadd.f32 0.0, %v1319
        %1321 = vmatmul.bf16.gmra.mxu0 %v1241
        %v1322 = vpop.f32.mrf.mxu0
        %v1323 = vadd.f32 0.0, %v1322
        %v1324 = vpop.f32.mrf.mxu0
        %v1325 = vadd.f32 0.0, %v1324
        %1326 = vmatmul.bf16.gmra.mxu0 %v1244
        %v1327 = vpop.f32.mrf.mxu0
        %v1328 = vadd.f32 0.0, %v1327
        %v1329 = vpop.f32.mrf.mxu0
        %v1330 = vadd.f32 0.0, %v1329
        %1331 = vmatmul.bf16.gmra.mxu0 %v1247
        %v1332 = vpop.f32.mrf.mxu0
        %v1333 = vadd.f32 0.0, %v1332
        %v1334 = vpop.f32.mrf.mxu0
        %v1335 = vadd.f32 0.0, %v1334
        %1336 = vmatmul.bf16.gmra.mxu0 %v1250
        %v1337 = vpop.f32.mrf.mxu0
        %v1338 = vadd.f32 0.0, %v1337
        %v1339 = vpop.f32.mrf.mxu0
        %v1340 = vadd.f32 0.0, %v1339
        %1341 = vmatmul.bf16.gmra.mxu0 %v1253
        %v1342 = vpop.f32.mrf.mxu0
        %v1343 = vadd.f32 0.0, %v1342
        %v1344 = vpop.f32.mrf.mxu0
        %v1345 = vadd.f32 0.0, %v1344
        %1346 = vdwg.mxu0
        %v1347 = vadd.f32 %v1173, %v1268
        %v1348 = vadd.f32 %v1174, %v1270
        %v1349 = vadd.f32 %v1175, %v1273
        %v1350 = vadd.f32 %v1176, %v1275
        %v1351 = vadd.f32 %v1177, %v1278
        %v1352 = vadd.f32 %v1178, %v1280
        %v1353 = vadd.f32 %v1179, %v1283
        %v1354 = vadd.f32 %v1180, %v1285
        %v1355 = vadd.f32 %v1181, %v1288
        %v1356 = vadd.f32 %v1182, %v1290
        %v1357 = vadd.f32 %v1183, %v1293
        %v1358 = vadd.f32 %v1184, %v1295
        %v1359 = vadd.f32 %v1185, %v1298
        %v1360 = vadd.f32 %v1186, %v1300
        %v1361 = vadd.f32 %v1187, %v1303
        %v1362 = vadd.f32 %v1188, %v1305
        %v1363 = vadd.f32 %v1189, %v1308
        %v1364 = vadd.f32 %v1190, %v1310
        %v1365 = vadd.f32 %v1191, %v1313
        %v1366 = vadd.f32 %v1192, %v1315
        %v1367 = vadd.f32 %v1193, %v1318
        %v1368 = vadd.f32 %v1194, %v1320
        %v1369 = vadd.f32 %v1195, %v1323
        %v1370 = vadd.f32 %v1196, %v1325
        %v1371 = vadd.f32 %v1197, %v1328
        %v1372 = vadd.f32 %v1198, %v1330
        %v1373 = vadd.f32 %v1199, %v1333
        %v1374 = vadd.f32 %v1200, %v1335
        %v1375 = vadd.f32 %v1201, %v1338
        %v1376 = vadd.f32 %v1202, %v1340
        %v1377 = vadd.f32 %v1203, %v1343
        %v1378 = vadd.f32 %v1204, %v1345
        %1379 = vst.msk [vmem:[#allocation2] sm:$0xff] %vm242, %v1347
        %1380 = vst.msk [vmem:[#allocation2 + $0x8] sm:$0xff] %vm242, %v1348
        %1381 = vst.msk [vmem:[#allocation2 + $0x10] sm:$0xff] %vm242, %v1349
        %1382 = vst.msk [vmem:[#allocation2 + $0x18] sm:$0xff] %vm242, %v1350
        %1383 = vst.msk [vmem:[#allocation2 + $0x20] sm:$0xff] %vm242, %v1351
        %1384 = vst.msk [vmem:[#allocation2 + $0x28] sm:$0xff] %vm242, %v1352
        %1385 = vst.msk [vmem:[#allocation2 + $0x30] sm:$0xff] %vm242, %v1353
        %1386 = vst.msk [vmem:[#allocation2 + $0x38] sm:$0xff] %vm242, %v1354
        %1387 = vst.msk [vmem:[#allocation2 + $0x40] sm:$0xff] %vm242, %v1355
        %1388 = vst.msk [vmem:[#allocation2 + $0x48] sm:$0xff] %vm242, %v1356
        %1389 = vst.msk [vmem:[#allocation2 + $0x50] sm:$0xff] %vm242, %v1357
        %1390 = vst.msk [vmem:[#allocation2 + $0x58] sm:$0xff] %vm242, %v1358
        %1391 = vst.msk [vmem:[#allocation2 + $0x60] sm:$0xff] %vm242, %v1359
        %1392 = vst.msk [vmem:[#allocation2 + $0x68] sm:$0xff] %vm242, %v1360
        %1393 = vst.msk [vmem:[#allocation2 + $0x70] sm:$0xff] %vm242, %v1361
        %1394 = vst.msk [vmem:[#allocation2 + $0x78] sm:$0xff] %vm242, %v1362
        %1395 = vst.msk [vmem:[#allocation2 + $0x80] sm:$0xff] %vm242, %v1363
        %1396 = vst.msk [vmem:[#allocation2 + $0x88] sm:$0xff] %vm242, %v1364
        %1397 = vst.msk [vmem:[#allocation2 + $0x90] sm:$0xff] %vm242, %v1365
        %1398 = vst.msk [vmem:[#allocation2 + $0x98] sm:$0xff] %vm242, %v1366
        %1399 = vst.msk [vmem:[#allocation2 + $0xa0] sm:$0xff] %vm242, %v1367
        %1400 = vst.msk [vmem:[#allocation2 + $0xa8] sm:$0xff] %vm242, %v1368
        %1401 = vst.msk [vmem:[#allocation2 + $0xb0] sm:$0xff] %vm242, %v1369
        %1402 = vst.msk [vmem:[#allocation2 + $0xb8] sm:$0xff] %vm242, %v1370
        %1403 = vst.msk [vmem:[#allocation2 + $0xc0] sm:$0xff] %vm242, %v1371
        %1404 = vst.msk [vmem:[#allocation2 + $0xc8] sm:$0xff] %vm242, %v1372
        %1405 = vst.msk [vmem:[#allocation2 + $0xd0] sm:$0xff] %vm242, %v1373
        %1406 = vst.msk [vmem:[#allocation2 + $0xd8] sm:$0xff] %vm242, %v1374
        %1407 = vst.msk [vmem:[#allocation2 + $0xe0] sm:$0xff] %vm242, %v1375
        %1408 = vst.msk [vmem:[#allocation2 + $0xe8] sm:$0xff] %vm242, %v1376
        %1409 = vst.msk [vmem:[#allocation2 + $0xf0] sm:$0xff] %vm242, %v1377
        %1410 = vst.msk [vmem:[#allocation2 + $0xf8] sm:$0xff] %vm242, %v1378
        %s1411 = sadd.s32 %s241, 1
        %s1412 = smul.u32 %s1411, 3
        %s1413 = smul.addr %s1412, 4
        %s1414 = scalar_lea.vmem %s222, %s1413
        %v1415 = vld [vmem:[%s1414] sm:$0xf]
        %v1416 = vld [vmem:[%s1414 + $0x4] sm:$0xf]
        %v1417 = vld [vmem:[%s1414 + $0x8] sm:$0x1]
        %v1418 = vld [vmem:[%s1414 + $0xc] sm:$0xf]
        %v1419 = vld [vmem:[%s1414 + $0x10] sm:$0xf]
        %v1420 = vld [vmem:[%s1414 + $0x14] sm:$0x1]
        %v1421 = vld [vmem:[%s1414 + $0x18] sm:$0xf]
        %v1422 = vld [vmem:[%s1414 + $0x1c] sm:$0xf]
        %v1423 = vld [vmem:[%s1414 + $0x20] sm:$0x1]
        %v1424 = vld [vmem:[%s1414 + $0x24] sm:$0xf]
        %v1425 = vld [vmem:[%s1414 + $0x28] sm:$0xf]
        %v1426 = vld [vmem:[%s1414 + $0x2c] sm:$0x1]
        %v1427 = vld [vmem:[%s1414 + $0x30] sm:$0xf]
        %v1428 = vld [vmem:[%s1414 + $0x34] sm:$0xf]
        %v1429 = vld [vmem:[%s1414 + $0x38] sm:$0x1]
        %v1430 = vld [vmem:[%s1414 + $0x3c] sm:$0xf]
        %v1431 = vld [vmem:[%s1414 + $0x40] sm:$0xf]
        %v1432 = vld [vmem:[%s1414 + $0x44] sm:$0x1]
        %v1433 = vld [vmem:[%s1414 + $0x48] sm:$0xf]
        %v1434 = vld [vmem:[%s1414 + $0x4c] sm:$0xf]
        %v1435 = vld [vmem:[%s1414 + $0x50] sm:$0x1]
        %v1436 = vld [vmem:[%s1414 + $0x54] sm:$0xf]
        %v1437 = vld [vmem:[%s1414 + $0x58] sm:$0xf]
        %v1438 = vld [vmem:[%s1414 + $0x5c] sm:$0x1]
        %v1439 = vld [vmem:[%s1414 + $0x60] sm:$0xf]
        %v1440 = vld [vmem:[%s1414 + $0x64] sm:$0xf]
        %v1441 = vld [vmem:[%s1414 + $0x68] sm:$0x1]
        %v1442 = vld [vmem:[%s1414 + $0x6c] sm:$0xf]
        %v1443 = vld [vmem:[%s1414 + $0x70] sm:$0xf]
        %v1444 = vld [vmem:[%s1414 + $0x74] sm:$0x1]
        %v1445 = vld [vmem:[%s1414 + $0x78] sm:$0xf]
        %v1446 = vld [vmem:[%s1414 + $0x7c] sm:$0xf]
        %v1447 = vld [vmem:[%s1414 + $0x80] sm:$0x1]
        %v1448 = vld [vmem:[%s1414 + $0x84] sm:$0xf]
        %v1449 = vld [vmem:[%s1414 + $0x88] sm:$0xf]
        %v1450 = vld [vmem:[%s1414 + $0x8c] sm:$0x1]
        %v1451 = vld [vmem:[%s1414 + $0x90] sm:$0xf]
        %v1452 = vld [vmem:[%s1414 + $0x94] sm:$0xf]
        %v1453 = vld [vmem:[%s1414 + $0x98] sm:$0x1]
        %v1454 = vld [vmem:[%s1414 + $0x9c] sm:$0xf]
        %v1455 = vld [vmem:[%s1414 + $0xa0] sm:$0xf]
        %v1456 = vld [vmem:[%s1414 + $0xa4] sm:$0x1]
        %v1457 = vld [vmem:[%s1414 + $0xa8] sm:$0xf]
        %v1458 = vld [vmem:[%s1414 + $0xac] sm:$0xf]
        %v1459 = vld [vmem:[%s1414 + $0xb0] sm:$0x1]
        %v1460 = vld [vmem:[%s1414 + $0xb4] sm:$0xf]
        %v1461 = vld [vmem:[%s1414 + $0xb8] sm:$0xf]
        %v1462 = vld [vmem:[%s1414 + $0xbc] sm:$0x1]
        %v1463 = vunpack.c.l.bf16 %v1415
        %v1464 = vunpack.c.l.bf16 %v1416
        %v1465 = vunpack.c.l.bf16 %v1417
        %v1466 = vunpack.c.l.bf16 %v1418
        %v1467 = vunpack.c.l.bf16 %v1419
        %v1468 = vunpack.c.l.bf16 %v1420
        %v1469 = vunpack.c.l.bf16 %v1421
        %v1470 = vunpack.c.l.bf16 %v1422
        %v1471 = vunpack.c.l.bf16 %v1423
        %v1472 = vunpack.c.l.bf16 %v1424
        %v1473 = vunpack.c.l.bf16 %v1425
        %v1474 = vunpack.c.l.bf16 %v1426
        %v1475 = vunpack.c.l.bf16 %v1427
        %v1476 = vunpack.c.l.bf16 %v1428
        %v1477 = vunpack.c.l.bf16 %v1429
        %v1478 = vunpack.c.l.bf16 %v1430
        %v1479 = vunpack.c.l.bf16 %v1431
        %v1480 = vunpack.c.l.bf16 %v1432
        %v1481 = vunpack.c.l.bf16 %v1433
        %v1482 = vunpack.c.l.bf16 %v1434
        %v1483 = vunpack.c.l.bf16 %v1435
        %v1484 = vunpack.c.l.bf16 %v1436
        %v1485 = vunpack.c.l.bf16 %v1437
        %v1486 = vunpack.c.l.bf16 %v1438
        %v1487 = vunpack.c.l.bf16 %v1439
        %v1488 = vunpack.c.l.bf16 %v1440
        %v1489 = vunpack.c.l.bf16 %v1441
        %v1490 = vunpack.c.l.bf16 %v1442
        %v1491 = vunpack.c.l.bf16 %v1443
        %v1492 = vunpack.c.l.bf16 %v1444
        %v1493 = vunpack.c.l.bf16 %v1445
        %v1494 = vunpack.c.l.bf16 %v1446
        %v1495 = vunpack.c.l.bf16 %v1447
        %v1496 = vunpack.c.l.bf16 %v1448
        %v1497 = vunpack.c.l.bf16 %v1449
        %v1498 = vunpack.c.l.bf16 %v1450
        %v1499 = vunpack.c.l.bf16 %v1451
        %v1500 = vunpack.c.l.bf16 %v1452
        %v1501 = vunpack.c.l.bf16 %v1453
        %v1502 = vunpack.c.l.bf16 %v1454
        %v1503 = vunpack.c.l.bf16 %v1455
        %v1504 = vunpack.c.l.bf16 %v1456
        %v1505 = vunpack.c.l.bf16 %v1457
        %v1506 = vunpack.c.l.bf16 %v1458
        %v1507 = vunpack.c.l.bf16 %v1459
        %v1508 = vunpack.c.l.bf16 %v1460
        %v1509 = vunpack.c.l.bf16 %v1461
        %v1510 = vunpack.c.l.bf16 %v1462
        %v1511 = vpack.c.bf16 %v1464, %v1463
        %v1512 = vpack.c.bf16 %v1467, %v1466
        %v1513 = vpack.c.bf16 %v1470, %v1469
        %v1514 = vpack.c.bf16 %v1473, %v1472
        %v1515 = vpack.c.bf16 %v1476, %v1475
        %v1516 = vpack.c.bf16 %v1479, %v1478
        %v1517 = vpack.c.bf16 %v1482, %v1481
        %v1518 = vpack.c.bf16 %v1485, %v1484
        %v1519 = vpack.c.bf16 %v1488, %v1487
        %v1520 = vpack.c.bf16 %v1491, %v1490
        %v1521 = vpack.c.bf16 %v1494, %v1493
        %v1522 = vpack.c.bf16 %v1497, %v1496
        %v1523 = vpack.c.bf16 %v1500, %v1499
        %v1524 = vpack.c.bf16 %v1503, %v1502
        %v1525 = vpack.c.bf16 %v1506, %v1505
        %v1526 = vpack.c.bf16 %v1509, %v1508
        %v1527 = vld [vmem:[#allocation2] sm:$0xff]
        %v1528 = vld [vmem:[#allocation2 + $0x8] sm:$0xff]
        %v1529 = vld [vmem:[#allocation2 + $0x10] sm:$0xff]
        %v1530 = vld [vmem:[#allocation2 + $0x18] sm:$0xff]
        %v1531 = vld [vmem:[#allocation2 + $0x20] sm:$0xff]
        %v1532 = vld [vmem:[#allocation2 + $0x28] sm:$0xff]
        %v1533 = vld [vmem:[#allocation2 + $0x30] sm:$0xff]
        %v1534 = vld [vmem:[#allocation2 + $0x38] sm:$0xff]
        %v1535 = vld [vmem:[#allocation2 + $0x40] sm:$0xff]
        %v1536 = vld [vmem:[#allocation2 + $0x48] sm:$0xff]
        %v1537 = vld [vmem:[#allocation2 + $0x50] sm:$0xff]
        %v1538 = vld [vmem:[#allocation2 + $0x58] sm:$0xff]
        %v1539 = vld [vmem:[#allocation2 + $0x60] sm:$0xff]
        %v1540 = vld [vmem:[#allocation2 + $0x68] sm:$0xff]
        %v1541 = vld [vmem:[#allocation2 + $0x70] sm:$0xff]
        %v1542 = vld [vmem:[#allocation2 + $0x78] sm:$0xff]
        %v1543 = vld [vmem:[#allocation2 + $0x80] sm:$0xff]
        %v1544 = vld [vmem:[#allocation2 + $0x88] sm:$0xff]
        %v1545 = vld [vmem:[#allocation2 + $0x90] sm:$0xff]
        %v1546 = vld [vmem:[#allocation2 + $0x98] sm:$0xff]
        %v1547 = vld [vmem:[#allocation2 + $0xa0] sm:$0xff]
        %v1548 = vld [vmem:[#allocation2 + $0xa8] sm:$0xff]
        %v1549 = vld [vmem:[#allocation2 + $0xb0] sm:$0xff]
        %v1550 = vld [vmem:[#allocation2 + $0xb8] sm:$0xff]
        %v1551 = vld [vmem:[#allocation2 + $0xc0] sm:$0xff]
        %v1552 = vld [vmem:[#allocation2 + $0xc8] sm:$0xff]
        %v1553 = vld [vmem:[#allocation2 + $0xd0] sm:$0xff]
        %v1554 = vld [vmem:[#allocation2 + $0xd8] sm:$0xff]
        %v1555 = vld [vmem:[#allocation2 + $0xe0] sm:$0xff]
        %v1556 = vld [vmem:[#allocation2 + $0xe8] sm:$0xff]
        %v1557 = vld [vmem:[#allocation2 + $0xf0] sm:$0xff]
        %v1558 = vld [vmem:[#allocation2 + $0xf8] sm:$0xff]
        %s1559 = scalar_lea.vmem %s1, 6
        %v1560 = vld [vmem:[%s1559] sm:$0x3]
        %v1562 = vsel %vm423, %v1511, 0
        %v1565 = vsel %vm423, %v1512, 0
        %v1568 = vsel %vm423, %v1513, 0
        %v1571 = vsel %vm423, %v1514, 0
        %v1574 = vsel %vm423, %v1515, 0
        %v1577 = vsel %vm423, %v1516, 0
        %v1580 = vsel %vm423, %v1517, 0
        %v1583 = vsel %vm423, %v1518, 0
        %v1586 = vsel %vm423, %v1519, 0
        %v1589 = vsel %vm423, %v1520, 0
        %v1592 = vsel %vm423, %v1521, 0
        %v1595 = vsel %vm423, %v1522, 0
        %v1598 = vsel %vm423, %v1523, 0
        %v1601 = vsel %vm423, %v1524, 0
        %v1604 = vsel %vm423, %v1525, 0
        %v1607 = vsel %vm423, %v1526, 0
        %v1610 = vsel %vm472, %v1560, 0
        %1612 = vmatpush.bf16.msra.mxu0 0
        %1613 = vmatpush.bf16.msra.mxu0 0
        %1614 = vmatpush.bf16.msra.mxu0 0
        %1615 = vmatpush.bf16.msra.mxu0 0
        %1616 = vmatpush.bf16.msra.mxu0 0
        %1617 = vmatpush.bf16.msra.mxu0 0
        %1618 = vmatpush.bf16.msra.mxu0 0
        %1619 = vmatpush.bf16.msra.mxu0 %v1610
        %1620 = vmatmul.bf16.gmra.mxu0 %v1562
        %v1621 = vpop.f32.mrf.mxu0
        %v1622 = vadd.f32 0.0, %v1621
        %v1623 = vpop.f32.mrf.mxu0
        %v1624 = vadd.f32 0.0, %v1623
        %1625 = vmatmul.bf16.gmra.mxu0 %v1565
        %v1626 = vpop.f32.mrf.mxu0
        %v1627 = vadd.f32 0.0, %v1626
        %v1628 = vpop.f32.mrf.mxu0
        %v1629 = vadd.f32 0.0, %v1628
        %1630 = vmatmul.bf16.gmra.mxu0 %v1568
        %v1631 = vpop.f32.mrf.mxu0
        %v1632 = vadd.f32 0.0, %v1631
        %v1633 = vpop.f32.mrf.mxu0
        %v1634 = vadd.f32 0.0, %v1633
        %1635 = vmatmul.bf16.gmra.mxu0 %v1571
        %v1636 = vpop.f32.mrf.mxu0
        %v1637 = vadd.f32 0.0, %v1636
        %v1638 = vpop.f32.mrf.mxu0
        %v1639 = vadd.f32 0.0, %v1638
        %1640 = vmatmul.bf16.gmra.mxu0 %v1574
        %v1641 = vpop.f32.mrf.mxu0
        %v1642 = vadd.f32 0.0, %v1641
        %v1643 = vpop.f32.mrf.mxu0
        %v1644 = vadd.f32 0.0, %v1643
        %1645 = vmatmul.bf16.gmra.mxu0 %v1577
        %v1646 = vpop.f32.mrf.mxu0
        %v1647 = vadd.f32 0.0, %v1646
        %v1648 = vpop.f32.mrf.mxu0
        %v1649 = vadd.f32 0.0, %v1648
        %1650 = vmatmul.bf16.gmra.mxu0 %v1580
        %v1651 = vpop.f32.mrf.mxu0
        %v1652 = vadd.f32 0.0, %v1651
        %v1653 = vpop.f32.mrf.mxu0
        %v1654 = vadd.f32 0.0, %v1653
        %1655 = vmatmul.bf16.gmra.mxu0 %v1583
        %v1656 = vpop.f32.mrf.mxu0
        %v1657 = vadd.f32 0.0, %v1656
        %v1658 = vpop.f32.mrf.mxu0
        %v1659 = vadd.f32 0.0, %v1658
        %1660 = vmatmul.bf16.gmra.mxu0 %v1586
        %v1661 = vpop.f32.mrf.mxu0
        %v1662 = vadd.f32 0.0, %v1661
        %v1663 = vpop.f32.mrf.mxu0
        %v1664 = vadd.f32 0.0, %v1663
        %1665 = vmatmul.bf16.gmra.mxu0 %v1589
        %v1666 = vpop.f32.mrf.mxu0
        %v1667 = vadd.f32 0.0, %v1666
        %v1668 = vpop.f32.mrf.mxu0
        %v1669 = vadd.f32 0.0, %v1668
        %1670 = vmatmul.bf16.gmra.mxu0 %v1592
        %v1671 = vpop.f32.mrf.mxu0
        %v1672 = vadd.f32 0.0, %v1671
        %v1673 = vpop.f32.mrf.mxu0
        %v1674 = vadd.f32 0.0, %v1673
        %1675 = vmatmul.bf16.gmra.mxu0 %v1595
        %v1676 = vpop.f32.mrf.mxu0
        %v1677 = vadd.f32 0.0, %v1676
        %v1678 = vpop.f32.mrf.mxu0
        %v1679 = vadd.f32 0.0, %v1678
        %1680 = vmatmul.bf16.gmra.mxu0 %v1598
        %v1681 = vpop.f32.mrf.mxu0
        %v1682 = vadd.f32 0.0, %v1681
        %v1683 = vpop.f32.mrf.mxu0
        %v1684 = vadd.f32 0.0, %v1683
        %1685 = vmatmul.bf16.gmra.mxu0 %v1601
        %v1686 = vpop.f32.mrf.mxu0
        %v1687 = vadd.f32 0.0, %v1686
        %v1688 = vpop.f32.mrf.mxu0
        %v1689 = vadd.f32 0.0, %v1688
        %1690 = vmatmul.bf16.gmra.mxu0 %v1604
        %v1691 = vpop.f32.mrf.mxu0
        %v1692 = vadd.f32 0.0, %v1691
        %v1693 = vpop.f32.mrf.mxu0
        %v1694 = vadd.f32 0.0, %v1693
        %1695 = vmatmul.bf16.gmra.mxu0 %v1607
        %v1696 = vpop.f32.mrf.mxu0
        %v1697 = vadd.f32 0.0, %v1696
        %v1698 = vpop.f32.mrf.mxu0
        %v1699 = vadd.f32 0.0, %v1698
        %1700 = vdwg.mxu0
        %v1701 = vadd.f32 %v1527, %v1622
        %v1702 = vadd.f32 %v1528, %v1624
        %v1703 = vadd.f32 %v1529, %v1627
        %v1704 = vadd.f32 %v1530, %v1629
        %v1705 = vadd.f32 %v1531, %v1632
        %v1706 = vadd.f32 %v1532, %v1634
        %v1707 = vadd.f32 %v1533, %v1637
        %v1708 = vadd.f32 %v1534, %v1639
        %v1709 = vadd.f32 %v1535, %v1642
        %v1710 = vadd.f32 %v1536, %v1644
        %v1711 = vadd.f32 %v1537, %v1647
        %v1712 = vadd.f32 %v1538, %v1649
        %v1713 = vadd.f32 %v1539, %v1652
        %v1714 = vadd.f32 %v1540, %v1654
        %v1715 = vadd.f32 %v1541, %v1657
        %v1716 = vadd.f32 %v1542, %v1659
        %v1717 = vadd.f32 %v1543, %v1662
        %v1718 = vadd.f32 %v1544, %v1664
        %v1719 = vadd.f32 %v1545, %v1667
        %v1720 = vadd.f32 %v1546, %v1669
        %v1721 = vadd.f32 %v1547, %v1672
        %v1722 = vadd.f32 %v1548, %v1674
        %v1723 = vadd.f32 %v1549, %v1677
        %v1724 = vadd.f32 %v1550, %v1679
        %v1725 = vadd.f32 %v1551, %v1682
        %v1726 = vadd.f32 %v1552, %v1684
        %v1727 = vadd.f32 %v1553, %v1687
        %v1728 = vadd.f32 %v1554, %v1689
        %v1729 = vadd.f32 %v1555, %v1692
        %v1730 = vadd.f32 %v1556, %v1694
        %v1731 = vadd.f32 %v1557, %v1697
        %v1732 = vadd.f32 %v1558, %v1699
        %1733 = vst.msk [vmem:[#allocation2] sm:$0xff] %vm242, %v1701
        %1734 = vst.msk [vmem:[#allocation2 + $0x8] sm:$0xff] %vm242, %v1702
        %1735 = vst.msk [vmem:[#allocation2 + $0x10] sm:$0xff] %vm242, %v1703
        %1736 = vst.msk [vmem:[#allocation2 + $0x18] sm:$0xff] %vm242, %v1704
        %1737 = vst.msk [vmem:[#allocation2 + $0x20] sm:$0xff] %vm242, %v1705
        %1738 = vst.msk [vmem:[#allocation2 + $0x28] sm:$0xff] %vm242, %v1706
        %1739 = vst.msk [vmem:[#allocation2 + $0x30] sm:$0xff] %vm242, %v1707
        %1740 = vst.msk [vmem:[#allocation2 + $0x38] sm:$0xff] %vm242, %v1708
        %1741 = vst.msk [vmem:[#allocation2 + $0x40] sm:$0xff] %vm242, %v1709
        %1742 = vst.msk [vmem:[#allocation2 + $0x48] sm:$0xff] %vm242, %v1710
        %1743 = vst.msk [vmem:[#allocation2 + $0x50] sm:$0xff] %vm242, %v1711
        %1744 = vst.msk [vmem:[#allocation2 + $0x58] sm:$0xff] %vm242, %v1712
        %1745 = vst.msk [vmem:[#allocation2 + $0x60] sm:$0xff] %vm242, %v1713
        %1746 = vst.msk [vmem:[#allocation2 + $0x68] sm:$0xff] %vm242, %v1714
        %1747 = vst.msk [vmem:[#allocation2 + $0x70] sm:$0xff] %vm242, %v1715
        %1748 = vst.msk [vmem:[#allocation2 + $0x78] sm:$0xff] %vm242, %v1716
        %1749 = vst.msk [vmem:[#allocation2 + $0x80] sm:$0xff] %vm242, %v1717
        %1750 = vst.msk [vmem:[#allocation2 + $0x88] sm:$0xff] %vm242, %v1718
        %1751 = vst.msk [vmem:[#allocation2 + $0x90] sm:$0xff] %vm242, %v1719
        %1752 = vst.msk [vmem:[#allocation2 + $0x98] sm:$0xff] %vm242, %v1720
        %1753 = vst.msk [vmem:[#allocation2 + $0xa0] sm:$0xff] %vm242, %v1721
        %1754 = vst.msk [vmem:[#allocation2 + $0xa8] sm:$0xff] %vm242, %v1722
        %1755 = vst.msk [vmem:[#allocation2 + $0xb0] sm:$0xff] %vm242, %v1723
        %1756 = vst.msk [vmem:[#allocation2 + $0xb8] sm:$0xff] %vm242, %v1724
        %1757 = vst.msk [vmem:[#allocation2 + $0xc0] sm:$0xff] %vm242, %v1725
        %1758 = vst.msk [vmem:[#allocation2 + $0xc8] sm:$0xff] %vm242, %v1726
        %1759 = vst.msk [vmem:[#allocation2 + $0xd0] sm:$0xff] %vm242, %v1727
        %1760 = vst.msk [vmem:[#allocation2 + $0xd8] sm:$0xff] %vm242, %v1728
        %1761 = vst.msk [vmem:[#allocation2 + $0xe0] sm:$0xff] %vm242, %v1729
        %1762 = vst.msk [vmem:[#allocation2 + $0xe8] sm:$0xff] %vm242, %v1730
        %1763 = vst.msk [vmem:[#allocation2 + $0xf0] sm:$0xff] %vm242, %v1731
        %1764 = vst.msk [vmem:[#allocation2 + $0xf8] sm:$0xff] %vm242, %v1732
        %v1813 = vrot.slane %v1463, 1
        %v1814 = vrot.slane %v1464, 1
        %v1815 = vsel %vm677, %v1813, %v1814
        %v1816 = vrot.slane %v1465, 1
        %v1817 = vsel %vm677, %v1814, %v1816
        %v1818 = vrot.slane %v1466, 1
        %v1819 = vrot.slane %v1467, 1
        %v1820 = vsel %vm677, %v1818, %v1819
        %v1821 = vrot.slane %v1468, 1
        %v1822 = vsel %vm677, %v1819, %v1821
        %v1823 = vrot.slane %v1469, 1
        %v1824 = vrot.slane %v1470, 1
        %v1825 = vsel %vm677, %v1823, %v1824
        %v1826 = vrot.slane %v1471, 1
        %v1827 = vsel %vm677, %v1824, %v1826
        %v1828 = vrot.slane %v1472, 1
        %v1829 = vrot.slane %v1473, 1
        %v1830 = vsel %vm677, %v1828, %v1829
        %v1831 = vrot.slane %v1474, 1
        %v1832 = vsel %vm677, %v1829, %v1831
        %v1833 = vrot.slane %v1475, 1
        %v1834 = vrot.slane %v1476, 1
        %v1835 = vsel %vm677, %v1833, %v1834
        %v1836 = vrot.slane %v1477, 1
        %v1837 = vsel %vm677, %v1834, %v1836
        %v1838 = vrot.slane %v1478, 1
        %v1839 = vrot.slane %v1479, 1
        %v1840 = vsel %vm677, %v1838, %v1839
        %v1841 = vrot.slane %v1480, 1
        %v1842 = vsel %vm677, %v1839, %v1841
        %v1843 = vrot.slane %v1481, 1
        %v1844 = vrot.slane %v1482, 1
        %v1845 = vsel %vm677, %v1843, %v1844
        %v1846 = vrot.slane %v1483, 1
        %v1847 = vsel %vm677, %v1844, %v1846
        %v1848 = vrot.slane %v1484, 1
        %v1849 = vrot.slane %v1485, 1
        %v1850 = vsel %vm677, %v1848, %v1849
        %v1851 = vrot.slane %v1486, 1
        %v1852 = vsel %vm677, %v1849, %v1851
        %v1853 = vrot.slane %v1487, 1
        %v1854 = vrot.slane %v1488, 1
        %v1855 = vsel %vm677, %v1853, %v1854
        %v1856 = vrot.slane %v1489, 1
        %v1857 = vsel %vm677, %v1854, %v1856
        %v1858 = vrot.slane %v1490, 1
        %v1859 = vrot.slane %v1491, 1
        %v1860 = vsel %vm677, %v1858, %v1859
        %v1861 = vrot.slane %v1492, 1
        %v1862 = vsel %vm677, %v1859, %v1861
        %v1863 = vrot.slane %v1493, 1
        %v1864 = vrot.slane %v1494, 1
        %v1865 = vsel %vm677, %v1863, %v1864
        %v1866 = vrot.slane %v1495, 1
        %v1867 = vsel %vm677, %v1864, %v1866
        %v1868 = vrot.slane %v1496, 1
        %v1869 = vrot.slane %v1497, 1
        %v1870 = vsel %vm677, %v1868, %v1869
        %v1871 = vrot.slane %v1498, 1
        %v1872 = vsel %vm677, %v1869, %v1871
        %v1873 = vrot.slane %v1499, 1
        %v1874 = vrot.slane %v1500, 1
        %v1875 = vsel %vm677, %v1873, %v1874
        %v1876 = vrot.slane %v1501, 1
        %v1877 = vsel %vm677, %v1874, %v1876
        %v1878 = vrot.slane %v1502, 1
        %v1879 = vrot.slane %v1503, 1
        %v1880 = vsel %vm677, %v1878, %v1879
        %v1881 = vrot.slane %v1504, 1
        %v1882 = vsel %vm677, %v1879, %v1881
        %v1883 = vrot.slane %v1505, 1
        %v1884 = vrot.slane %v1506, 1
        %v1885 = vsel %vm677, %v1883, %v1884
        %v1886 = vrot.slane %v1507, 1
        %v1887 = vsel %vm677, %v1884, %v1886
        %v1888 = vrot.slane %v1508, 1
        %v1889 = vrot.slane %v1509, 1
        %v1890 = vsel %vm677, %v1888, %v1889
        %v1891 = vrot.slane %v1510, 1
        %v1892 = vsel %vm677, %v1889, %v1891
        %v1925 = vpack.c.bf16 %v1817, %v1815
        %v1926 = vpack.c.bf16 %v1822, %v1820
        %v1927 = vpack.c.bf16 %v1827, %v1825
        %v1928 = vpack.c.bf16 %v1832, %v1830
        %v1929 = vpack.c.bf16 %v1837, %v1835
        %v1930 = vpack.c.bf16 %v1842, %v1840
        %v1931 = vpack.c.bf16 %v1847, %v1845
        %v1932 = vpack.c.bf16 %v1852, %v1850
        %v1933 = vpack.c.bf16 %v1857, %v1855
        %v1934 = vpack.c.bf16 %v1862, %v1860
        %v1935 = vpack.c.bf16 %v1867, %v1865
        %v1936 = vpack.c.bf16 %v1872, %v1870
        %v1937 = vpack.c.bf16 %v1877, %v1875
        %v1938 = vpack.c.bf16 %v1882, %v1880
        %v1939 = vpack.c.bf16 %v1887, %v1885
        %v1940 = vpack.c.bf16 %v1892, %v1890
        %v1941 = vld [vmem:[#allocation2] sm:$0xff]
        %v1942 = vld [vmem:[#allocation2 + $0x8] sm:$0xff]
        %v1943 = vld [vmem:[#allocation2 + $0x10] sm:$0xff]
        %v1944 = vld [vmem:[#allocation2 + $0x18] sm:$0xff]
        %v1945 = vld [vmem:[#allocation2 + $0x20] sm:$0xff]
        %v1946 = vld [vmem:[#allocation2 + $0x28] sm:$0xff]
        %v1947 = vld [vmem:[#allocation2 + $0x30] sm:$0xff]
        %v1948 = vld [vmem:[#allocation2 + $0x38] sm:$0xff]
        %v1949 = vld [vmem:[#allocation2 + $0x40] sm:$0xff]
        %v1950 = vld [vmem:[#allocation2 + $0x48] sm:$0xff]
        %v1951 = vld [vmem:[#allocation2 + $0x50] sm:$0xff]
        %v1952 = vld [vmem:[#allocation2 + $0x58] sm:$0xff]
        %v1953 = vld [vmem:[#allocation2 + $0x60] sm:$0xff]
        %v1954 = vld [vmem:[#allocation2 + $0x68] sm:$0xff]
        %v1955 = vld [vmem:[#allocation2 + $0x70] sm:$0xff]
        %v1956 = vld [vmem:[#allocation2 + $0x78] sm:$0xff]
        %v1957 = vld [vmem:[#allocation2 + $0x80] sm:$0xff]
        %v1958 = vld [vmem:[#allocation2 + $0x88] sm:$0xff]
        %v1959 = vld [vmem:[#allocation2 + $0x90] sm:$0xff]
        %v1960 = vld [vmem:[#allocation2 + $0x98] sm:$0xff]
        %v1961 = vld [vmem:[#allocation2 + $0xa0] sm:$0xff]
        %v1962 = vld [vmem:[#allocation2 + $0xa8] sm:$0xff]
        %v1963 = vld [vmem:[#allocation2 + $0xb0] sm:$0xff]
        %v1964 = vld [vmem:[#allocation2 + $0xb8] sm:$0xff]
        %v1965 = vld [vmem:[#allocation2 + $0xc0] sm:$0xff]
        %v1966 = vld [vmem:[#allocation2 + $0xc8] sm:$0xff]
        %v1967 = vld [vmem:[#allocation2 + $0xd0] sm:$0xff]
        %v1968 = vld [vmem:[#allocation2 + $0xd8] sm:$0xff]
        %v1969 = vld [vmem:[#allocation2 + $0xe0] sm:$0xff]
        %v1970 = vld [vmem:[#allocation2 + $0xe8] sm:$0xff]
        %v1971 = vld [vmem:[#allocation2 + $0xf0] sm:$0xff]
        %v1972 = vld [vmem:[#allocation2 + $0xf8] sm:$0xff]
        %s1973 = scalar_lea.vmem %s1, 8
        %v1974 = vld [vmem:[%s1973] sm:$0x3]
        %v1976 = vsel %vm423, %v1925, 0
        %v1979 = vsel %vm423, %v1926, 0
        %v1982 = vsel %vm423, %v1927, 0
        %v1985 = vsel %vm423, %v1928, 0
        %v1988 = vsel %vm423, %v1929, 0
        %v1991 = vsel %vm423, %v1930, 0
        %v1994 = vsel %vm423, %v1931, 0
        %v1997 = vsel %vm423, %v1932, 0
        %v2000 = vsel %vm423, %v1933, 0
        %v2003 = vsel %vm423, %v1934, 0
        %v2006 = vsel %vm423, %v1935, 0
        %v2009 = vsel %vm423, %v1936, 0
        %v2012 = vsel %vm423, %v1937, 0
        %v2015 = vsel %vm423, %v1938, 0
        %v2018 = vsel %vm423, %v1939, 0
        %v2021 = vsel %vm423, %v1940, 0
        %v2024 = vsel %vm472, %v1974, 0
        %2026 = vmatpush.bf16.msra.mxu0 0
        %2027 = vmatpush.bf16.msra.mxu0 0
        %2028 = vmatpush.bf16.msra.mxu0 0
        %2029 = vmatpush.bf16.msra.mxu0 0
        %2030 = vmatpush.bf16.msra.mxu0 0
        %2031 = vmatpush.bf16.msra.mxu0 0
        %2032 = vmatpush.bf16.msra.mxu0 0
        %2033 = vmatpush.bf16.msra.mxu0 %v2024
        %2034 = vmatmul.bf16.gmra.mxu0 %v1976
        %v2035 = vpop.f32.mrf.mxu0
        %v2036 = vadd.f32 0.0, %v2035
        %v2037 = vpop.f32.mrf.mxu0
        %v2038 = vadd.f32 0.0, %v2037
        %2039 = vmatmul.bf16.gmra.mxu0 %v1979
        %v2040 = vpop.f32.mrf.mxu0
        %v2041 = vadd.f32 0.0, %v2040
        %v2042 = vpop.f32.mrf.mxu0
        %v2043 = vadd.f32 0.0, %v2042
        %2044 = vmatmul.bf16.gmra.mxu0 %v1982
        %v2045 = vpop.f32.mrf.mxu0
        %v2046 = vadd.f32 0.0, %v2045
        %v2047 = vpop.f32.mrf.mxu0
        %v2048 = vadd.f32 0.0, %v2047
        %2049 = vmatmul.bf16.gmra.mxu0 %v1985
        %v2050 = vpop.f32.mrf.mxu0
        %v2051 = vadd.f32 0.0, %v2050
        %v2052 = vpop.f32.mrf.mxu0
        %v2053 = vadd.f32 0.0, %v2052
        %2054 = vmatmul.bf16.gmra.mxu0 %v1988
        %v2055 = vpop.f32.mrf.mxu0
        %v2056 = vadd.f32 0.0, %v2055
        %v2057 = vpop.f32.mrf.mxu0
        %v2058 = vadd.f32 0.0, %v2057
        %2059 = vmatmul.bf16.gmra.mxu0 %v1991
        %v2060 = vpop.f32.mrf.mxu0
        %v2061 = vadd.f32 0.0, %v2060
        %v2062 = vpop.f32.mrf.mxu0
        %v2063 = vadd.f32 0.0, %v2062
        %2064 = vmatmul.bf16.gmra.mxu0 %v1994
        %v2065 = vpop.f32.mrf.mxu0
        %v2066 = vadd.f32 0.0, %v2065
        %v2067 = vpop.f32.mrf.mxu0
        %v2068 = vadd.f32 0.0, %v2067
        %2069 = vmatmul.bf16.gmra.mxu0 %v1997
        %v2070 = vpop.f32.mrf.mxu0
        %v2071 = vadd.f32 0.0, %v2070
        %v2072 = vpop.f32.mrf.mxu0
        %v2073 = vadd.f32 0.0, %v2072
        %2074 = vmatmul.bf16.gmra.mxu0 %v2000
        %v2075 = vpop.f32.mrf.mxu0
        %v2076 = vadd.f32 0.0, %v2075
        %v2077 = vpop.f32.mrf.mxu0
        %v2078 = vadd.f32 0.0, %v2077
        %2079 = vmatmul.bf16.gmra.mxu0 %v2003
        %v2080 = vpop.f32.mrf.mxu0
        %v2081 = vadd.f32 0.0, %v2080
        %v2082 = vpop.f32.mrf.mxu0
        %v2083 = vadd.f32 0.0, %v2082
        %2084 = vmatmul.bf16.gmra.mxu0 %v2006
        %v2085 = vpop.f32.mrf.mxu0
        %v2086 = vadd.f32 0.0, %v2085
        %v2087 = vpop.f32.mrf.mxu0
        %v2088 = vadd.f32 0.0, %v2087
        %2089 = vmatmul.bf16.gmra.mxu0 %v2009
        %v2090 = vpop.f32.mrf.mxu0
        %v2091 = vadd.f32 0.0, %v2090
        %v2092 = vpop.f32.mrf.mxu0
        %v2093 = vadd.f32 0.0, %v2092
        %2094 = vmatmul.bf16.gmra.mxu0 %v2012
        %v2095 = vpop.f32.mrf.mxu0
        %v2096 = vadd.f32 0.0, %v2095
        %v2097 = vpop.f32.mrf.mxu0
        %v2098 = vadd.f32 0.0, %v2097
        %2099 = vmatmul.bf16.gmra.mxu0 %v2015
        %v2100 = vpop.f32.mrf.mxu0
        %v2101 = vadd.f32 0.0, %v2100
        %v2102 = vpop.f32.mrf.mxu0
        %v2103 = vadd.f32 0.0, %v2102
        %2104 = vmatmul.bf16.gmra.mxu0 %v2018
        %v2105 = vpop.f32.mrf.mxu0
        %v2106 = vadd.f32 0.0, %v2105
        %v2107 = vpop.f32.mrf.mxu0
        %v2108 = vadd.f32 0.0, %v2107
        %2109 = vmatmul.bf16.gmra.mxu0 %v2021
        %v2110 = vpop.f32.mrf.mxu0
        %v2111 = vadd.f32 0.0, %v2110
        %v2112 = vpop.f32.mrf.mxu0
        %v2113 = vadd.f32 0.0, %v2112
        %2114 = vdwg.mxu0
        %v2115 = vadd.f32 %v1941, %v2036
        %v2116 = vadd.f32 %v1942, %v2038
        %v2117 = vadd.f32 %v1943, %v2041
        %v2118 = vadd.f32 %v1944, %v2043
        %v2119 = vadd.f32 %v1945, %v2046
        %v2120 = vadd.f32 %v1946, %v2048
        %v2121 = vadd.f32 %v1947, %v2051
        %v2122 = vadd.f32 %v1948, %v2053
        %v2123 = vadd.f32 %v1949, %v2056
        %v2124 = vadd.f32 %v1950, %v2058
        %v2125 = vadd.f32 %v1951, %v2061
        %v2126 = vadd.f32 %v1952, %v2063
        %v2127 = vadd.f32 %v1953, %v2066
        %v2128 = vadd.f32 %v1954, %v2068
        %v2129 = vadd.f32 %v1955, %v2071
        %v2130 = vadd.f32 %v1956, %v2073
        %v2131 = vadd.f32 %v1957, %v2076
        %v2132 = vadd.f32 %v1958, %v2078
        %v2133 = vadd.f32 %v1959, %v2081
        %v2134 = vadd.f32 %v1960, %v2083
        %v2135 = vadd.f32 %v1961, %v2086
        %v2136 = vadd.f32 %v1962, %v2088
        %v2137 = vadd.f32 %v1963, %v2091
        %v2138 = vadd.f32 %v1964, %v2093
        %v2139 = vadd.f32 %v1965, %v2096
        %v2140 = vadd.f32 %v1966, %v2098
        %v2141 = vadd.f32 %v1967, %v2101
        %v2142 = vadd.f32 %v1968, %v2103
        %v2143 = vadd.f32 %v1969, %v2106
        %v2144 = vadd.f32 %v1970, %v2108
        %v2145 = vadd.f32 %v1971, %v2111
        %v2146 = vadd.f32 %v1972, %v2113
        %2147 = vst.msk [vmem:[#allocation2] sm:$0xff] %vm242, %v2115
        %2148 = vst.msk [vmem:[#allocation2 + $0x8] sm:$0xff] %vm242, %v2116
        %2149 = vst.msk [vmem:[#allocation2 + $0x10] sm:$0xff] %vm242, %v2117
        %2150 = vst.msk [vmem:[#allocation2 + $0x18] sm:$0xff] %vm242, %v2118
        %2151 = vst.msk [vmem:[#allocation2 + $0x20] sm:$0xff] %vm242, %v2119
        %2152 = vst.msk [vmem:[#allocation2 + $0x28] sm:$0xff] %vm242, %v2120
        %2153 = vst.msk [vmem:[#allocation2 + $0x30] sm:$0xff] %vm242, %v2121
        %2154 = vst.msk [vmem:[#allocation2 + $0x38] sm:$0xff] %vm242, %v2122
        %2155 = vst.msk [vmem:[#allocation2 + $0x40] sm:$0xff] %vm242, %v2123
        %2156 = vst.msk [vmem:[#allocation2 + $0x48] sm:$0xff] %vm242, %v2124
        %2157 = vst.msk [vmem:[#allocation2 + $0x50] sm:$0xff] %vm242, %v2125
        %2158 = vst.msk [vmem:[#allocation2 + $0x58] sm:$0xff] %vm242, %v2126
        %2159 = vst.msk [vmem:[#allocation2 + $0x60] sm:$0xff] %vm242, %v2127
        %2160 = vst.msk [vmem:[#allocation2 + $0x68] sm:$0xff] %vm242, %v2128
        %2161 = vst.msk [vmem:[#allocation2 + $0x70] sm:$0xff] %vm242, %v2129
        %2162 = vst.msk [vmem:[#allocation2 + $0x78] sm:$0xff] %vm242, %v2130
        %2163 = vst.msk [vmem:[#allocation2 + $0x80] sm:$0xff] %vm242, %v2131
        %2164 = vst.msk [vmem:[#allocation2 + $0x88] sm:$0xff] %vm242, %v2132
        %2165 = vst.msk [vmem:[#allocation2 + $0x90] sm:$0xff] %vm242, %v2133
        %2166 = vst.msk [vmem:[#allocation2 + $0x98] sm:$0xff] %vm242, %v2134
        %2167 = vst.msk [vmem:[#allocation2 + $0xa0] sm:$0xff] %vm242, %v2135
        %2168 = vst.msk [vmem:[#allocation2 + $0xa8] sm:$0xff] %vm242, %v2136
        %2169 = vst.msk [vmem:[#allocation2 + $0xb0] sm:$0xff] %vm242, %v2137
        %2170 = vst.msk [vmem:[#allocation2 + $0xb8] sm:$0xff] %vm242, %v2138
        %2171 = vst.msk [vmem:[#allocation2 + $0xc0] sm:$0xff] %vm242, %v2139
        %2172 = vst.msk [vmem:[#allocation2 + $0xc8] sm:$0xff] %vm242, %v2140
        %2173 = vst.msk [vmem:[#allocation2 + $0xd0] sm:$0xff] %vm242, %v2141
        %2174 = vst.msk [vmem:[#allocation2 + $0xd8] sm:$0xff] %vm242, %v2142
        %2175 = vst.msk [vmem:[#allocation2 + $0xe0] sm:$0xff] %vm242, %v2143
        %2176 = vst.msk [vmem:[#allocation2 + $0xe8] sm:$0xff] %vm242, %v2144
        %2177 = vst.msk [vmem:[#allocation2 + $0xf0] sm:$0xff] %vm242, %v2145
        %2178 = vst.msk [vmem:[#allocation2 + $0xf8] sm:$0xff] %vm242, %v2146
        %v2179 = vrot.slane %v1463, 2
        %v2180 = vrot.slane %v1464, 2
        %v2181 = vsel %vm1044, %v2179, %v2180
        %v2182 = vrot.slane %v1465, 2
        %v2183 = vsel %vm1044, %v2180, %v2182
        %v2184 = vrot.slane %v1466, 2
        %v2185 = vrot.slane %v1467, 2
        %v2186 = vsel %vm1044, %v2184, %v2185
        %v2187 = vrot.slane %v1468, 2
        %v2188 = vsel %vm1044, %v2185, %v2187
        %v2189 = vrot.slane %v1469, 2
        %v2190 = vrot.slane %v1470, 2
        %v2191 = vsel %vm1044, %v2189, %v2190
        %v2192 = vrot.slane %v1471, 2
        %v2193 = vsel %vm1044, %v2190, %v2192
        %v2194 = vrot.slane %v1472, 2
        %v2195 = vrot.slane %v1473, 2
        %v2196 = vsel %vm1044, %v2194, %v2195
        %v2197 = vrot.slane %v1474, 2
        %v2198 = vsel %vm1044, %v2195, %v2197
        %v2199 = vrot.slane %v1475, 2
        %v2200 = vrot.slane %v1476, 2
        %v2201 = vsel %vm1044, %v2199, %v2200
        %v2202 = vrot.slane %v1477, 2
        %v2203 = vsel %vm1044, %v2200, %v2202
        %v2204 = vrot.slane %v1478, 2
        %v2205 = vrot.slane %v1479, 2
        %v2206 = vsel %vm1044, %v2204, %v2205
        %v2207 = vrot.slane %v1480, 2
        %v2208 = vsel %vm1044, %v2205, %v2207
        %v2209 = vrot.slane %v1481, 2
        %v2210 = vrot.slane %v1482, 2
        %v2211 = vsel %vm1044, %v2209, %v2210
        %v2212 = vrot.slane %v1483, 2
        %v2213 = vsel %vm1044, %v2210, %v2212
        %v2214 = vrot.slane %v1484, 2
        %v2215 = vrot.slane %v1485, 2
        %v2216 = vsel %vm1044, %v2214, %v2215
        %v2217 = vrot.slane %v1486, 2
        %v2218 = vsel %vm1044, %v2215, %v2217
        %v2219 = vrot.slane %v1487, 2
        %v2220 = vrot.slane %v1488, 2
        %v2221 = vsel %vm1044, %v2219, %v2220
        %v2222 = vrot.slane %v1489, 2
        %v2223 = vsel %vm1044, %v2220, %v2222
        %v2224 = vrot.slane %v1490, 2
        %v2225 = vrot.slane %v1491, 2
        %v2226 = vsel %vm1044, %v2224, %v2225
        %v2227 = vrot.slane %v1492, 2
        %v2228 = vsel %vm1044, %v2225, %v2227
        %v2229 = vrot.slane %v1493, 2
        %v2230 = vrot.slane %v1494, 2
        %v2231 = vsel %vm1044, %v2229, %v2230
        %v2232 = vrot.slane %v1495, 2
        %v2233 = vsel %vm1044, %v2230, %v2232
        %v2234 = vrot.slane %v1496, 2
        %v2235 = vrot.slane %v1497, 2
        %v2236 = vsel %vm1044, %v2234, %v2235
        %v2237 = vrot.slane %v1498, 2
        %v2238 = vsel %vm1044, %v2235, %v2237
        %v2239 = vrot.slane %v1499, 2
        %v2240 = vrot.slane %v1500, 2
        %v2241 = vsel %vm1044, %v2239, %v2240
        %v2242 = vrot.slane %v1501, 2
        %v2243 = vsel %vm1044, %v2240, %v2242
        %v2244 = vrot.slane %v1502, 2
        %v2245 = vrot.slane %v1503, 2
        %v2246 = vsel %vm1044, %v2244, %v2245
        %v2247 = vrot.slane %v1504, 2
        %v2248 = vsel %vm1044, %v2245, %v2247
        %v2249 = vrot.slane %v1505, 2
        %v2250 = vrot.slane %v1506, 2
        %v2251 = vsel %vm1044, %v2249, %v2250
        %v2252 = vrot.slane %v1507, 2
        %v2253 = vsel %vm1044, %v2250, %v2252
        %v2254 = vrot.slane %v1508, 2
        %v2255 = vrot.slane %v1509, 2
        %v2256 = vsel %vm1044, %v2254, %v2255
        %v2257 = vrot.slane %v1510, 2
        %v2258 = vsel %vm1044, %v2255, %v2257
        %v2291 = vpack.c.bf16 %v2183, %v2181
        %v2292 = vpack.c.bf16 %v2188, %v2186
        %v2293 = vpack.c.bf16 %v2193, %v2191
        %v2294 = vpack.c.bf16 %v2198, %v2196
        %v2295 = vpack.c.bf16 %v2203, %v2201
        %v2296 = vpack.c.bf16 %v2208, %v2206
        %v2297 = vpack.c.bf16 %v2213, %v2211
        %v2298 = vpack.c.bf16 %v2218, %v2216
        %v2299 = vpack.c.bf16 %v2223, %v2221
        %v2300 = vpack.c.bf16 %v2228, %v2226
        %v2301 = vpack.c.bf16 %v2233, %v2231
        %v2302 = vpack.c.bf16 %v2238, %v2236
        %v2303 = vpack.c.bf16 %v2243, %v2241
        %v2304 = vpack.c.bf16 %v2248, %v2246
        %v2305 = vpack.c.bf16 %v2253, %v2251
        %v2306 = vpack.c.bf16 %v2258, %v2256
        %v2307 = vld [vmem:[#allocation2] sm:$0xff]
        %v2308 = vld [vmem:[#allocation2 + $0x8] sm:$0xff]
        %v2309 = vld [vmem:[#allocation2 + $0x10] sm:$0xff]
        %v2310 = vld [vmem:[#allocation2 + $0x18] sm:$0xff]
        %v2311 = vld [vmem:[#allocation2 + $0x20] sm:$0xff]
        %v2312 = vld [vmem:[#allocation2 + $0x28] sm:$0xff]
        %v2313 = vld [vmem:[#allocation2 + $0x30] sm:$0xff]
        %v2314 = vld [vmem:[#allocation2 + $0x38] sm:$0xff]
        %v2315 = vld [vmem:[#allocation2 + $0x40] sm:$0xff]
        %v2316 = vld [vmem:[#allocation2 + $0x48] sm:$0xff]
        %v2317 = vld [vmem:[#allocation2 + $0x50] sm:$0xff]
        %v2318 = vld [vmem:[#allocation2 + $0x58] sm:$0xff]
        %v2319 = vld [vmem:[#allocation2 + $0x60] sm:$0xff]
        %v2320 = vld [vmem:[#allocation2 + $0x68] sm:$0xff]
        %v2321 = vld [vmem:[#allocation2 + $0x70] sm:$0xff]
        %v2322 = vld [vmem:[#allocation2 + $0x78] sm:$0xff]
        %v2323 = vld [vmem:[#allocation2 + $0x80] sm:$0xff]
        %v2324 = vld [vmem:[#allocation2 + $0x88] sm:$0xff]
        %v2325 = vld [vmem:[#allocation2 + $0x90] sm:$0xff]
        %v2326 = vld [vmem:[#allocation2 + $0x98] sm:$0xff]
        %v2327 = vld [vmem:[#allocation2 + $0xa0] sm:$0xff]
        %v2328 = vld [vmem:[#allocation2 + $0xa8] sm:$0xff]
        %v2329 = vld [vmem:[#allocation2 + $0xb0] sm:$0xff]
        %v2330 = vld [vmem:[#allocation2 + $0xb8] sm:$0xff]
        %v2331 = vld [vmem:[#allocation2 + $0xc0] sm:$0xff]
        %v2332 = vld [vmem:[#allocation2 + $0xc8] sm:$0xff]
        %v2333 = vld [vmem:[#allocation2 + $0xd0] sm:$0xff]
        %v2334 = vld [vmem:[#allocation2 + $0xd8] sm:$0xff]
        %v2335 = vld [vmem:[#allocation2 + $0xe0] sm:$0xff]
        %v2336 = vld [vmem:[#allocation2 + $0xe8] sm:$0xff]
        %v2337 = vld [vmem:[#allocation2 + $0xf0] sm:$0xff]
        %v2338 = vld [vmem:[#allocation2 + $0xf8] sm:$0xff]
        %s2339 = scalar_lea.vmem %s1, 10
        %v2340 = vld [vmem:[%s2339] sm:$0x3]
        %v2342 = vsel %vm423, %v2291, 0
        %v2345 = vsel %vm423, %v2292, 0
        %v2348 = vsel %vm423, %v2293, 0
        %v2351 = vsel %vm423, %v2294, 0
        %v2354 = vsel %vm423, %v2295, 0
        %v2357 = vsel %vm423, %v2296, 0
        %v2360 = vsel %vm423, %v2297, 0
        %v2363 = vsel %vm423, %v2298, 0
        %v2366 = vsel %vm423, %v2299, 0
        %v2369 = vsel %vm423, %v2300, 0
        %v2372 = vsel %vm423, %v2301, 0
        %v2375 = vsel %vm423, %v2302, 0
        %v2378 = vsel %vm423, %v2303, 0
        %v2381 = vsel %vm423, %v2304, 0
        %v2384 = vsel %vm423, %v2305, 0
        %v2387 = vsel %vm423, %v2306, 0
        %v2390 = vsel %vm472, %v2340, 0
        %2392 = vmatpush.bf16.msra.mxu0 0
        %2393 = vmatpush.bf16.msra.mxu0 0
        %2394 = vmatpush.bf16.msra.mxu0 0
        %2395 = vmatpush.bf16.msra.mxu0 0
        %2396 = vmatpush.bf16.msra.mxu0 0
        %2397 = vmatpush.bf16.msra.mxu0 0
        %2398 = vmatpush.bf16.msra.mxu0 0
        %2399 = vmatpush.bf16.msra.mxu0 %v2390
        %2400 = vmatmul.bf16.gmra.mxu0 %v2342
        %v2401 = vpop.f32.mrf.mxu0
        %v2402 = vadd.f32 0.0, %v2401
        %v2403 = vpop.f32.mrf.mxu0
        %v2404 = vadd.f32 0.0, %v2403
        %2405 = vmatmul.bf16.gmra.mxu0 %v2345
        %v2406 = vpop.f32.mrf.mxu0
        %v2407 = vadd.f32 0.0, %v2406
        %v2408 = vpop.f32.mrf.mxu0
        %v2409 = vadd.f32 0.0, %v2408
        %2410 = vmatmul.bf16.gmra.mxu0 %v2348
        %v2411 = vpop.f32.mrf.mxu0
        %v2412 = vadd.f32 0.0, %v2411
        %v2413 = vpop.f32.mrf.mxu0
        %v2414 = vadd.f32 0.0, %v2413
        %2415 = vmatmul.bf16.gmra.mxu0 %v2351
        %v2416 = vpop.f32.mrf.mxu0
        %v2417 = vadd.f32 0.0, %v2416
        %v2418 = vpop.f32.mrf.mxu0
        %v2419 = vadd.f32 0.0, %v2418
        %2420 = vmatmul.bf16.gmra.mxu0 %v2354
        %v2421 = vpop.f32.mrf.mxu0
        %v2422 = vadd.f32 0.0, %v2421
        %v2423 = vpop.f32.mrf.mxu0
        %v2424 = vadd.f32 0.0, %v2423
        %2425 = vmatmul.bf16.gmra.mxu0 %v2357
        %v2426 = vpop.f32.mrf.mxu0
        %v2427 = vadd.f32 0.0, %v2426
        %v2428 = vpop.f32.mrf.mxu0
        %v2429 = vadd.f32 0.0, %v2428
        %2430 = vmatmul.bf16.gmra.mxu0 %v2360
        %v2431 = vpop.f32.mrf.mxu0
        %v2432 = vadd.f32 0.0, %v2431
        %v2433 = vpop.f32.mrf.mxu0
        %v2434 = vadd.f32 0.0, %v2433
        %2435 = vmatmul.bf16.gmra.mxu0 %v2363
        %v2436 = vpop.f32.mrf.mxu0
        %v2437 = vadd.f32 0.0, %v2436
        %v2438 = vpop.f32.mrf.mxu0
        %v2439 = vadd.f32 0.0, %v2438
        %2440 = vmatmul.bf16.gmra.mxu0 %v2366
        %v2441 = vpop.f32.mrf.mxu0
        %v2442 = vadd.f32 0.0, %v2441
        %v2443 = vpop.f32.mrf.mxu0
        %v2444 = vadd.f32 0.0, %v2443
        %2445 = vmatmul.bf16.gmra.mxu0 %v2369
        %v2446 = vpop.f32.mrf.mxu0
        %v2447 = vadd.f32 0.0, %v2446
        %v2448 = vpop.f32.mrf.mxu0
        %v2449 = vadd.f32 0.0, %v2448
        %2450 = vmatmul.bf16.gmra.mxu0 %v2372
        %v2451 = vpop.f32.mrf.mxu0
        %v2452 = vadd.f32 0.0, %v2451
        %v2453 = vpop.f32.mrf.mxu0
        %v2454 = vadd.f32 0.0, %v2453
        %2455 = vmatmul.bf16.gmra.mxu0 %v2375
        %v2456 = vpop.f32.mrf.mxu0
        %v2457 = vadd.f32 0.0, %v2456
        %v2458 = vpop.f32.mrf.mxu0
        %v2459 = vadd.f32 0.0, %v2458
        %2460 = vmatmul.bf16.gmra.mxu0 %v2378
        %v2461 = vpop.f32.mrf.mxu0
        %v2462 = vadd.f32 0.0, %v2461
        %v2463 = vpop.f32.mrf.mxu0
        %v2464 = vadd.f32 0.0, %v2463
        %2465 = vmatmul.bf16.gmra.mxu0 %v2381
        %v2466 = vpop.f32.mrf.mxu0
        %v2467 = vadd.f32 0.0, %v2466
        %v2468 = vpop.f32.mrf.mxu0
        %v2469 = vadd.f32 0.0, %v2468
        %2470 = vmatmul.bf16.gmra.mxu0 %v2384
        %v2471 = vpop.f32.mrf.mxu0
        %v2472 = vadd.f32 0.0, %v2471
        %v2473 = vpop.f32.mrf.mxu0
        %v2474 = vadd.f32 0.0, %v2473
        %2475 = vmatmul.bf16.gmra.mxu0 %v2387
        %v2476 = vpop.f32.mrf.mxu0
        %v2477 = vadd.f32 0.0, %v2476
        %v2478 = vpop.f32.mrf.mxu0
        %v2479 = vadd.f32 0.0, %v2478
        %2480 = vdwg.mxu0
        %v2481 = vadd.f32 %v2307, %v2402
        %v2482 = vadd.f32 %v2308, %v2404
        %v2483 = vadd.f32 %v2309, %v2407
        %v2484 = vadd.f32 %v2310, %v2409
        %v2485 = vadd.f32 %v2311, %v2412
        %v2486 = vadd.f32 %v2312, %v2414
        %v2487 = vadd.f32 %v2313, %v2417
        %v2488 = vadd.f32 %v2314, %v2419
        %v2489 = vadd.f32 %v2315, %v2422
        %v2490 = vadd.f32 %v2316, %v2424
        %v2491 = vadd.f32 %v2317, %v2427
        %v2492 = vadd.f32 %v2318, %v2429
        %v2493 = vadd.f32 %v2319, %v2432
        %v2494 = vadd.f32 %v2320, %v2434
        %v2495 = vadd.f32 %v2321, %v2437
        %v2496 = vadd.f32 %v2322, %v2439
        %v2497 = vadd.f32 %v2323, %v2442
        %v2498 = vadd.f32 %v2324, %v2444
        %v2499 = vadd.f32 %v2325, %v2447
        %v2500 = vadd.f32 %v2326, %v2449
        %v2501 = vadd.f32 %v2327, %v2452
        %v2502 = vadd.f32 %v2328, %v2454
        %v2503 = vadd.f32 %v2329, %v2457
        %v2504 = vadd.f32 %v2330, %v2459
        %v2505 = vadd.f32 %v2331, %v2462
        %v2506 = vadd.f32 %v2332, %v2464
        %v2507 = vadd.f32 %v2333, %v2467
        %v2508 = vadd.f32 %v2334, %v2469
        %v2509 = vadd.f32 %v2335, %v2472
        %v2510 = vadd.f32 %v2336, %v2474
        %v2511 = vadd.f32 %v2337, %v2477
        %v2512 = vadd.f32 %v2338, %v2479
        %2513 = vst.msk [vmem:[#allocation2] sm:$0xff] %vm242, %v2481
        %2514 = vst.msk [vmem:[#allocation2 + $0x8] sm:$0xff] %vm242, %v2482
        %2515 = vst.msk [vmem:[#allocation2 + $0x10] sm:$0xff] %vm242, %v2483
        %2516 = vst.msk [vmem:[#allocation2 + $0x18] sm:$0xff] %vm242, %v2484
        %2517 = vst.msk [vmem:[#allocation2 + $0x20] sm:$0xff] %vm242, %v2485
        %2518 = vst.msk [vmem:[#allocation2 + $0x28] sm:$0xff] %vm242, %v2486
        %2519 = vst.msk [vmem:[#allocation2 + $0x30] sm:$0xff] %vm242, %v2487
        %2520 = vst.msk [vmem:[#allocation2 + $0x38] sm:$0xff] %vm242, %v2488
        %2521 = vst.msk [vmem:[#allocation2 + $0x40] sm:$0xff] %vm242, %v2489
        %2522 = vst.msk [vmem:[#allocation2 + $0x48] sm:$0xff] %vm242, %v2490
        %2523 = vst.msk [vmem:[#allocation2 + $0x50] sm:$0xff] %vm242, %v2491
        %2524 = vst.msk [vmem:[#allocation2 + $0x58] sm:$0xff] %vm242, %v2492
        %2525 = vst.msk [vmem:[#allocation2 + $0x60] sm:$0xff] %vm242, %v2493
        %2526 = vst.msk [vmem:[#allocation2 + $0x68] sm:$0xff] %vm242, %v2494
        %2527 = vst.msk [vmem:[#allocation2 + $0x70] sm:$0xff] %vm242, %v2495
        %2528 = vst.msk [vmem:[#allocation2 + $0x78] sm:$0xff] %vm242, %v2496
        %2529 = vst.msk [vmem:[#allocation2 + $0x80] sm:$0xff] %vm242, %v2497
        %2530 = vst.msk [vmem:[#allocation2 + $0x88] sm:$0xff] %vm242, %v2498
        %2531 = vst.msk [vmem:[#allocation2 + $0x90] sm:$0xff] %vm242, %v2499
        %2532 = vst.msk [vmem:[#allocation2 + $0x98] sm:$0xff] %vm242, %v2500
        %2533 = vst.msk [vmem:[#allocation2 + $0xa0] sm:$0xff] %vm242, %v2501
        %2534 = vst.msk [vmem:[#allocation2 + $0xa8] sm:$0xff] %vm242, %v2502
        %2535 = vst.msk [vmem:[#allocation2 + $0xb0] sm:$0xff] %vm242, %v2503
        %2536 = vst.msk [vmem:[#allocation2 + $0xb8] sm:$0xff] %vm242, %v2504
        %2537 = vst.msk [vmem:[#allocation2 + $0xc0] sm:$0xff] %vm242, %v2505
        %2538 = vst.msk [vmem:[#allocation2 + $0xc8] sm:$0xff] %vm242, %v2506
        %2539 = vst.msk [vmem:[#allocation2 + $0xd0] sm:$0xff] %vm242, %v2507
        %2540 = vst.msk [vmem:[#allocation2 + $0xd8] sm:$0xff] %vm242, %v2508
        %2541 = vst.msk [vmem:[#allocation2 + $0xe0] sm:$0xff] %vm242, %v2509
        %2542 = vst.msk [vmem:[#allocation2 + $0xe8] sm:$0xff] %vm242, %v2510
        %2543 = vst.msk [vmem:[#allocation2 + $0xf0] sm:$0xff] %vm242, %v2511
        %2544 = vst.msk [vmem:[#allocation2 + $0xf8] sm:$0xff] %vm242, %v2512
        %s2545 = sadd.s32 %s241, 2
        %s2546 = smul.u32 %s2545, 3
        %s2547 = smul.addr %s2546, 4
        %s2548 = scalar_lea.vmem %s222, %s2547
        %v2549 = vld [vmem:[%s2548] sm:$0xf]
        %v2550 = vld [vmem:[%s2548 + $0x4] sm:$0xf]
        %v2551 = vld [vmem:[%s2548 + $0x8] sm:$0x1]
        %v2552 = vld [vmem:[%s2548 + $0xc] sm:$0xf]
        %v2553 = vld [vmem:[%s2548 + $0x10] sm:$0xf]
        %v2554 = vld [vmem:[%s2548 + $0x14] sm:$0x1]
        %v2555 = vld [vmem:[%s2548 + $0x18] sm:$0xf]
        %v2556 = vld [vmem:[%s2548 + $0x1c] sm:$0xf]
        %v2557 = vld [vmem:[%s2548 + $0x20] sm:$0x1]
        %v2558 = vld [vmem:[%s2548 + $0x24] sm:$0xf]
        %v2559 = vld [vmem:[%s2548 + $0x28] sm:$0xf]
        %v2560 = vld [vmem:[%s2548 + $0x2c] sm:$0x1]
        %v2561 = vld [vmem:[%s2548 + $0x30] sm:$0xf]
        %v2562 = vld [vmem:[%s2548 + $0x34] sm:$0xf]
        %v2563 = vld [vmem:[%s2548 + $0x38] sm:$0x1]
        %v2564 = vld [vmem:[%s2548 + $0x3c] sm:$0xf]
        %v2565 = vld [vmem:[%s2548 + $0x40] sm:$0xf]
        %v2566 = vld [vmem:[%s2548 + $0x44] sm:$0x1]
        %v2567 = vld [vmem:[%s2548 + $0x48] sm:$0xf]
        %v2568 = vld [vmem:[%s2548 + $0x4c] sm:$0xf]
        %v2569 = vld [vmem:[%s2548 + $0x50] sm:$0x1]
        %v2570 = vld [vmem:[%s2548 + $0x54] sm:$0xf]
        %v2571 = vld [vmem:[%s2548 + $0x58] sm:$0xf]
        %v2572 = vld [vmem:[%s2548 + $0x5c] sm:$0x1]
        %v2573 = vld [vmem:[%s2548 + $0x60] sm:$0xf]
        %v2574 = vld [vmem:[%s2548 + $0x64] sm:$0xf]
        %v2575 = vld [vmem:[%s2548 + $0x68] sm:$0x1]
        %v2576 = vld [vmem:[%s2548 + $0x6c] sm:$0xf]
        %v2577 = vld [vmem:[%s2548 + $0x70] sm:$0xf]
        %v2578 = vld [vmem:[%s2548 + $0x74] sm:$0x1]
        %v2579 = vld [vmem:[%s2548 + $0x78] sm:$0xf]
        %v2580 = vld [vmem:[%s2548 + $0x7c] sm:$0xf]
        %v2581 = vld [vmem:[%s2548 + $0x80] sm:$0x1]
        %v2582 = vld [vmem:[%s2548 + $0x84] sm:$0xf]
        %v2583 = vld [vmem:[%s2548 + $0x88] sm:$0xf]
        %v2584 = vld [vmem:[%s2548 + $0x8c] sm:$0x1]
        %v2585 = vld [vmem:[%s2548 + $0x90] sm:$0xf]
        %v2586 = vld [vmem:[%s2548 + $0x94] sm:$0xf]
        %v2587 = vld [vmem:[%s2548 + $0x98] sm:$0x1]
        %v2588 = vld [vmem:[%s2548 + $0x9c] sm:$0xf]
        %v2589 = vld [vmem:[%s2548 + $0xa0] sm:$0xf]
        %v2590 = vld [vmem:[%s2548 + $0xa4] sm:$0x1]
        %v2591 = vld [vmem:[%s2548 + $0xa8] sm:$0xf]
        %v2592 = vld [vmem:[%s2548 + $0xac] sm:$0xf]
        %v2593 = vld [vmem:[%s2548 + $0xb0] sm:$0x1]
        %v2594 = vld [vmem:[%s2548 + $0xb4] sm:$0xf]
        %v2595 = vld [vmem:[%s2548 + $0xb8] sm:$0xf]
        %v2596 = vld [vmem:[%s2548 + $0xbc] sm:$0x1]
        %v2597 = vunpack.c.l.bf16 %v2549
        %v2598 = vunpack.c.l.bf16 %v2550
        %v2599 = vunpack.c.l.bf16 %v2551
        %v2600 = vunpack.c.l.bf16 %v2552
        %v2601 = vunpack.c.l.bf16 %v2553
        %v2602 = vunpack.c.l.bf16 %v2554
        %v2603 = vunpack.c.l.bf16 %v2555
        %v2604 = vunpack.c.l.bf16 %v2556
        %v2605 = vunpack.c.l.bf16 %v2557
        %v2606 = vunpack.c.l.bf16 %v2558
        %v2607 = vunpack.c.l.bf16 %v2559
        %v2608 = vunpack.c.l.bf16 %v2560
        %v2609 = vunpack.c.l.bf16 %v2561
        %v2610 = vunpack.c.l.bf16 %v2562
        %v2611 = vunpack.c.l.bf16 %v2563
        %v2612 = vunpack.c.l.bf16 %v2564
        %v2613 = vunpack.c.l.bf16 %v2565
        %v2614 = vunpack.c.l.bf16 %v2566
        %v2615 = vunpack.c.l.bf16 %v2567
        %v2616 = vunpack.c.l.bf16 %v2568
        %v2617 = vunpack.c.l.bf16 %v2569
        %v2618 = vunpack.c.l.bf16 %v2570
        %v2619 = vunpack.c.l.bf16 %v2571
        %v2620 = vunpack.c.l.bf16 %v2572
        %v2621 = vunpack.c.l.bf16 %v2573
        %v2622 = vunpack.c.l.bf16 %v2574
        %v2623 = vunpack.c.l.bf16 %v2575
        %v2624 = vunpack.c.l.bf16 %v2576
        %v2625 = vunpack.c.l.bf16 %v2577
        %v2626 = vunpack.c.l.bf16 %v2578
        %v2627 = vunpack.c.l.bf16 %v2579
        %v2628 = vunpack.c.l.bf16 %v2580
        %v2629 = vunpack.c.l.bf16 %v2581
        %v2630 = vunpack.c.l.bf16 %v2582
        %v2631 = vunpack.c.l.bf16 %v2583
        %v2632 = vunpack.c.l.bf16 %v2584
        %v2633 = vunpack.c.l.bf16 %v2585
        %v2634 = vunpack.c.l.bf16 %v2586
        %v2635 = vunpack.c.l.bf16 %v2587
        %v2636 = vunpack.c.l.bf16 %v2588
        %v2637 = vunpack.c.l.bf16 %v2589
        %v2638 = vunpack.c.l.bf16 %v2590
        %v2639 = vunpack.c.l.bf16 %v2591
        %v2640 = vunpack.c.l.bf16 %v2592
        %v2641 = vunpack.c.l.bf16 %v2593
        %v2642 = vunpack.c.l.bf16 %v2594
        %v2643 = vunpack.c.l.bf16 %v2595
        %v2644 = vunpack.c.l.bf16 %v2596
        %v2645 = vpack.c.bf16 %v2598, %v2597
        %v2646 = vpack.c.bf16 %v2601, %v2600
        %v2647 = vpack.c.bf16 %v2604, %v2603
        %v2648 = vpack.c.bf16 %v2607, %v2606
        %v2649 = vpack.c.bf16 %v2610, %v2609
        %v2650 = vpack.c.bf16 %v2613, %v2612
        %v2651 = vpack.c.bf16 %v2616, %v2615
        %v2652 = vpack.c.bf16 %v2619, %v2618
        %v2653 = vpack.c.bf16 %v2622, %v2621
        %v2654 = vpack.c.bf16 %v2625, %v2624
        %v2655 = vpack.c.bf16 %v2628, %v2627
        %v2656 = vpack.c.bf16 %v2631, %v2630
        %v2657 = vpack.c.bf16 %v2634, %v2633
        %v2658 = vpack.c.bf16 %v2637, %v2636
        %v2659 = vpack.c.bf16 %v2640, %v2639
        %v2660 = vpack.c.bf16 %v2643, %v2642
        %v2661 = vld [vmem:[#allocation2] sm:$0xff]
        %v2662 = vld [vmem:[#allocation2 + $0x8] sm:$0xff]
        %v2663 = vld [vmem:[#allocation2 + $0x10] sm:$0xff]
        %v2664 = vld [vmem:[#allocation2 + $0x18] sm:$0xff]
        %v2665 = vld [vmem:[#allocation2 + $0x20] sm:$0xff]
        %v2666 = vld [vmem:[#allocation2 + $0x28] sm:$0xff]
        %v2667 = vld [vmem:[#allocation2 + $0x30] sm:$0xff]
        %v2668 = vld [vmem:[#allocation2 + $0x38] sm:$0xff]
        %v2669 = vld [vmem:[#allocation2 + $0x40] sm:$0xff]
        %v2670 = vld [vmem:[#allocation2 + $0x48] sm:$0xff]
        %v2671 = vld [vmem:[#allocation2 + $0x50] sm:$0xff]
        %v2672 = vld [vmem:[#allocation2 + $0x58] sm:$0xff]
        %v2673 = vld [vmem:[#allocation2 + $0x60] sm:$0xff]
        %v2674 = vld [vmem:[#allocation2 + $0x68] sm:$0xff]
        %v2675 = vld [vmem:[#allocation2 + $0x70] sm:$0xff]
        %v2676 = vld [vmem:[#allocation2 + $0x78] sm:$0xff]
        %v2677 = vld [vmem:[#allocation2 + $0x80] sm:$0xff]
        %v2678 = vld [vmem:[#allocation2 + $0x88] sm:$0xff]
        %v2679 = vld [vmem:[#allocation2 + $0x90] sm:$0xff]
        %v2680 = vld [vmem:[#allocation2 + $0x98] sm:$0xff]
        %v2681 = vld [vmem:[#allocation2 + $0xa0] sm:$0xff]
        %v2682 = vld [vmem:[#allocation2 + $0xa8] sm:$0xff]
        %v2683 = vld [vmem:[#allocation2 + $0xb0] sm:$0xff]
        %v2684 = vld [vmem:[#allocation2 + $0xb8] sm:$0xff]
        %v2685 = vld [vmem:[#allocation2 + $0xc0] sm:$0xff]
        %v2686 = vld [vmem:[#allocation2 + $0xc8] sm:$0xff]
        %v2687 = vld [vmem:[#allocation2 + $0xd0] sm:$0xff]
        %v2688 = vld [vmem:[#allocation2 + $0xd8] sm:$0xff]
        %v2689 = vld [vmem:[#allocation2 + $0xe0] sm:$0xff]
        %v2690 = vld [vmem:[#allocation2 + $0xe8] sm:$0xff]
        %v2691 = vld [vmem:[#allocation2 + $0xf0] sm:$0xff]
        %v2692 = vld [vmem:[#allocation2 + $0xf8] sm:$0xff]
        %s2693 = scalar_lea.vmem %s1, 12
        %v2694 = vld [vmem:[%s2693] sm:$0x3]
        %v2696 = vsel %vm423, %v2645, 0
        %v2699 = vsel %vm423, %v2646, 0
        %v2702 = vsel %vm423, %v2647, 0
        %v2705 = vsel %vm423, %v2648, 0
        %v2708 = vsel %vm423, %v2649, 0
        %v2711 = vsel %vm423, %v2650, 0
        %v2714 = vsel %vm423, %v2651, 0
        %v2717 = vsel %vm423, %v2652, 0
        %v2720 = vsel %vm423, %v2653, 0
        %v2723 = vsel %vm423, %v2654, 0
        %v2726 = vsel %vm423, %v2655, 0
        %v2729 = vsel %vm423, %v2656, 0
        %v2732 = vsel %vm423, %v2657, 0
        %v2735 = vsel %vm423, %v2658, 0
        %v2738 = vsel %vm423, %v2659, 0
        %v2741 = vsel %vm423, %v2660, 0
        %v2744 = vsel %vm472, %v2694, 0
        %2746 = vmatpush.bf16.msra.mxu0 0
        %2747 = vmatpush.bf16.msra.mxu0 0
        %2748 = vmatpush.bf16.msra.mxu0 0
        %2749 = vmatpush.bf16.msra.mxu0 0
        %2750 = vmatpush.bf16.msra.mxu0 0
        %2751 = vmatpush.bf16.msra.mxu0 0
        %2752 = vmatpush.bf16.msra.mxu0 0
        %2753 = vmatpush.bf16.msra.mxu0 %v2744
        %2754 = vmatmul.bf16.gmra.mxu0 %v2696
        %v2755 = vpop.f32.mrf.mxu0
        %v2756 = vadd.f32 0.0, %v2755
        %v2757 = vpop.f32.mrf.mxu0
        %v2758 = vadd.f32 0.0, %v2757
        %2759 = vmatmul.bf16.gmra.mxu0 %v2699
        %v2760 = vpop.f32.mrf.mxu0
        %v2761 = vadd.f32 0.0, %v2760
        %v2762 = vpop.f32.mrf.mxu0
        %v2763 = vadd.f32 0.0, %v2762
        %2764 = vmatmul.bf16.gmra.mxu0 %v2702
        %v2765 = vpop.f32.mrf.mxu0
        %v2766 = vadd.f32 0.0, %v2765
        %v2767 = vpop.f32.mrf.mxu0
        %v2768 = vadd.f32 0.0, %v2767
        %2769 = vmatmul.bf16.gmra.mxu0 %v2705
        %v2770 = vpop.f32.mrf.mxu0
        %v2771 = vadd.f32 0.0, %v2770
        %v2772 = vpop.f32.mrf.mxu0
        %v2773 = vadd.f32 0.0, %v2772
        %2774 = vmatmul.bf16.gmra.mxu0 %v2708
        %v2775 = vpop.f32.mrf.mxu0
        %v2776 = vadd.f32 0.0, %v2775
        %v2777 = vpop.f32.mrf.mxu0
        %v2778 = vadd.f32 0.0, %v2777
        %2779 = vmatmul.bf16.gmra.mxu0 %v2711
        %v2780 = vpop.f32.mrf.mxu0
        %v2781 = vadd.f32 0.0, %v2780
        %v2782 = vpop.f32.mrf.mxu0
        %v2783 = vadd.f32 0.0, %v2782
        %2784 = vmatmul.bf16.gmra.mxu0 %v2714
        %v2785 = vpop.f32.mrf.mxu0
        %v2786 = vadd.f32 0.0, %v2785
        %v2787 = vpop.f32.mrf.mxu0
        %v2788 = vadd.f32 0.0, %v2787
        %2789 = vmatmul.bf16.gmra.mxu0 %v2717
        %v2790 = vpop.f32.mrf.mxu0
        %v2791 = vadd.f32 0.0, %v2790
        %v2792 = vpop.f32.mrf.mxu0
        %v2793 = vadd.f32 0.0, %v2792
        %2794 = vmatmul.bf16.gmra.mxu0 %v2720
        %v2795 = vpop.f32.mrf.mxu0
        %v2796 = vadd.f32 0.0, %v2795
        %v2797 = vpop.f32.mrf.mxu0
        %v2798 = vadd.f32 0.0, %v2797
        %2799 = vmatmul.bf16.gmra.mxu0 %v2723
        %v2800 = vpop.f32.mrf.mxu0
        %v2801 = vadd.f32 0.0, %v2800
        %v2802 = vpop.f32.mrf.mxu0
        %v2803 = vadd.f32 0.0, %v2802
        %2804 = vmatmul.bf16.gmra.mxu0 %v2726
        %v2805 = vpop.f32.mrf.mxu0
        %v2806 = vadd.f32 0.0, %v2805
        %v2807 = vpop.f32.mrf.mxu0
        %v2808 = vadd.f32 0.0, %v2807
        %2809 = vmatmul.bf16.gmra.mxu0 %v2729
        %v2810 = vpop.f32.mrf.mxu0
        %v2811 = vadd.f32 0.0, %v2810
        %v2812 = vpop.f32.mrf.mxu0
        %v2813 = vadd.f32 0.0, %v2812
        %2814 = vmatmul.bf16.gmra.mxu0 %v2732
        %v2815 = vpop.f32.mrf.mxu0
        %v2816 = vadd.f32 0.0, %v2815
        %v2817 = vpop.f32.mrf.mxu0
        %v2818 = vadd.f32 0.0, %v2817
        %2819 = vmatmul.bf16.gmra.mxu0 %v2735
        %v2820 = vpop.f32.mrf.mxu0
        %v2821 = vadd.f32 0.0, %v2820
        %v2822 = vpop.f32.mrf.mxu0
        %v2823 = vadd.f32 0.0, %v2822
        %2824 = vmatmul.bf16.gmra.mxu0 %v2738
        %v2825 = vpop.f32.mrf.mxu0
        %v2826 = vadd.f32 0.0, %v2825
        %v2827 = vpop.f32.mrf.mxu0
        %v2828 = vadd.f32 0.0, %v2827
        %2829 = vmatmul.bf16.gmra.mxu0 %v2741
        %v2830 = vpop.f32.mrf.mxu0
        %v2831 = vadd.f32 0.0, %v2830
        %v2832 = vpop.f32.mrf.mxu0
        %v2833 = vadd.f32 0.0, %v2832
        %2834 = vdwg.mxu0
        %v2835 = vadd.f32 %v2661, %v2756
        %v2836 = vadd.f32 %v2662, %v2758
        %v2837 = vadd.f32 %v2663, %v2761
        %v2838 = vadd.f32 %v2664, %v2763
        %v2839 = vadd.f32 %v2665, %v2766
        %v2840 = vadd.f32 %v2666, %v2768
        %v2841 = vadd.f32 %v2667, %v2771
        %v2842 = vadd.f32 %v2668, %v2773
        %v2843 = vadd.f32 %v2669, %v2776
        %v2844 = vadd.f32 %v2670, %v2778
        %v2845 = vadd.f32 %v2671, %v2781
        %v2846 = vadd.f32 %v2672, %v2783
        %v2847 = vadd.f32 %v2673, %v2786
        %v2848 = vadd.f32 %v2674, %v2788
        %v2849 = vadd.f32 %v2675, %v2791
        %v2850 = vadd.f32 %v2676, %v2793
        %v2851 = vadd.f32 %v2677, %v2796
        %v2852 = vadd.f32 %v2678, %v2798
        %v2853 = vadd.f32 %v2679, %v2801
        %v2854 = vadd.f32 %v2680, %v2803
        %v2855 = vadd.f32 %v2681, %v2806
        %v2856 = vadd.f32 %v2682, %v2808
        %v2857 = vadd.f32 %v2683, %v2811
        %v2858 = vadd.f32 %v2684, %v2813
        %v2859 = vadd.f32 %v2685, %v2816
        %v2860 = vadd.f32 %v2686, %v2818
        %v2861 = vadd.f32 %v2687, %v2821
        %v2862 = vadd.f32 %v2688, %v2823
        %v2863 = vadd.f32 %v2689, %v2826
        %v2864 = vadd.f32 %v2690, %v2828
        %v2865 = vadd.f32 %v2691, %v2831
        %v2866 = vadd.f32 %v2692, %v2833
        %2867 = vst.msk [vmem:[#allocation2] sm:$0xff] %vm242, %v2835
        %2868 = vst.msk [vmem:[#allocation2 + $0x8] sm:$0xff] %vm242, %v2836
        %2869 = vst.msk [vmem:[#allocation2 + $0x10] sm:$0xff] %vm242, %v2837
        %2870 = vst.msk [vmem:[#allocation2 + $0x18] sm:$0xff] %vm242, %v2838
        %2871 = vst.msk [vmem:[#allocation2 + $0x20] sm:$0xff] %vm242, %v2839
        %2872 = vst.msk [vmem:[#allocation2 + $0x28] sm:$0xff] %vm242, %v2840
        %2873 = vst.msk [vmem:[#allocation2 + $0x30] sm:$0xff] %vm242, %v2841
        %2874 = vst.msk [vmem:[#allocation2 + $0x38] sm:$0xff] %vm242, %v2842
        %2875 = vst.msk [vmem:[#allocation2 + $0x40] sm:$0xff] %vm242, %v2843
        %2876 = vst.msk [vmem:[#allocation2 + $0x48] sm:$0xff] %vm242, %v2844
        %2877 = vst.msk [vmem:[#allocation2 + $0x50] sm:$0xff] %vm242, %v2845
        %2878 = vst.msk [vmem:[#allocation2 + $0x58] sm:$0xff] %vm242, %v2846
        %2879 = vst.msk [vmem:[#allocation2 + $0x60] sm:$0xff] %vm242, %v2847
        %2880 = vst.msk [vmem:[#allocation2 + $0x68] sm:$0xff] %vm242, %v2848
        %2881 = vst.msk [vmem:[#allocation2 + $0x70] sm:$0xff] %vm242, %v2849
        %2882 = vst.msk [vmem:[#allocation2 + $0x78] sm:$0xff] %vm242, %v2850
        %2883 = vst.msk [vmem:[#allocation2 + $0x80] sm:$0xff] %vm242, %v2851
        %2884 = vst.msk [vmem:[#allocation2 + $0x88] sm:$0xff] %vm242, %v2852
        %2885 = vst.msk [vmem:[#allocation2 + $0x90] sm:$0xff] %vm242, %v2853
        %2886 = vst.msk [vmem:[#allocation2 + $0x98] sm:$0xff] %vm242, %v2854
        %2887 = vst.msk [vmem:[#allocation2 + $0xa0] sm:$0xff] %vm242, %v2855
        %2888 = vst.msk [vmem:[#allocation2 + $0xa8] sm:$0xff] %vm242, %v2856
        %2889 = vst.msk [vmem:[#allocation2 + $0xb0] sm:$0xff] %vm242, %v2857
        %2890 = vst.msk [vmem:[#allocation2 + $0xb8] sm:$0xff] %vm242, %v2858
        %2891 = vst.msk [vmem:[#allocation2 + $0xc0] sm:$0xff] %vm242, %v2859
        %2892 = vst.msk [vmem:[#allocation2 + $0xc8] sm:$0xff] %vm242, %v2860
        %2893 = vst.msk [vmem:[#allocation2 + $0xd0] sm:$0xff] %vm242, %v2861
        %2894 = vst.msk [vmem:[#allocation2 + $0xd8] sm:$0xff] %vm242, %v2862
        %2895 = vst.msk [vmem:[#allocation2 + $0xe0] sm:$0xff] %vm242, %v2863
        %2896 = vst.msk [vmem:[#allocation2 + $0xe8] sm:$0xff] %vm242, %v2864
        %2897 = vst.msk [vmem:[#allocation2 + $0xf0] sm:$0xff] %vm242, %v2865
        %2898 = vst.msk [vmem:[#allocation2 + $0xf8] sm:$0xff] %vm242, %v2866
        %v2947 = vrot.slane %v2597, 1
        %v2948 = vrot.slane %v2598, 1
        %v2949 = vsel %vm677, %v2947, %v2948
        %v2950 = vrot.slane %v2599, 1
        %v2951 = vsel %vm677, %v2948, %v2950
        %v2952 = vrot.slane %v2600, 1
        %v2953 = vrot.slane %v2601, 1
        %v2954 = vsel %vm677, %v2952, %v2953
        %v2955 = vrot.slane %v2602, 1
        %v2956 = vsel %vm677, %v2953, %v2955
        %v2957 = vrot.slane %v2603, 1
        %v2958 = vrot.slane %v2604, 1
        %v2959 = vsel %vm677, %v2957, %v2958
        %v2960 = vrot.slane %v2605, 1
        %v2961 = vsel %vm677, %v2958, %v2960
        %v2962 = vrot.slane %v2606, 1
        %v2963 = vrot.slane %v2607, 1
        %v2964 = vsel %vm677, %v2962, %v2963
        %v2965 = vrot.slane %v2608, 1
        %v2966 = vsel %vm677, %v2963, %v2965
        %v2967 = vrot.slane %v2609, 1
        %v2968 = vrot.slane %v2610, 1
        %v2969 = vsel %vm677, %v2967, %v2968
        %v2970 = vrot.slane %v2611, 1
        %v2971 = vsel %vm677, %v2968, %v2970
        %v2972 = vrot.slane %v2612, 1
        %v2973 = vrot.slane %v2613, 1
        %v2974 = vsel %vm677, %v2972, %v2973
        %v2975 = vrot.slane %v2614, 1
        %v2976 = vsel %vm677, %v2973, %v2975
        %v2977 = vrot.slane %v2615, 1
        %v2978 = vrot.slane %v2616, 1
        %v2979 = vsel %vm677, %v2977, %v2978
        %v2980 = vrot.slane %v2617, 1
        %v2981 = vsel %vm677, %v2978, %v2980
        %v2982 = vrot.slane %v2618, 1
        %v2983 = vrot.slane %v2619, 1
        %v2984 = vsel %vm677, %v2982, %v2983
        %v2985 = vrot.slane %v2620, 1
        %v2986 = vsel %vm677, %v2983, %v2985
        %v2987 = vrot.slane %v2621, 1
        %v2988 = vrot.slane %v2622, 1
        %v2989 = vsel %vm677, %v2987, %v2988
        %v2990 = vrot.slane %v2623, 1
        %v2991 = vsel %vm677, %v2988, %v2990
        %v2992 = vrot.slane %v2624, 1
        %v2993 = vrot.slane %v2625, 1
        %v2994 = vsel %vm677, %v2992, %v2993
        %v2995 = vrot.slane %v2626, 1
        %v2996 = vsel %vm677, %v2993, %v2995
        %v2997 = vrot.slane %v2627, 1
        %v2998 = vrot.slane %v2628, 1
        %v2999 = vsel %vm677, %v2997, %v2998
        %v3000 = vrot.slane %v2629, 1
        %v3001 = vsel %vm677, %v2998, %v3000
        %v3002 = vrot.slane %v2630, 1
        %v3003 = vrot.slane %v2631, 1
        %v3004 = vsel %vm677, %v3002, %v3003
        %v3005 = vrot.slane %v2632, 1
        %v3006 = vsel %vm677, %v3003, %v3005
        %v3007 = vrot.slane %v2633, 1
        %v3008 = vrot.slane %v2634, 1
        %v3009 = vsel %vm677, %v3007, %v3008
        %v3010 = vrot.slane %v2635, 1
        %v3011 = vsel %vm677, %v3008, %v3010
        %v3012 = vrot.slane %v2636, 1
        %v3013 = vrot.slane %v2637, 1
        %v3014 = vsel %vm677, %v3012, %v3013
        %v3015 = vrot.slane %v2638, 1
        %v3016 = vsel %vm677, %v3013, %v3015
        %v3017 = vrot.slane %v2639, 1
        %v3018 = vrot.slane %v2640, 1
        %v3019 = vsel %vm677, %v3017, %v3018
        %v3020 = vrot.slane %v2641, 1
        %v3021 = vsel %vm677, %v3018, %v3020
        %v3022 = vrot.slane %v2642, 1
        %v3023 = vrot.slane %v2643, 1
        %v3024 = vsel %vm677, %v3022, %v3023
        %v3025 = vrot.slane %v2644, 1
        %v3026 = vsel %vm677, %v3023, %v3025
        %v3059 = vpack.c.bf16 %v2951, %v2949
        %v3060 = vpack.c.bf16 %v2956, %v2954
        %v3061 = vpack.c.bf16 %v2961, %v2959
        %v3062 = vpack.c.bf16 %v2966, %v2964
        %v3063 = vpack.c.bf16 %v2971, %v2969
        %v3064 = vpack.c.bf16 %v2976, %v2974
        %v3065 = vpack.c.bf16 %v2981, %v2979
        %v3066 = vpack.c.bf16 %v2986, %v2984
        %v3067 = vpack.c.bf16 %v2991, %v2989
        %v3068 = vpack.c.bf16 %v2996, %v2994
        %v3069 = vpack.c.bf16 %v3001, %v2999
        %v3070 = vpack.c.bf16 %v3006, %v3004
        %v3071 = vpack.c.bf16 %v3011, %v3009
        %v3072 = vpack.c.bf16 %v3016, %v3014
        %v3073 = vpack.c.bf16 %v3021, %v3019
        %v3074 = vpack.c.bf16 %v3026, %v3024
        %v3075 = vld [vmem:[#allocation2] sm:$0xff]
        %v3076 = vld [vmem:[#allocation2 + $0x8] sm:$0xff]
        %v3077 = vld [vmem:[#allocation2 + $0x10] sm:$0xff]
        %v3078 = vld [vmem:[#allocation2 + $0x18] sm:$0xff]
        %v3079 = vld [vmem:[#allocation2 + $0x20] sm:$0xff]
        %v3080 = vld [vmem:[#allocation2 + $0x28] sm:$0xff]
        %v3081 = vld [vmem:[#allocation2 + $0x30] sm:$0xff]
        %v3082 = vld [vmem:[#allocation2 + $0x38] sm:$0xff]
        %v3083 = vld [vmem:[#allocation2 + $0x40] sm:$0xff]
        %v3084 = vld [vmem:[#allocation2 + $0x48] sm:$0xff]
        %v3085 = vld [vmem:[#allocation2 + $0x50] sm:$0xff]
        %v3086 = vld [vmem:[#allocation2 + $0x58] sm:$0xff]
        %v3087 = vld [vmem:[#allocation2 + $0x60] sm:$0xff]
        %v3088 = vld [vmem:[#allocation2 + $0x68] sm:$0xff]
        %v3089 = vld [vmem:[#allocation2 + $0x70] sm:$0xff]
        %v3090 = vld [vmem:[#allocation2 + $0x78] sm:$0xff]
        %v3091 = vld [vmem:[#allocation2 + $0x80] sm:$0xff]
        %v3092 = vld [vmem:[#allocation2 + $0x88] sm:$0xff]
        %v3093 = vld [vmem:[#allocation2 + $0x90] sm:$0xff]
        %v3094 = vld [vmem:[#allocation2 + $0x98] sm:$0xff]
        %v3095 = vld [vmem:[#allocation2 + $0xa0] sm:$0xff]
        %v3096 = vld [vmem:[#allocation2 + $0xa8] sm:$0xff]
        %v3097 = vld [vmem:[#allocation2 + $0xb0] sm:$0xff]
        %v3098 = vld [vmem:[#allocation2 + $0xb8] sm:$0xff]
        %v3099 = vld [vmem:[#allocation2 + $0xc0] sm:$0xff]
        %v3100 = vld [vmem:[#allocation2 + $0xc8] sm:$0xff]
        %v3101 = vld [vmem:[#allocation2 + $0xd0] sm:$0xff]
        %v3102 = vld [vmem:[#allocation2 + $0xd8] sm:$0xff]
        %v3103 = vld [vmem:[#allocation2 + $0xe0] sm:$0xff]
        %v3104 = vld [vmem:[#allocation2 + $0xe8] sm:$0xff]
        %v3105 = vld [vmem:[#allocation2 + $0xf0] sm:$0xff]
        %v3106 = vld [vmem:[#allocation2 + $0xf8] sm:$0xff]
        %s3107 = scalar_lea.vmem %s1, 14
        %v3108 = vld [vmem:[%s3107] sm:$0x3]
        %v3110 = vsel %vm423, %v3059, 0
        %v3113 = vsel %vm423, %v3060, 0
        %v3116 = vsel %vm423, %v3061, 0
        %v3119 = vsel %vm423, %v3062, 0
        %v3122 = vsel %vm423, %v3063, 0
        %v3125 = vsel %vm423, %v3064, 0
        %v3128 = vsel %vm423, %v3065, 0
        %v3131 = vsel %vm423, %v3066, 0
        %v3134 = vsel %vm423, %v3067, 0
        %v3137 = vsel %vm423, %v3068, 0
        %v3140 = vsel %vm423, %v3069, 0
        %v3143 = vsel %vm423, %v3070, 0
        %v3146 = vsel %vm423, %v3071, 0
        %v3149 = vsel %vm423, %v3072, 0
        %v3152 = vsel %vm423, %v3073, 0
        %v3155 = vsel %vm423, %v3074, 0
        %v3158 = vsel %vm472, %v3108, 0
        %3160 = vmatpush.bf16.msra.mxu0 0
        %3161 = vmatpush.bf16.msra.mxu0 0
        %3162 = vmatpush.bf16.msra.mxu0 0
        %3163 = vmatpush.bf16.msra.mxu0 0
        %3164 = vmatpush.bf16.msra.mxu0 0
        %3165 = vmatpush.bf16.msra.mxu0 0
        %3166 = vmatpush.bf16.msra.mxu0 0
        %3167 = vmatpush.bf16.msra.mxu0 %v3158
        %3168 = vmatmul.bf16.gmra.mxu0 %v3110
        %v3169 = vpop.f32.mrf.mxu0
        %v3170 = vadd.f32 0.0, %v3169
        %v3171 = vpop.f32.mrf.mxu0
        %v3172 = vadd.f32 0.0, %v3171
        %3173 = vmatmul.bf16.gmra.mxu0 %v3113
        %v3174 = vpop.f32.mrf.mxu0
        %v3175 = vadd.f32 0.0, %v3174
        %v3176 = vpop.f32.mrf.mxu0
        %v3177 = vadd.f32 0.0, %v3176
        %3178 = vmatmul.bf16.gmra.mxu0 %v3116
        %v3179 = vpop.f32.mrf.mxu0
        %v3180 = vadd.f32 0.0, %v3179
        %v3181 = vpop.f32.mrf.mxu0
        %v3182 = vadd.f32 0.0, %v3181
        %3183 = vmatmul.bf16.gmra.mxu0 %v3119
        %v3184 = vpop.f32.mrf.mxu0
        %v3185 = vadd.f32 0.0, %v3184
        %v3186 = vpop.f32.mrf.mxu0
        %v3187 = vadd.f32 0.0, %v3186
        %3188 = vmatmul.bf16.gmra.mxu0 %v3122
        %v3189 = vpop.f32.mrf.mxu0
        %v3190 = vadd.f32 0.0, %v3189
        %v3191 = vpop.f32.mrf.mxu0
        %v3192 = vadd.f32 0.0, %v3191
        %3193 = vmatmul.bf16.gmra.mxu0 %v3125
        %v3194 = vpop.f32.mrf.mxu0
        %v3195 = vadd.f32 0.0, %v3194
        %v3196 = vpop.f32.mrf.mxu0
        %v3197 = vadd.f32 0.0, %v3196
        %3198 = vmatmul.bf16.gmra.mxu0 %v3128
        %v3199 = vpop.f32.mrf.mxu0
        %v3200 = vadd.f32 0.0, %v3199
        %v3201 = vpop.f32.mrf.mxu0
        %v3202 = vadd.f32 0.0, %v3201
        %3203 = vmatmul.bf16.gmra.mxu0 %v3131
        %v3204 = vpop.f32.mrf.mxu0
        %v3205 = vadd.f32 0.0, %v3204
        %v3206 = vpop.f32.mrf.mxu0
        %v3207 = vadd.f32 0.0, %v3206
        %3208 = vmatmul.bf16.gmra.mxu0 %v3134
        %v3209 = vpop.f32.mrf.mxu0
        %v3210 = vadd.f32 0.0, %v3209
        %v3211 = vpop.f32.mrf.mxu0
        %v3212 = vadd.f32 0.0, %v3211
        %3213 = vmatmul.bf16.gmra.mxu0 %v3137
        %v3214 = vpop.f32.mrf.mxu0
        %v3215 = vadd.f32 0.0, %v3214
        %v3216 = vpop.f32.mrf.mxu0
        %v3217 = vadd.f32 0.0, %v3216
        %3218 = vmatmul.bf16.gmra.mxu0 %v3140
        %v3219 = vpop.f32.mrf.mxu0
        %v3220 = vadd.f32 0.0, %v3219
        %v3221 = vpop.f32.mrf.mxu0
        %v3222 = vadd.f32 0.0, %v3221
        %3223 = vmatmul.bf16.gmra.mxu0 %v3143
        %v3224 = vpop.f32.mrf.mxu0
        %v3225 = vadd.f32 0.0, %v3224
        %v3226 = vpop.f32.mrf.mxu0
        %v3227 = vadd.f32 0.0, %v3226
        %3228 = vmatmul.bf16.gmra.mxu0 %v3146
        %v3229 = vpop.f32.mrf.mxu0
        %v3230 = vadd.f32 0.0, %v3229
        %v3231 = vpop.f32.mrf.mxu0
        %v3232 = vadd.f32 0.0, %v3231
        %3233 = vmatmul.bf16.gmra.mxu0 %v3149
        %v3234 = vpop.f32.mrf.mxu0
        %v3235 = vadd.f32 0.0, %v3234
        %v3236 = vpop.f32.mrf.mxu0
        %v3237 = vadd.f32 0.0, %v3236
        %3238 = vmatmul.bf16.gmra.mxu0 %v3152
        %v3239 = vpop.f32.mrf.mxu0
        %v3240 = vadd.f32 0.0, %v3239
        %v3241 = vpop.f32.mrf.mxu0
        %v3242 = vadd.f32 0.0, %v3241
        %3243 = vmatmul.bf16.gmra.mxu0 %v3155
        %v3244 = vpop.f32.mrf.mxu0
        %v3245 = vadd.f32 0.0, %v3244
        %v3246 = vpop.f32.mrf.mxu0
        %v3247 = vadd.f32 0.0, %v3246
        %3248 = vdwg.mxu0
        %v3249 = vadd.f32 %v3075, %v3170
        %v3250 = vadd.f32 %v3076, %v3172
        %v3251 = vadd.f32 %v3077, %v3175
        %v3252 = vadd.f32 %v3078, %v3177
        %v3253 = vadd.f32 %v3079, %v3180
        %v3254 = vadd.f32 %v3080, %v3182
        %v3255 = vadd.f32 %v3081, %v3185
        %v3256 = vadd.f32 %v3082, %v3187
        %v3257 = vadd.f32 %v3083, %v3190
        %v3258 = vadd.f32 %v3084, %v3192
        %v3259 = vadd.f32 %v3085, %v3195
        %v3260 = vadd.f32 %v3086, %v3197
        %v3261 = vadd.f32 %v3087, %v3200
        %v3262 = vadd.f32 %v3088, %v3202
        %v3263 = vadd.f32 %v3089, %v3205
        %v3264 = vadd.f32 %v3090, %v3207
        %v3265 = vadd.f32 %v3091, %v3210
        %v3266 = vadd.f32 %v3092, %v3212
        %v3267 = vadd.f32 %v3093, %v3215
        %v3268 = vadd.f32 %v3094, %v3217
        %v3269 = vadd.f32 %v3095, %v3220
        %v3270 = vadd.f32 %v3096, %v3222
        %v3271 = vadd.f32 %v3097, %v3225
        %v3272 = vadd.f32 %v3098, %v3227
        %v3273 = vadd.f32 %v3099, %v3230
        %v3274 = vadd.f32 %v3100, %v3232
        %v3275 = vadd.f32 %v3101, %v3235
        %v3276 = vadd.f32 %v3102, %v3237
        %v3277 = vadd.f32 %v3103, %v3240
        %v3278 = vadd.f32 %v3104, %v3242
        %v3279 = vadd.f32 %v3105, %v3245
        %v3280 = vadd.f32 %v3106, %v3247
        %3281 = vst.msk [vmem:[#allocation2] sm:$0xff] %vm242, %v3249
        %3282 = vst.msk [vmem:[#allocation2 + $0x8] sm:$0xff] %vm242, %v3250
        %3283 = vst.msk [vmem:[#allocation2 + $0x10] sm:$0xff] %vm242, %v3251
        %3284 = vst.msk [vmem:[#allocation2 + $0x18] sm:$0xff] %vm242, %v3252
        %3285 = vst.msk [vmem:[#allocation2 + $0x20] sm:$0xff] %vm242, %v3253
        %3286 = vst.msk [vmem:[#allocation2 + $0x28] sm:$0xff] %vm242, %v3254
        %3287 = vst.msk [vmem:[#allocation2 + $0x30] sm:$0xff] %vm242, %v3255
        %3288 = vst.msk [vmem:[#allocation2 + $0x38] sm:$0xff] %vm242, %v3256
        %3289 = vst.msk [vmem:[#allocation2 + $0x40] sm:$0xff] %vm242, %v3257
        %3290 = vst.msk [vmem:[#allocation2 + $0x48] sm:$0xff] %vm242, %v3258
        %3291 = vst.msk [vmem:[#allocation2 + $0x50] sm:$0xff] %vm242, %v3259
        %3292 = vst.msk [vmem:[#allocation2 + $0x58] sm:$0xff] %vm242, %v3260
        %3293 = vst.msk [vmem:[#allocation2 + $0x60] sm:$0xff] %vm242, %v3261
        %3294 = vst.msk [vmem:[#allocation2 + $0x68] sm:$0xff] %vm242, %v3262
        %3295 = vst.msk [vmem:[#allocation2 + $0x70] sm:$0xff] %vm242, %v3263
        %3296 = vst.msk [vmem:[#allocation2 + $0x78] sm:$0xff] %vm242, %v3264
        %3297 = vst.msk [vmem:[#allocation2 + $0x80] sm:$0xff] %vm242, %v3265
        %3298 = vst.msk [vmem:[#allocation2 + $0x88] sm:$0xff] %vm242, %v3266
        %3299 = vst.msk [vmem:[#allocation2 + $0x90] sm:$0xff] %vm242, %v3267
        %3300 = vst.msk [vmem:[#allocation2 + $0x98] sm:$0xff] %vm242, %v3268
        %3301 = vst.msk [vmem:[#allocation2 + $0xa0] sm:$0xff] %vm242, %v3269
        %3302 = vst.msk [vmem:[#allocation2 + $0xa8] sm:$0xff] %vm242, %v3270
        %3303 = vst.msk [vmem:[#allocation2 + $0xb0] sm:$0xff] %vm242, %v3271
        %3304 = vst.msk [vmem:[#allocation2 + $0xb8] sm:$0xff] %vm242, %v3272
        %3305 = vst.msk [vmem:[#allocation2 + $0xc0] sm:$0xff] %vm242, %v3273
        %3306 = vst.msk [vmem:[#allocation2 + $0xc8] sm:$0xff] %vm242, %v3274
        %3307 = vst.msk [vmem:[#allocation2 + $0xd0] sm:$0xff] %vm242, %v3275
        %3308 = vst.msk [vmem:[#allocation2 + $0xd8] sm:$0xff] %vm242, %v3276
        %3309 = vst.msk [vmem:[#allocation2 + $0xe0] sm:$0xff] %vm242, %v3277
        %3310 = vst.msk [vmem:[#allocation2 + $0xe8] sm:$0xff] %vm242, %v3278
        %3311 = vst.msk [vmem:[#allocation2 + $0xf0] sm:$0xff] %vm242, %v3279
        %3312 = vst.msk [vmem:[#allocation2 + $0xf8] sm:$0xff] %vm242, %v3280
        %v3313 = vrot.slane %v2597, 2
        %v3314 = vrot.slane %v2598, 2
        %v3315 = vsel %vm1044, %v3313, %v3314
        %v3316 = vrot.slane %v2599, 2
        %v3317 = vsel %vm1044, %v3314, %v3316
        %v3318 = vrot.slane %v2600, 2
        %v3319 = vrot.slane %v2601, 2
        %v3320 = vsel %vm1044, %v3318, %v3319
        %v3321 = vrot.slane %v2602, 2
        %v3322 = vsel %vm1044, %v3319, %v3321
        %v3323 = vrot.slane %v2603, 2
        %v3324 = vrot.slane %v2604, 2
        %v3325 = vsel %vm1044, %v3323, %v3324
        %v3326 = vrot.slane %v2605, 2
        %v3327 = vsel %vm1044, %v3324, %v3326
        %v3328 = vrot.slane %v2606, 2
        %v3329 = vrot.slane %v2607, 2
        %v3330 = vsel %vm1044, %v3328, %v3329
        %v3331 = vrot.slane %v2608, 2
        %v3332 = vsel %vm1044, %v3329, %v3331
        %v3333 = vrot.slane %v2609, 2
        %v3334 = vrot.slane %v2610, 2
        %v3335 = vsel %vm1044, %v3333, %v3334
        %v3336 = vrot.slane %v2611, 2
        %v3337 = vsel %vm1044, %v3334, %v3336
        %v3338 = vrot.slane %v2612, 2
        %v3339 = vrot.slane %v2613, 2
        %v3340 = vsel %vm1044, %v3338, %v3339
        %v3341 = vrot.slane %v2614, 2
        %v3342 = vsel %vm1044, %v3339, %v3341
        %v3343 = vrot.slane %v2615, 2
        %v3344 = vrot.slane %v2616, 2
        %v3345 = vsel %vm1044, %v3343, %v3344
        %v3346 = vrot.slane %v2617, 2
        %v3347 = vsel %vm1044, %v3344, %v3346
        %v3348 = vrot.slane %v2618, 2
        %v3349 = vrot.slane %v2619, 2
        %v3350 = vsel %vm1044, %v3348, %v3349
        %v3351 = vrot.slane %v2620, 2
        %v3352 = vsel %vm1044, %v3349, %v3351
        %v3353 = vrot.slane %v2621, 2
        %v3354 = vrot.slane %v2622, 2
        %v3355 = vsel %vm1044, %v3353, %v3354
        %v3356 = vrot.slane %v2623, 2
        %v3357 = vsel %vm1044, %v3354, %v3356
        %v3358 = vrot.slane %v2624, 2
        %v3359 = vrot.slane %v2625, 2
        %v3360 = vsel %vm1044, %v3358, %v3359
        %v3361 = vrot.slane %v2626, 2
        %v3362 = vsel %vm1044, %v3359, %v3361
        %v3363 = vrot.slane %v2627, 2
        %v3364 = vrot.slane %v2628, 2
        %v3365 = vsel %vm1044, %v3363, %v3364
        %v3366 = vrot.slane %v2629, 2
        %v3367 = vsel %vm1044, %v3364, %v3366
        %v3368 = vrot.slane %v2630, 2
        %v3369 = vrot.slane %v2631, 2
        %v3370 = vsel %vm1044, %v3368, %v3369
        %v3371 = vrot.slane %v2632, 2
        %v3372 = vsel %vm1044, %v3369, %v3371
        %v3373 = vrot.slane %v2633, 2
        %v3374 = vrot.slane %v2634, 2
        %v3375 = vsel %vm1044, %v3373, %v3374
        %v3376 = vrot.slane %v2635, 2
        %v3377 = vsel %vm1044, %v3374, %v3376
        %v3378 = vrot.slane %v2636, 2
        %v3379 = vrot.slane %v2637, 2
        %v3380 = vsel %vm1044, %v3378, %v3379
        %v3381 = vrot.slane %v2638, 2
        %v3382 = vsel %vm1044, %v3379, %v3381
        %v3383 = vrot.slane %v2639, 2
        %v3384 = vrot.slane %v2640, 2
        %v3385 = vsel %vm1044, %v3383, %v3384
        %v3386 = vrot.slane %v2641, 2
        %v3387 = vsel %vm1044, %v3384, %v3386
        %v3388 = vrot.slane %v2642, 2
        %v3389 = vrot.slane %v2643, 2
        %v3390 = vsel %vm1044, %v3388, %v3389
        %v3391 = vrot.slane %v2644, 2
        %v3392 = vsel %vm1044, %v3389, %v3391
        %v3425 = vpack.c.bf16 %v3317, %v3315
        %v3426 = vpack.c.bf16 %v3322, %v3320
        %v3427 = vpack.c.bf16 %v3327, %v3325
        %v3428 = vpack.c.bf16 %v3332, %v3330
        %v3429 = vpack.c.bf16 %v3337, %v3335
        %v3430 = vpack.c.bf16 %v3342, %v3340
        %v3431 = vpack.c.bf16 %v3347, %v3345
        %v3432 = vpack.c.bf16 %v3352, %v3350
        %v3433 = vpack.c.bf16 %v3357, %v3355
        %v3434 = vpack.c.bf16 %v3362, %v3360
        %v3435 = vpack.c.bf16 %v3367, %v3365
        %v3436 = vpack.c.bf16 %v3372, %v3370
        %v3437 = vpack.c.bf16 %v3377, %v3375
        %v3438 = vpack.c.bf16 %v3382, %v3380
        %v3439 = vpack.c.bf16 %v3387, %v3385
        %v3440 = vpack.c.bf16 %v3392, %v3390
        %v3441 = vld [vmem:[#allocation2] sm:$0xff]
        %v3442 = vld [vmem:[#allocation2 + $0x8] sm:$0xff]
        %v3443 = vld [vmem:[#allocation2 + $0x10] sm:$0xff]
        %v3444 = vld [vmem:[#allocation2 + $0x18] sm:$0xff]
        %v3445 = vld [vmem:[#allocation2 + $0x20] sm:$0xff]
        %v3446 = vld [vmem:[#allocation2 + $0x28] sm:$0xff]
        %v3447 = vld [vmem:[#allocation2 + $0x30] sm:$0xff]
        %v3448 = vld [vmem:[#allocation2 + $0x38] sm:$0xff]
        %v3449 = vld [vmem:[#allocation2 + $0x40] sm:$0xff]
        %v3450 = vld [vmem:[#allocation2 + $0x48] sm:$0xff]
        %v3451 = vld [vmem:[#allocation2 + $0x50] sm:$0xff]
        %v3452 = vld [vmem:[#allocation2 + $0x58] sm:$0xff]
        %v3453 = vld [vmem:[#allocation2 + $0x60] sm:$0xff]
        %v3454 = vld [vmem:[#allocation2 + $0x68] sm:$0xff]
        %v3455 = vld [vmem:[#allocation2 + $0x70] sm:$0xff]
        %v3456 = vld [vmem:[#allocation2 + $0x78] sm:$0xff]
        %v3457 = vld [vmem:[#allocation2 + $0x80] sm:$0xff]
        %v3458 = vld [vmem:[#allocation2 + $0x88] sm:$0xff]
        %v3459 = vld [vmem:[#allocation2 + $0x90] sm:$0xff]
        %v3460 = vld [vmem:[#allocation2 + $0x98] sm:$0xff]
        %v3461 = vld [vmem:[#allocation2 + $0xa0] sm:$0xff]
        %v3462 = vld [vmem:[#allocation2 + $0xa8] sm:$0xff]
        %v3463 = vld [vmem:[#allocation2 + $0xb0] sm:$0xff]
        %v3464 = vld [vmem:[#allocation2 + $0xb8] sm:$0xff]
        %v3465 = vld [vmem:[#allocation2 + $0xc0] sm:$0xff]
        %v3466 = vld [vmem:[#allocation2 + $0xc8] sm:$0xff]
        %v3467 = vld [vmem:[#allocation2 + $0xd0] sm:$0xff]
        %v3468 = vld [vmem:[#allocation2 + $0xd8] sm:$0xff]
        %v3469 = vld [vmem:[#allocation2 + $0xe0] sm:$0xff]
        %v3470 = vld [vmem:[#allocation2 + $0xe8] sm:$0xff]
        %v3471 = vld [vmem:[#allocation2 + $0xf0] sm:$0xff]
        %v3472 = vld [vmem:[#allocation2 + $0xf8] sm:$0xff]
        %s3473 = scalar_lea.vmem %s1, 16
        %v3474 = vld [vmem:[%s3473] sm:$0x3]
        %v3476 = vsel %vm423, %v3425, 0
        %v3479 = vsel %vm423, %v3426, 0
        %v3482 = vsel %vm423, %v3427, 0
        %v3485 = vsel %vm423, %v3428, 0
        %v3488 = vsel %vm423, %v3429, 0
        %v3491 = vsel %vm423, %v3430, 0
        %v3494 = vsel %vm423, %v3431, 0
        %v3497 = vsel %vm423, %v3432, 0
        %v3500 = vsel %vm423, %v3433, 0
        %v3503 = vsel %vm423, %v3434, 0
        %v3506 = vsel %vm423, %v3435, 0
        %v3509 = vsel %vm423, %v3436, 0
        %v3512 = vsel %vm423, %v3437, 0
        %v3515 = vsel %vm423, %v3438, 0
        %v3518 = vsel %vm423, %v3439, 0
        %v3521 = vsel %vm423, %v3440, 0
        %v3524 = vsel %vm472, %v3474, 0
        %3526 = vmatpush.bf16.msra.mxu0 0
        %3527 = vmatpush.bf16.msra.mxu0 0
        %3528 = vmatpush.bf16.msra.mxu0 0
        %3529 = vmatpush.bf16.msra.mxu0 0
        %3530 = vmatpush.bf16.msra.mxu0 0
        %3531 = vmatpush.bf16.msra.mxu0 0
        %3532 = vmatpush.bf16.msra.mxu0 0
        %3533 = vmatpush.bf16.msra.mxu0 %v3524
        %3534 = vmatmul.bf16.gmra.mxu0 %v3476
        %v3535 = vpop.f32.mrf.mxu0
        %v3536 = vadd.f32 0.0, %v3535
        %v3537 = vpop.f32.mrf.mxu0
        %v3538 = vadd.f32 0.0, %v3537
        %3539 = vmatmul.bf16.gmra.mxu0 %v3479
        %v3540 = vpop.f32.mrf.mxu0
        %v3541 = vadd.f32 0.0, %v3540
        %v3542 = vpop.f32.mrf.mxu0
        %v3543 = vadd.f32 0.0, %v3542
        %3544 = vmatmul.bf16.gmra.mxu0 %v3482
        %v3545 = vpop.f32.mrf.mxu0
        %v3546 = vadd.f32 0.0, %v3545
        %v3547 = vpop.f32.mrf.mxu0
        %v3548 = vadd.f32 0.0, %v3547
        %3549 = vmatmul.bf16.gmra.mxu0 %v3485
        %v3550 = vpop.f32.mrf.mxu0
        %v3551 = vadd.f32 0.0, %v3550
        %v3552 = vpop.f32.mrf.mxu0
        %v3553 = vadd.f32 0.0, %v3552
        %3554 = vmatmul.bf16.gmra.mxu0 %v3488
        %v3555 = vpop.f32.mrf.mxu0
        %v3556 = vadd.f32 0.0, %v3555
        %v3557 = vpop.f32.mrf.mxu0
        %v3558 = vadd.f32 0.0, %v3557
        %3559 = vmatmul.bf16.gmra.mxu0 %v3491
        %v3560 = vpop.f32.mrf.mxu0
        %v3561 = vadd.f32 0.0, %v3560
        %v3562 = vpop.f32.mrf.mxu0
        %v3563 = vadd.f32 0.0, %v3562
        %3564 = vmatmul.bf16.gmra.mxu0 %v3494
        %v3565 = vpop.f32.mrf.mxu0
        %v3566 = vadd.f32 0.0, %v3565
        %v3567 = vpop.f32.mrf.mxu0
        %v3568 = vadd.f32 0.0, %v3567
        %3569 = vmatmul.bf16.gmra.mxu0 %v3497
        %v3570 = vpop.f32.mrf.mxu0
        %v3571 = vadd.f32 0.0, %v3570
        %v3572 = vpop.f32.mrf.mxu0
        %v3573 = vadd.f32 0.0, %v3572
        %3574 = vmatmul.bf16.gmra.mxu0 %v3500
        %v3575 = vpop.f32.mrf.mxu0
        %v3576 = vadd.f32 0.0, %v3575
        %v3577 = vpop.f32.mrf.mxu0
        %v3578 = vadd.f32 0.0, %v3577
        %3579 = vmatmul.bf16.gmra.mxu0 %v3503
        %v3580 = vpop.f32.mrf.mxu0
        %v3581 = vadd.f32 0.0, %v3580
        %v3582 = vpop.f32.mrf.mxu0
        %v3583 = vadd.f32 0.0, %v3582
        %3584 = vmatmul.bf16.gmra.mxu0 %v3506
        %v3585 = vpop.f32.mrf.mxu0
        %v3586 = vadd.f32 0.0, %v3585
        %v3587 = vpop.f32.mrf.mxu0
        %v3588 = vadd.f32 0.0, %v3587
        %3589 = vmatmul.bf16.gmra.mxu0 %v3509
        %v3590 = vpop.f32.mrf.mxu0
        %v3591 = vadd.f32 0.0, %v3590
        %v3592 = vpop.f32.mrf.mxu0
        %v3593 = vadd.f32 0.0, %v3592
        %3594 = vmatmul.bf16.gmra.mxu0 %v3512
        %v3595 = vpop.f32.mrf.mxu0
        %v3596 = vadd.f32 0.0, %v3595
        %v3597 = vpop.f32.mrf.mxu0
        %v3598 = vadd.f32 0.0, %v3597
        %3599 = vmatmul.bf16.gmra.mxu0 %v3515
        %v3600 = vpop.f32.mrf.mxu0
        %v3601 = vadd.f32 0.0, %v3600
        %v3602 = vpop.f32.mrf.mxu0
        %v3603 = vadd.f32 0.0, %v3602
        %3604 = vmatmul.bf16.gmra.mxu0 %v3518
        %v3605 = vpop.f32.mrf.mxu0
        %v3606 = vadd.f32 0.0, %v3605
        %v3607 = vpop.f32.mrf.mxu0
        %v3608 = vadd.f32 0.0, %v3607
        %3609 = vmatmul.bf16.gmra.mxu0 %v3521
        %v3610 = vpop.f32.mrf.mxu0
        %v3611 = vadd.f32 0.0, %v3610
        %v3612 = vpop.f32.mrf.mxu0
        %v3613 = vadd.f32 0.0, %v3612
        %3614 = vdwg.mxu0
        %v3615 = vadd.f32 %v3441, %v3536
        %v3616 = vadd.f32 %v3442, %v3538
        %v3617 = vadd.f32 %v3443, %v3541
        %v3618 = vadd.f32 %v3444, %v3543
        %v3619 = vadd.f32 %v3445, %v3546
        %v3620 = vadd.f32 %v3446, %v3548
        %v3621 = vadd.f32 %v3447, %v3551
        %v3622 = vadd.f32 %v3448, %v3553
        %v3623 = vadd.f32 %v3449, %v3556
        %v3624 = vadd.f32 %v3450, %v3558
        %v3625 = vadd.f32 %v3451, %v3561
        %v3626 = vadd.f32 %v3452, %v3563
        %v3627 = vadd.f32 %v3453, %v3566
        %v3628 = vadd.f32 %v3454, %v3568
        %v3629 = vadd.f32 %v3455, %v3571
        %v3630 = vadd.f32 %v3456, %v3573
        %v3631 = vadd.f32 %v3457, %v3576
        %v3632 = vadd.f32 %v3458, %v3578
        %v3633 = vadd.f32 %v3459, %v3581
        %v3634 = vadd.f32 %v3460, %v3583
        %v3635 = vadd.f32 %v3461, %v3586
        %v3636 = vadd.f32 %v3462, %v3588
        %v3637 = vadd.f32 %v3463, %v3591
        %v3638 = vadd.f32 %v3464, %v3593
        %v3639 = vadd.f32 %v3465, %v3596
        %v3640 = vadd.f32 %v3466, %v3598
        %v3641 = vadd.f32 %v3467, %v3601
        %v3642 = vadd.f32 %v3468, %v3603
        %v3643 = vadd.f32 %v3469, %v3606
        %v3644 = vadd.f32 %v3470, %v3608
        %v3645 = vadd.f32 %v3471, %v3611
        %v3646 = vadd.f32 %v3472, %v3613
        %3647 = vst.msk [vmem:[#allocation2] sm:$0xff] %vm242, %v3615
        %3648 = vst.msk [vmem:[#allocation2 + $0x8] sm:$0xff] %vm242, %v3616
        %3649 = vst.msk [vmem:[#allocation2 + $0x10] sm:$0xff] %vm242, %v3617
        %3650 = vst.msk [vmem:[#allocation2 + $0x18] sm:$0xff] %vm242, %v3618
        %3651 = vst.msk [vmem:[#allocation2 + $0x20] sm:$0xff] %vm242, %v3619
        %3652 = vst.msk [vmem:[#allocation2 + $0x28] sm:$0xff] %vm242, %v3620
        %3653 = vst.msk [vmem:[#allocation2 + $0x30] sm:$0xff] %vm242, %v3621
        %3654 = vst.msk [vmem:[#allocation2 + $0x38] sm:$0xff] %vm242, %v3622
        %3655 = vst.msk [vmem:[#allocation2 + $0x40] sm:$0xff] %vm242, %v3623
        %3656 = vst.msk [vmem:[#allocation2 + $0x48] sm:$0xff] %vm242, %v3624
        %3657 = vst.msk [vmem:[#allocation2 + $0x50] sm:$0xff] %vm242, %v3625
        %3658 = vst.msk [vmem:[#allocation2 + $0x58] sm:$0xff] %vm242, %v3626
        %3659 = vst.msk [vmem:[#allocation2 + $0x60] sm:$0xff] %vm242, %v3627
        %3660 = vst.msk [vmem:[#allocation2 + $0x68] sm:$0xff] %vm242, %v3628
        %3661 = vst.msk [vmem:[#allocation2 + $0x70] sm:$0xff] %vm242, %v3629
        %3662 = vst.msk [vmem:[#allocation2 + $0x78] sm:$0xff] %vm242, %v3630
        %3663 = vst.msk [vmem:[#allocation2 + $0x80] sm:$0xff] %vm242, %v3631
        %3664 = vst.msk [vmem:[#allocation2 + $0x88] sm:$0xff] %vm242, %v3632
        %3665 = vst.msk [vmem:[#allocation2 + $0x90] sm:$0xff] %vm242, %v3633
        %3666 = vst.msk [vmem:[#allocation2 + $0x98] sm:$0xff] %vm242, %v3634
        %3667 = vst.msk [vmem:[#allocation2 + $0xa0] sm:$0xff] %vm242, %v3635
        %3668 = vst.msk [vmem:[#allocation2 + $0xa8] sm:$0xff] %vm242, %v3636
        %3669 = vst.msk [vmem:[#allocation2 + $0xb0] sm:$0xff] %vm242, %v3637
        %3670 = vst.msk [vmem:[#allocation2 + $0xb8] sm:$0xff] %vm242, %v3638
        %3671 = vst.msk [vmem:[#allocation2 + $0xc0] sm:$0xff] %vm242, %v3639
        %3672 = vst.msk [vmem:[#allocation2 + $0xc8] sm:$0xff] %vm242, %v3640
        %3673 = vst.msk [vmem:[#allocation2 + $0xd0] sm:$0xff] %vm242, %v3641
        %3674 = vst.msk [vmem:[#allocation2 + $0xd8] sm:$0xff] %vm242, %v3642
        %3675 = vst.msk [vmem:[#allocation2 + $0xe0] sm:$0xff] %vm242, %v3643
        %3676 = vst.msk [vmem:[#allocation2 + $0xe8] sm:$0xff] %vm242, %v3644
        %3677 = vst.msk [vmem:[#allocation2 + $0xf0] sm:$0xff] %vm242, %v3645
        %3678 = vst.msk [vmem:[#allocation2 + $0xf8] sm:$0xff] %vm242, %v3646
        %v3679 = vld [vmem:[#allocation2] sm:$0xff]
        %v3680 = vld [vmem:[#allocation2 + $0x8] sm:$0xff]
        %v3681 = vld [vmem:[#allocation2 + $0x10] sm:$0xff]
        %v3682 = vld [vmem:[#allocation2 + $0x18] sm:$0xff]
        %v3683 = vld [vmem:[#allocation2 + $0x20] sm:$0xff]
        %v3684 = vld [vmem:[#allocation2 + $0x28] sm:$0xff]
        %v3685 = vld [vmem:[#allocation2 + $0x30] sm:$0xff]
        %v3686 = vld [vmem:[#allocation2 + $0x38] sm:$0xff]
        %v3687 = vld [vmem:[#allocation2 + $0x40] sm:$0xff]
        %v3688 = vld [vmem:[#allocation2 + $0x48] sm:$0xff]
        %v3689 = vld [vmem:[#allocation2 + $0x50] sm:$0xff]
        %v3690 = vld [vmem:[#allocation2 + $0x58] sm:$0xff]
        %v3691 = vld [vmem:[#allocation2 + $0x60] sm:$0xff]
        %v3692 = vld [vmem:[#allocation2 + $0x68] sm:$0xff]
        %v3693 = vld [vmem:[#allocation2 + $0x70] sm:$0xff]
        %v3694 = vld [vmem:[#allocation2 + $0x78] sm:$0xff]
        %v3695 = vld [vmem:[#allocation2 + $0x80] sm:$0xff]
        %v3696 = vld [vmem:[#allocation2 + $0x88] sm:$0xff]
        %v3697 = vld [vmem:[#allocation2 + $0x90] sm:$0xff]
        %v3698 = vld [vmem:[#allocation2 + $0x98] sm:$0xff]
        %v3699 = vld [vmem:[#allocation2 + $0xa0] sm:$0xff]
        %v3700 = vld [vmem:[#allocation2 + $0xa8] sm:$0xff]
        %v3701 = vld [vmem:[#allocation2 + $0xb0] sm:$0xff]
        %v3702 = vld [vmem:[#allocation2 + $0xb8] sm:$0xff]
        %v3703 = vld [vmem:[#allocation2 + $0xc0] sm:$0xff]
        %v3704 = vld [vmem:[#allocation2 + $0xc8] sm:$0xff]
        %v3705 = vld [vmem:[#allocation2 + $0xd0] sm:$0xff]
        %v3706 = vld [vmem:[#allocation2 + $0xd8] sm:$0xff]
        %v3707 = vld [vmem:[#allocation2 + $0xe0] sm:$0xff]
        %v3708 = vld [vmem:[#allocation2 + $0xe8] sm:$0xff]
        %v3709 = vld [vmem:[#allocation2 + $0xf0] sm:$0xff]
        %v3710 = vld [vmem:[#allocation2 + $0xf8] sm:$0xff]
        %v3711 = vld [vmem:[%s2] sm:$0x1]
        %v3713 = vperm.slane %v3711, 0
        %v3715 = vadd.f32 %v3679, %v3713
        %v3716 = vadd.f32 %v3680, %v3713
        %v3717 = vadd.f32 %v3681, %v3713
        %v3718 = vadd.f32 %v3682, %v3713
        %v3719 = vadd.f32 %v3683, %v3713
        %v3720 = vadd.f32 %v3684, %v3713
        %v3721 = vadd.f32 %v3685, %v3713
        %v3722 = vadd.f32 %v3686, %v3713
        %v3723 = vadd.f32 %v3687, %v3713
        %v3724 = vadd.f32 %v3688, %v3713
        %v3725 = vadd.f32 %v3689, %v3713
        %v3726 = vadd.f32 %v3690, %v3713
        %v3727 = vadd.f32 %v3691, %v3713
        %v3728 = vadd.f32 %v3692, %v3713
        %v3729 = vadd.f32 %v3693, %v3713
        %v3730 = vadd.f32 %v3694, %v3713
        %v3731 = vadd.f32 %v3695, %v3713
        %v3732 = vadd.f32 %v3696, %v3713
        %v3733 = vadd.f32 %v3697, %v3713
        %v3734 = vadd.f32 %v3698, %v3713
        %v3735 = vadd.f32 %v3699, %v3713
        %v3736 = vadd.f32 %v3700, %v3713
        %v3737 = vadd.f32 %v3701, %v3713
        %v3738 = vadd.f32 %v3702, %v3713
        %v3739 = vadd.f32 %v3703, %v3713
        %v3740 = vadd.f32 %v3704, %v3713
        %v3741 = vadd.f32 %v3705, %v3713
        %v3742 = vadd.f32 %v3706, %v3713
        %v3743 = vadd.f32 %v3707, %v3713
        %v3744 = vadd.f32 %v3708, %v3713
        %v3745 = vadd.f32 %v3709, %v3713
        %v3746 = vadd.f32 %v3710, %v3713
        %v3747 = vpack.c.bf16 %v3715, %v3715
        %v3748 = vpack.c.bf16 %v3716, %v3716
        %v3749 = vpack.c.bf16 %v3717, %v3717
        %v3750 = vpack.c.bf16 %v3718, %v3718
        %v3751 = vpack.c.bf16 %v3719, %v3719
        %v3752 = vpack.c.bf16 %v3720, %v3720
        %v3753 = vpack.c.bf16 %v3721, %v3721
        %v3754 = vpack.c.bf16 %v3722, %v3722
        %v3755 = vpack.c.bf16 %v3723, %v3723
        %v3756 = vpack.c.bf16 %v3724, %v3724
        %v3757 = vpack.c.bf16 %v3725, %v3725
        %v3758 = vpack.c.bf16 %v3726, %v3726
        %v3759 = vpack.c.bf16 %v3727, %v3727
        %v3760 = vpack.c.bf16 %v3728, %v3728
        %v3761 = vpack.c.bf16 %v3729, %v3729
        %v3762 = vpack.c.bf16 %v3730, %v3730
        %v3763 = vpack.c.bf16 %v3731, %v3731
        %v3764 = vpack.c.bf16 %v3732, %v3732
        %v3765 = vpack.c.bf16 %v3733, %v3733
        %v3766 = vpack.c.bf16 %v3734, %v3734
        %v3767 = vpack.c.bf16 %v3735, %v3735
        %v3768 = vpack.c.bf16 %v3736, %v3736
        %v3769 = vpack.c.bf16 %v3737, %v3737
        %v3770 = vpack.c.bf16 %v3738, %v3738
        %v3771 = vpack.c.bf16 %v3739, %v3739
        %v3772 = vpack.c.bf16 %v3740, %v3740
        %v3773 = vpack.c.bf16 %v3741, %v3741
        %v3774 = vpack.c.bf16 %v3742, %v3742
        %v3775 = vpack.c.bf16 %v3743, %v3743
        %v3776 = vpack.c.bf16 %v3744, %v3744
        %v3777 = vpack.c.bf16 %v3745, %v3745
        %v3778 = vpack.c.bf16 %v3746, %v3746
        %vm3779 = vcmask 60416
        %3780 = vst.msk [vmem:[%s232] sm:$0xf] %vm3779, %v3747
        %3781 = vst.msk [vmem:[%s232 + $0x4] sm:$0xf] %vm3779, %v3748
        %3782 = vst.msk [vmem:[%s232 + $0x8] sm:$0xf] %vm3779, %v3749
        %3783 = vst.msk [vmem:[%s232 + $0xc] sm:$0xf] %vm3779, %v3750
        %3784 = vst.msk [vmem:[%s232 + $0x10] sm:$0xf] %vm3779, %v3751
        %3785 = vst.msk [vmem:[%s232 + $0x14] sm:$0xf] %vm3779, %v3752
        %3786 = vst.msk [vmem:[%s232 + $0x18] sm:$0xf] %vm3779, %v3753
        %3787 = vst.msk [vmem:[%s232 + $0x1c] sm:$0xf] %vm3779, %v3754
        %3788 = vst.msk [vmem:[%s232 + $0x20] sm:$0xf] %vm3779, %v3755
        %3789 = vst.msk [vmem:[%s232 + $0x24] sm:$0xf] %vm3779, %v3756
        %3790 = vst.msk [vmem:[%s232 + $0x28] sm:$0xf] %vm3779, %v3757
        %3791 = vst.msk [vmem:[%s232 + $0x2c] sm:$0xf] %vm3779, %v3758
        %3792 = vst.msk [vmem:[%s232 + $0x30] sm:$0xf] %vm3779, %v3759
        %3793 = vst.msk [vmem:[%s232 + $0x34] sm:$0xf] %vm3779, %v3760
        %3794 = vst.msk [vmem:[%s232 + $0x38] sm:$0xf] %vm3779, %v3761
        %3795 = vst.msk [vmem:[%s232 + $0x3c] sm:$0xf] %vm3779, %v3762
        %3796 = vst.msk [vmem:[%s232 + $0x40] sm:$0xf] %vm3779, %v3763
        %3797 = vst.msk [vmem:[%s232 + $0x44] sm:$0xf] %vm3779, %v3764
        %3798 = vst.msk [vmem:[%s232 + $0x48] sm:$0xf] %vm3779, %v3765
        %3799 = vst.msk [vmem:[%s232 + $0x4c] sm:$0xf] %vm3779, %v3766
        %3800 = vst.msk [vmem:[%s232 + $0x50] sm:$0xf] %vm3779, %v3767
        %3801 = vst.msk [vmem:[%s232 + $0x54] sm:$0xf] %vm3779, %v3768
        %3802 = vst.msk [vmem:[%s232 + $0x58] sm:$0xf] %vm3779, %v3769
        %3803 = vst.msk [vmem:[%s232 + $0x5c] sm:$0xf] %vm3779, %v3770
        %3804 = vst.msk [vmem:[%s232 + $0x60] sm:$0xf] %vm3779, %v3771
        %3805 = vst.msk [vmem:[%s232 + $0x64] sm:$0xf] %vm3779, %v3772
        %3806 = vst.msk [vmem:[%s232 + $0x68] sm:$0xf] %vm3779, %v3773
        %3807 = vst.msk [vmem:[%s232 + $0x6c] sm:$0xf] %vm3779, %v3774
        %3808 = vst.msk [vmem:[%s232 + $0x70] sm:$0xf] %vm3779, %v3775
        %3809 = vst.msk [vmem:[%s232 + $0x74] sm:$0xf] %vm3779, %v3776
        %3810 = vst.msk [vmem:[%s232 + $0x78] sm:$0xf] %vm3779, %v3777
        %3811 = vst.msk [vmem:[%s232 + $0x7c] sm:$0xf] %vm3779, %v3778
        %v3812 = vld [vmem:[%s217] sm:$0x1]
        %v3813 = vsel %vm242, %v3715, 0.0
        %v3814 = vsel %vm242, %v3716, 0.0
        %v3815 = vadd.f32 %v3813, %v3814
        %v3816 = vsel %vm242, %v3717, 0.0
        %v3817 = vadd.f32 %v3815, %v3816
        %v3818 = vsel %vm242, %v3718, 0.0
        %v3819 = vadd.f32 %v3817, %v3818
        %v3820 = vsel %vm242, %v3719, 0.0
        %v3821 = vadd.f32 %v3819, %v3820
        %v3822 = vsel %vm242, %v3720, 0.0
        %v3823 = vadd.f32 %v3821, %v3822
        %v3824 = vsel %vm242, %v3721, 0.0
        %v3825 = vadd.f32 %v3823, %v3824
        %v3826 = vsel %vm242, %v3722, 0.0
        %v3827 = vadd.f32 %v3825, %v3826
        %v3828 = vsel %vm242, %v3723, 0.0
        %v3829 = vadd.f32 %v3827, %v3828
        %v3830 = vsel %vm242, %v3724, 0.0
        %v3831 = vadd.f32 %v3829, %v3830
        %v3832 = vsel %vm242, %v3725, 0.0
        %v3833 = vadd.f32 %v3831, %v3832
        %v3834 = vsel %vm242, %v3726, 0.0
        %v3835 = vadd.f32 %v3833, %v3834
        %v3836 = vsel %vm242, %v3727, 0.0
        %v3837 = vadd.f32 %v3835, %v3836
        %v3838 = vsel %vm242, %v3728, 0.0
        %v3839 = vadd.f32 %v3837, %v3838
        %v3840 = vsel %vm242, %v3729, 0.0
        %v3841 = vadd.f32 %v3839, %v3840
        %v3842 = vsel %vm242, %v3730, 0.0
        %v3843 = vadd.f32 %v3841, %v3842
        %v3844 = vsel %vm242, %v3731, 0.0
        %v3845 = vadd.f32 %v3843, %v3844
        %v3846 = vsel %vm242, %v3732, 0.0
        %v3847 = vadd.f32 %v3845, %v3846
        %v3848 = vsel %vm242, %v3733, 0.0
        %v3849 = vadd.f32 %v3847, %v3848
        %v3850 = vsel %vm242, %v3734, 0.0
        %v3851 = vadd.f32 %v3849, %v3850
        %v3852 = vsel %vm242, %v3735, 0.0
        %v3853 = vadd.f32 %v3851, %v3852
        %v3854 = vsel %vm242, %v3736, 0.0
        %v3855 = vadd.f32 %v3853, %v3854
        %v3856 = vsel %vm242, %v3737, 0.0
        %v3857 = vadd.f32 %v3855, %v3856
        %v3858 = vsel %vm242, %v3738, 0.0
        %v3859 = vadd.f32 %v3857, %v3858
        %v3860 = vsel %vm242, %v3739, 0.0
        %v3861 = vadd.f32 %v3859, %v3860
        %v3862 = vsel %vm242, %v3740, 0.0
        %v3863 = vadd.f32 %v3861, %v3862
        %v3864 = vsel %vm242, %v3741, 0.0
        %v3865 = vadd.f32 %v3863, %v3864
        %v3866 = vsel %vm242, %v3742, 0.0
        %v3867 = vadd.f32 %v3865, %v3866
        %v3868 = vsel %vm242, %v3743, 0.0
        %v3869 = vadd.f32 %v3867, %v3868
        %v3870 = vsel %vm242, %v3744, 0.0
        %v3871 = vadd.f32 %v3869, %v3870
        %v3872 = vsel %vm242, %v3745, 0.0
        %v3873 = vadd.f32 %v3871, %v3872
        %v3874 = vsel %vm242, %v3746, 0.0
        %v3875 = vadd.f32 %v3873, %v3874
        %v3876 = vrot.slane %v3875, 4
        %v3877 = vadd.f32 %v3875, %v3876
        %v3878 = vrot.slane %v3877, 2
        %v3879 = vadd.f32 %v3877, %v3878
        %v3880 = vrot.slane %v3879, 1
        %v3881 = vadd.f32 %v3879, %v3880
        %v3882 = vadd.f32 %v3812, %v3881
        %vm3883 = vcmask 57344
        %3884 = vst.msk [vmem:[%s217] sm:$0x1] %vm3883, %v3882
        %v3885 = vld [vmem:[%s217 + $0x1] sm:$0x1]
        %v3886 = vmul.f32 %v3715, %v3715
        %v3887 = vmul.f32 %v3716, %v3716
        %v3888 = vmul.f32 %v3717, %v3717
        %v3889 = vmul.f32 %v3718, %v3718
        %v3890 = vmul.f32 %v3719, %v3719
        %v3891 = vmul.f32 %v3720, %v3720
        %v3892 = vmul.f32 %v3721, %v3721
        %v3893 = vmul.f32 %v3722, %v3722
        %v3894 = vmul.f32 %v3723, %v3723
        %v3895 = vmul.f32 %v3724, %v3724
        %v3896 = vmul.f32 %v3725, %v3725
        %v3897 = vmul.f32 %v3726, %v3726
        %v3898 = vmul.f32 %v3727, %v3727
        %v3899 = vmul.f32 %v3728, %v3728
        %v3900 = vmul.f32 %v3729, %v3729
        %v3901 = vmul.f32 %v3730, %v3730
        %v3902 = vmul.f32 %v3731, %v3731
        %v3903 = vmul.f32 %v3732, %v3732
        %v3904 = vmul.f32 %v3733, %v3733
        %v3905 = vmul.f32 %v3734, %v3734
        %v3906 = vmul.f32 %v3735, %v3735
        %v3907 = vmul.f32 %v3736, %v3736
        %v3908 = vmul.f32 %v3737, %v3737
        %v3909 = vmul.f32 %v3738, %v3738
        %v3910 = vmul.f32 %v3739, %v3739
        %v3911 = vmul.f32 %v3740, %v3740
        %v3912 = vmul.f32 %v3741, %v3741
        %v3913 = vmul.f32 %v3742, %v3742
        %v3914 = vmul.f32 %v3743, %v3743
        %v3915 = vmul.f32 %v3744, %v3744
        %v3916 = vmul.f32 %v3745, %v3745
        %v3917 = vmul.f32 %v3746, %v3746
        %v3918 = vsel %vm242, %v3886, 0.0
        %v3919 = vsel %vm242, %v3887, 0.0
        %v3920 = vadd.f32 %v3918, %v3919
        %v3921 = vsel %vm242, %v3888, 0.0
        %v3922 = vadd.f32 %v3920, %v3921
        %v3923 = vsel %vm242, %v3889, 0.0
        %v3924 = vadd.f32 %v3922, %v3923
        %v3925 = vsel %vm242, %v3890, 0.0
        %v3926 = vadd.f32 %v3924, %v3925
        %v3927 = vsel %vm242, %v3891, 0.0
        %v3928 = vadd.f32 %v3926, %v3927
        %v3929 = vsel %vm242, %v3892, 0.0
        %v3930 = vadd.f32 %v3928, %v3929
        %v3931 = vsel %vm242, %v3893, 0.0
        %v3932 = vadd.f32 %v3930, %v3931
        %v3933 = vsel %vm242, %v3894, 0.0
        %v3934 = vadd.f32 %v3932, %v3933
        %v3935 = vsel %vm242, %v3895, 0.0
        %v3936 = vadd.f32 %v3934, %v3935
        %v3937 = vsel %vm242, %v3896, 0.0
        %v3938 = vadd.f32 %v3936, %v3937
        %v3939 = vsel %vm242, %v3897, 0.0
        %v3940 = vadd.f32 %v3938, %v3939
        %v3941 = vsel %vm242, %v3898, 0.0
        %v3942 = vadd.f32 %v3940, %v3941
        %v3943 = vsel %vm242, %v3899, 0.0
        %v3944 = vadd.f32 %v3942, %v3943
        %v3945 = vsel %vm242, %v3900, 0.0
        %v3946 = vadd.f32 %v3944, %v3945
        %v3947 = vsel %vm242, %v3901, 0.0
        %v3948 = vadd.f32 %v3946, %v3947
        %v3949 = vsel %vm242, %v3902, 0.0
        %v3950 = vadd.f32 %v3948, %v3949
        %v3951 = vsel %vm242, %v3903, 0.0
        %v3952 = vadd.f32 %v3950, %v3951
        %v3953 = vsel %vm242, %v3904, 0.0
        %v3954 = vadd.f32 %v3952, %v3953
        %v3955 = vsel %vm242, %v3905, 0.0
        %v3956 = vadd.f32 %v3954, %v3955
        %v3957 = vsel %vm242, %v3906, 0.0
        %v3958 = vadd.f32 %v3956, %v3957
        %v3959 = vsel %vm242, %v3907, 0.0
        %v3960 = vadd.f32 %v3958, %v3959
        %v3961 = vsel %vm242, %v3908, 0.0
        %v3962 = vadd.f32 %v3960, %v3961
        %v3963 = vsel %vm242, %v3909, 0.0
        %v3964 = vadd.f32 %v3962, %v3963
        %v3965 = vsel %vm242, %v3910, 0.0
        %v3966 = vadd.f32 %v3964, %v3965
        %v3967 = vsel %vm242, %v3911, 0.0
        %v3968 = vadd.f32 %v3966, %v3967
        %v3969 = vsel %vm242, %v3912, 0.0
        %v3970 = vadd.f32 %v3968, %v3969
        %v3971 = vsel %vm242, %v3913, 0.0
        %v3972 = vadd.f32 %v3970, %v3971
        %v3973 = vsel %vm242, %v3914, 0.0
        %v3974 = vadd.f32 %v3972, %v3973
        %v3975 = vsel %vm242, %v3915, 0.0
        %v3976 = vadd.f32 %v3974, %v3975
        %v3977 = vsel %vm242, %v3916, 0.0
        %v3978 = vadd.f32 %v3976, %v3977
        %v3979 = vsel %vm242, %v3917, 0.0
        %v3980 = vadd.f32 %v3978, %v3979
        %v3981 = vrot.slane %v3980, 4
        %v3982 = vadd.f32 %v3980, %v3981
        %v3983 = vrot.slane %v3982, 2
        %v3984 = vadd.f32 %v3982, %v3983
        %v3985 = vrot.slane %v3984, 1
        %v3986 = vadd.f32 %v3984, %v3985
        %v3987 = vadd.f32 %v3885, %v3986
        %3988 = vst.msk [vmem:[%s217 + $0x1] sm:$0x1] %vm3883, %v3987
        %s3989 = smul.u32 16, %s24
        %p3990 = scmp.lt.s32.totalorder %s23, 1
        %s3991 = scalar_select %p3990, %s23, 1
        %p3992 = scmp.lt.s32.totalorder %s3989, 15
        %s3993 = scalar_select %p3992, %s3989, 15
        %s3994 = smul.addr %s3993, 2
        %s3995 = smul.addr %s3991, 32
        %s3996 = sadd.s32 %s3994, %s3995
        %s3997 = smul.addr %s3996, 4
        %s3998 = scalar_lea.vmem %s3, %s3997
        %s3999 = sand.u32 %s135, 1
        %s4000 = scalar_lea.sflag [#allocation4], %s3999
        %s4001 = sand.u32 %s135, 1
        %s4002 = smul.addr %s4001, 2
        %s4003 = scalar_lea.vmem [#allocation3], %s4002
        // Predicated region
        $region37: #{tpu_custom_call.1} parent=31 // pred_check
          %p4004 = pneg %p119
        $region38: #{tpu_custom_call.1} parent=31 // pred_check_branch
          %4006 = sbr.rel (%p4004) target = $region40
        $region39: #{tpu_custom_call.1} parent=31 // pred_region
          %s4007 = smul.u32 16, %s24
        $region40: #{tpu_custom_call.1} parent=31 // pred_fallthru
          _
        // Predicated region
        $region41: #{tpu_custom_call.1} parent=31 // pred_check
          %p4008 = pneg %p145
        $region42: #{tpu_custom_call.1} parent=31 // pred_check_branch
          %4010 = sbr.rel (%p4008) target = $region44
        $region43: #{tpu_custom_call.1} parent=31 // pred_region
          %4012 = vsyncadd %s4000, 0
          %s4013 = smul.addr %s23, 2
          %s4014 = scalar_lea.hbm %s4, %s4013
          %s4016 = sshll.u32 %s4003, 4
          %s4017 = int_to_ptr.vmem [resolvable:$true] %s4016
          %s4018 = sshll.u32 %s4014, 4
          %s4019 = int_to_ptr.hbm [resolvable:$true] %s4018
          %4021 = dma.vmem_to_hbm [thread:$0]  %s4017, 32, %s4019, %s4000
        $region44: #{tpu_custom_call.1} parent=31 // pred_fallthru
          _
      $region32: #{tpu_custom_call.1} parent=5 // pred_fallthru
        _
      %p4022 = scmp.le.s32.totalorder 2, %s14
      // Predicated region
      $region45: #{tpu_custom_call.1} parent=5 // pred_check
        %p4023 = pneg %p4022
      $region46: #{tpu_custom_call.1} parent=5 // pred_check_branch
        %4025 = sbr.rel (%p4023) target = $region48
      $region47: #{tpu_custom_call.1} parent=5 // pred_region
        %s4026 = ssub.s32 %s14, 2
        // Predicated region
        $region49: #{tpu_custom_call.1} parent=47 // pred_check
          %p4027 = pneg %p125
        $region50: #{tpu_custom_call.1} parent=47 // pred_check_branch
          %4029 = sbr.rel (%p4027) target = $region52
        $region51: #{tpu_custom_call.1} parent=47 // pred_region
          %s4030 = smul.u32 16, %s26
          %p4031 = scmp.lt.s32.totalorder %s25, 1
          %s4032 = scalar_select %p4031, %s25, 1
          %p4033 = scmp.lt.s32.totalorder %s4030, 15
          %s4034 = scalar_select %p4033, %s4030, 15
          %s4035 = smul.addr %s4034, 2
          %s4036 = smul.addr %s4032, 32
          %s4037 = sadd.s32 %s4035, %s4036
          %s4038 = smul.addr %s4037, 4
          %s4039 = scalar_lea.vmem %s3, %s4038
        $region52: #{tpu_custom_call.1} parent=47 // pred_fallthru
          _
        // Predicated region
        $region53: #{tpu_custom_call.1} parent=47 // pred_check
          %p4040 = pneg %p151
        $region54: #{tpu_custom_call.1} parent=47 // pred_check_branch
          %4042 = sbr.rel (%p4040) target = $region56
        $region55: #{tpu_custom_call.1} parent=47 // pred_region
          %s4043 = sand.u32 %s136, 1
          %s4044 = scalar_lea.sflag [#allocation4], %s4043
          %s4045 = sand.u32 %s136, 1
          %s4046 = smul.addr %s4045, 2
          %s4047 = scalar_lea.vmem [#allocation3], %s4046
          %4049 = dma.done %s4044, 32
        $region56: #{tpu_custom_call.1} parent=47 // pred_fallthru
          _
      $region48: #{tpu_custom_call.1} parent=5 // pred_fallthru
        _
    $region6: #{tpu_custom_call.1} parent=1 // loop_footer
      %s18 = sadd.s32 1, %s14
    $region7: #{tpu_custom_call.1} parent=1 // loop_footer_branch
      %13 = sbr.rel target = $region3
    $region8: #{tpu_custom_call.1} parent=1 // loop_exit
      _
    %4050 = vsyncpa [#allocation4], 1
    %s4051 = scalar_lea.sflag [#allocation4], 1
    %4052 = vsyncpa %s4051, 1

</llo_original>
